<compile_context>
chip_gen: v6e
topology: v6e:2x2x1
jax: 0.10.0
libtpu: 0.0.40
codegen_flags: <defaults>
</compile_context>

<pallas_src>
import math

import numpy as np
import jax
import jax.numpy as jnp
from jax.experimental import pallas as pl
from jax.experimental.pallas import tpu as pltpu

# ----- configuration (mirrors `args` of the PyTorch module) -----------------
NUM_PATHS   = 4      # args.num_paths
PATH_LENGTH = 8      # args.path_length
D_E         = 16     # args.d_e   (nfeat)
D_H         = 32     # args.d_h   (nhid)
NHEAD       = 4      # nhead
DK          = D_H // NHEAD
DIM_FF      = 2048   # dim_feedforward
B_GROUPS    = 4      # batch groups (batch_size / num_paths in the forward)
BN_EPS      = 1e-5

N_ROWS = PATH_LENGTH * B_GROUPS * NUM_PATHS      # 128 flattened input rows
PB     = PATH_LENGTH * B_GROUPS                  # 32  rows after group-mean

FF_CHUNK   = 512
N_FF_CHUNK = DIM_FF // FF_CHUNK                  # 4

# ----- packed small-parameter buffer layout (row offsets, all 8-aligned) ----
OFF_G    = 0     # (32, 128)  group-mean + reorder selection matrix
OFF_W1F  = 32    # (16, 64)   first Linear weight with BN folded in
OFF_B1F  = 48    # (1, 64)    first Linear bias with BN folded in
OFF_W2   = 56    # (64, 32)   second Linear weight
OFF_B2   = 120   # (1, 32)    second Linear bias
OFF_QKV  = 128   # (32, 96)   fused [Wq | Wk | Wv]
OFF_BQKV = 160   # (1, 96)    fused [bq | bk | bv]
OFF_WO   = 168   # (32, 32)   attention output projection
OFF_BO   = 200   # (1, 32)
OFF_MASK = 208   # (32, 32)   additive block-diagonal mask (0 / -1e9)
OFF_PSEL = 240   # (4, 32)    mean-over-path-positions selection matrix
OFF_WR   = 248   # (2, 32)    rank weights: row 0 -> pooled, row 1 -> selfloop
OFF_MISC = 256   # (1, 33)    lanes 0:32 = bl2, lane 32 = br
PACK_ROWS  = 264
PACK_LANES = 128


def _vmem():
    return pl.BlockSpec(memory_space=pltpu.MemorySpace.VMEM)


# ----------------------------------------------------------------------------
# Fused forward kernel
# ----------------------------------------------------------------------------
def fused_kernel(src_ref, pack_ref, wl1_ref, bl1_ref, wl2_ref, out_ref):
    f32 = jnp.float32

    # ---- stage 1: first = Linear + BatchNorm(eval, folded) + Tanh (dropout=id)
    w1 = pack_ref[OFF_W1F:OFF_W1F + D_E, 0:2 * D_H]
    b1 = pack_ref[OFF_B1F:OFF_B1F + 1, 0:2 * D_H]
    h1 = jnp.tanh(jnp.dot(src_ref[...], w1, preferred_element_type=f32) + b1)  # (128,64)

    # ---- stage 2: mean over num_paths + row reorder to (path_pos, group)
    #      as one matmul with the precomputed selection matrix G, then
    #      second = Linear(2*d_h, d_h) + Tanh
    g = pack_ref[OFF_G:OFF_G + PB, :]                                           # (32,128)
    xm = jnp.dot(g, h1, preferred_element_type=f32)                             # (32,64)
    w2 = pack_ref[OFF_W2:OFF_W2 + 2 * D_H, 0:D_H]
    b2 = pack_ref[OFF_B2:OFF_B2 + 1, 0:D_H]
    s = jnp.tanh(jnp.dot(xm, w2, preferred_element_type=f32) + b2)              # (32,32)

    # ---- stage 3: multi-head self-attention over the group axis, per path pos.
    #      One fused QKV matmul; per-head full (32,32) score matmul with an
    #      additive block-diagonal mask; heads stacked and projected once.
    wqkv = pack_ref[OFF_QKV:OFF_QKV + D_H, 0:3 * D_H]
    bqkv = pack_ref[OFF_BQKV:OFF_BQKV + 1, 0:3 * D_H]
    qkv = jnp.dot(s, wqkv, preferred_element_type=f32) + bqkv                   # (32,96)
    mask = pack_ref[OFF_MASK:OFF_MASK + PB, 0:PB]                               # (32,32)
    scale = 1.0 / math.sqrt(DK)

    ctx = []
    for h in range(NHEAD):                      # static unroll, NHEAD = 4
        qh = qkv[:, h * DK:(h + 1) * DK]                                        # (32,8)
        kh = qkv[:, D_H + h * DK:D_H + (h + 1) * DK]                            # (32,8)
        vh = qkv[:, 2 * D_H + h * DK:2 * D_H + (h + 1) * DK]                    # (32,8)
        sc = jnp.dot(qh, kh.T, preferred_element_type=f32) * scale + mask       # (32,32)
        sc = sc - jnp.max(sc, axis=-1, keepdims=True)
        e = jnp.exp(sc)
        a = e / jnp.sum(e, axis=-1, keepdims=True)        # softmax; dropout = id
        ctx.append(jnp.dot(a, vh, preferred_element_type=f32))                  # (32,8)
    ctx_all = jnp.concatenate(ctx, axis=-1)                                     # (32,32)
    wo = pack_ref[OFF_WO:OFF_WO + D_H, 0:D_H]
    bo = pack_ref[OFF_BO:OFF_BO + 1, 0:D_H]
    attn = jnp.dot(ctx_all, wo, preferred_element_type=f32) + bo                # (32,32)

    # ---- stage 4: FFN linear2(dropout(relu(linear1(x)))), chunked over DIM_FF
    #      bf16 weights/activations with f32 accumulation; the (32,2048)
    #      intermediate never materializes.
    attn_bf = attn.astype(jnp.bfloat16)
    acc = jnp.zeros((PB, D_H), f32)
    for c in range(N_FF_CHUNK):                 # static unroll, 4 x 512 chunks
        c0 = c * FF_CHUNK
        hc = jnp.dot(attn_bf, wl1_ref[:, c0:c0 + FF_CHUNK],
                     preferred_element_type=f32) + bl1_ref[:, c0:c0 + FF_CHUNK]
        hc = jnp.maximum(hc, 0.0)               # relu; dropout = id
        acc = acc + jnp.dot(hc.astype(jnp.bfloat16),
                            wl2_ref[c0:c0 + FF_CHUNK, :],
                            preferred_element_type=f32)
    bl2 = pack_ref[OFF_MISC:OFF_MISC + 1, 0:D_H]
    ff = acc + bl2                                                              # (32,32)

    # ---- stage 5: mean over path_length (selection matmul), selfloop = rows
    #      0:4, rank scorer folded into a VPU multiply + lane reduce.
    # TODO(synk): RankNet is not defined in the source file (self.num_features
    #             is also undefined); approximated as Linear(2*d_h -> 1) with
    #             prob = sigmoid(score) and predict = score.
    ppool = pack_ref[OFF_PSEL:OFF_PSEL + B_GROUPS, 0:D_H]                       # (4,32)
    wrp = pack_ref[OFF_WR:OFF_WR + 1, 0:D_H]                                    # (1,32)
    wrs = pack_ref[OFF_WR + 1:OFF_WR + 2, 0:D_H]                                # (1,32)
    br = pack_ref[OFF_MISC:OFF_MISC + 1, D_H:D_H + 1]                           # (1,1)

    pooled = jnp.dot(ppool, ff, preferred_element_type=f32)                     # (4,32)
    z = pooled * wrp + ff[0:B_GROUPS, :] * wrs                                  # (4,32)
    score = jnp.sum(z, axis=-1, keepdims=True) + br                             # (4,1)
    out_ref[:, 0:1] = jax.nn.sigmoid(score)
    out_ref[:, 1:2] = score


# ----------------------------------------------------------------------------
# wrapper (argsort stays in plain JAX)
# ----------------------------------------------------------------------------
def trans_lstm_nra_forward(src, p):
    out = pl.pallas_call(
        fused_kernel,
        out_shape=jax.ShapeDtypeStruct((B_GROUPS, 2), jnp.float32),
        in_specs=[_vmem()] * 5,
        out_specs=_vmem(),
    )(src, p['pack'], p['wl1'], p['bl1'], p['wl2'])
    prob = out[:, 0:1]
    score = out[:, 1:2]
    # torch.sort(scores, 0, True)[1] -> descending-order indices along dim 0
    scores_desc = jnp.argsort(-score, axis=0)
    return prob, scores_desc


# ----------------------------------------------------------------------------
# deterministic parameter init (torch nn.Linear-style uniform bounds)
# ----------------------------------------------------------------------------
def init_params(key):
    def linear(k, fan_in, fan_out):
        kw, kb = jax.random.split(k)
        bound = 1.0 / math.sqrt(fan_in)
        w = jax.random.uniform(kw, (fan_in, fan_out), jnp.float32, -bound, bound)
        b = jax.random.uniform(kb, (1, fan_out), jnp.float32, -bound, bound)
        return w, b

    keys = jax.random.split(key, 13)
    p = {}
    p['w1'], p['b1'] = linear(keys[0], D_E, 2 * D_H)
    # non-trivial eval-mode BatchNorm running stats (exercises the BN fold)
    p['bn_gamma'] = jax.random.uniform(keys[1], (1, 2 * D_H), jnp.float32, 0.5, 1.5)
    p['bn_beta']  = 0.1 * jax.random.normal(keys[2], (1, 2 * D_H), jnp.float32)
    p['bn_mean']  = 0.1 * jax.random.normal(keys[3], (1, 2 * D_H), jnp.float32)
    p['bn_var']   = jax.random.uniform(keys[4], (1, 2 * D_H), jnp.float32, 0.5, 1.5)
    p['w2'], p['b2'] = linear(keys[5], 2 * D_H, D_H)
    p['wq'], p['bq'] = linear(keys[6], D_H, D_H)
    p['wk'], p['bk'] = linear(keys[7], D_H, D_H)
    p['wv'], p['bv'] = linear(keys[8], D_H, D_H)
    p['wo'], p['bo'] = linear(keys[9], D_H, D_H)
    p['wl1'], p['bl1'] = linear(keys[10], D_H, DIM_FF)
    p['wl2'], p['bl2'] = linear(keys[11], DIM_FF, D_H)
    p['wr'], p['br'] = linear(keys[12], 2 * D_H, 1)
    return p


def prepare_params(raw):
    """One-time fold/repack: BN folded into the first Linear, QKV fused, all
    small params packed into one (264,128) f32 buffer, FFN weights in bf16."""
    r = {k: np.asarray(v) for k, v in raw.items()}
    pack = np.zeros((PACK_ROWS, PACK_LANES), np.float32)

    # Selection matrix G: output row rr = path_pos*B_GROUPS + group averages
    # the NUM_PATHS source rows c = (group*NUM_PATHS + k)*PATH_LENGTH + path_pos,
    # matching view(-1,P,H).transpose(0,1).reshape(P,B,num_paths,H).mean(2).
    for pp in range(PATH_LENGTH):
        for grp in range(B_GROUPS):
            rr = pp * B_GROUPS + grp
            for k in range(NUM_PATHS):
                c = (grp * NUM_PATHS + k) * PATH_LENGTH + pp
                pack[OFF_G + rr, c] = 1.0 / NUM_PATHS

    # BatchNorm (eval) folded into the first Linear
    scale = r['bn_gamma'] / np.sqrt(r['bn_var'] + BN_EPS)                 # (1, 64)
    pack[OFF_W1F:OFF_W1F + D_E, 0:2 * D_H] = r['w1'] * scale
    pack[OFF_B1F, 0:2 * D_H] = ((r['b1'] - r['bn_mean']) * scale + r['bn_beta'])[0]

    pack[OFF_W2:OFF_W2 + 2 * D_H, 0:D_H] = r['w2']
    pack[OFF_B2, 0:D_H] = r['b2'][0]

    # fused QKV projection (lane order [Q | K | V], head-major inside each)
    pack[OFF_QKV:OFF_QKV + D_H, 0:3 * D_H] = np.concatenate(
        [r['wq'], r['wk'], r['wv']], axis=1)
    pack[OFF_BQKV, 0:3 * D_H] = np.concatenate(
        [r['bq'], r['bk'], r['bv']], axis=1)[0]

    pack[OFF_WO:OFF_WO + D_H, 0:D_H] = r['wo']
    pack[OFF_BO, 0:D_H] = r['bo'][0]

    # additive block-diagonal mask: rows sharing a path position (blocks of
    # B_GROUPS) attend to each other; everything else gets -1e9.
    blk = np.arange(PB) // B_GROUPS
    pack[OFF_MASK:OFF_MASK + PB, 0:PB] = np.where(
        blk[:, None] == blk[None, :], 0.0, -1e9).astype(np.float32)

    # mean-over-path-positions selection (selfloop is simply rows 0:4 of ff)
    for grp in range(B_GROUPS):
        for pp in range(PATH_LENGTH):
            pack[OFF_PSEL + grp, pp * B_GROUPS + grp] = 1.0 / PATH_LENGTH

    # rank head: row 0 multiplies pooled features, row 1 the selfloop features
    pack[OFF_WR, 0:D_H] = r['wr'][:D_H, 0]
    pack[OFF_WR + 1, 0:D_H] = r['wr'][D_H:, 0]

    pack[OFF_MISC, 0:D_H] = r['bl2'][0]
    pack[OFF_MISC, D_H] = r['br'][0, 0]

    return {
        'pack': jnp.asarray(pack),
        'wl1': jnp.asarray(r['wl1'], dtype=jnp.bfloat16),
        'bl1': jnp.asarray(r['bl1'], dtype=jnp.float32),
        'wl2': jnp.asarray(r['wl2'], dtype=jnp.bfloat16),
    }


# ----------------------------------------------------------------------------
# pure-JAX f32 mirror of the PyTorch eval-mode forward (for validation)
# ----------------------------------------------------------------------------
def reference_forward(src, raw):
    x = src @ raw['w1'] + raw['b1']
    x = ((x - raw['bn_mean']) * raw['bn_gamma']
         / jnp.sqrt(raw['bn_var'] + BN_EPS) + raw['bn_beta'])
    x = jnp.tanh(x)
    x = x.reshape(-1, PATH_LENGTH, 2 * D_H).transpose(1, 0, 2)          # (8,16,64)
    x = x.reshape(PATH_LENGTH, B_GROUPS, NUM_PATHS, 2 * D_H).mean(axis=2)
    s = jnp.tanh(x @ raw['w2'] + raw['b2'])                             # (8,4,32)

    def heads(w, b):
        return (s @ w + b).reshape(PATH_LENGTH, B_GROUPS, NHEAD, DK).transpose(0, 2, 1, 3)

    q, k, v = heads(raw['wq'], raw['bq']), heads(raw['wk'], raw['bk']), heads(raw['wv'], raw['bv'])
    sc = jnp.einsum('phid,phjd->phij', q, k) / math.sqrt(DK)
    a = jax.nn.softmax(sc, axis=-1)
    ctx = jnp.einsum('phij,phjd->phid', a, v).transpose(0, 2, 1, 3).reshape(
        PATH_LENGTH, B_GROUPS, D_H)
    out = ctx @ raw['wo'] + raw['bo']
    ff = jnp.maximum(out @ raw['wl1'] + raw['bl1'], 0.0) @ raw['wl2'] + raw['bl2']
    cat = jnp.concatenate([ff.mean(axis=0), ff[0]], axis=1)             # (4,64)
    score = cat @ raw['wr'] + raw['br']
    return jax.nn.sigmoid(score), score


if __name__ == "__main__":
    key = jax.random.PRNGKey(0)
    pkey, xkey = jax.random.split(key)
    raw = init_params(pkey)
    params = prepare_params(raw)      # one-time prep; reused across calls

    src = jax.random.normal(xkey, (N_ROWS, D_E), jnp.float32)   # (128, 16)

    prob, scores_desc = jax.jit(trans_lstm_nra_forward)(src, params)
    jax.block_until_ready((prob, scores_desc))
    assert prob.shape == (B_GROUPS, 1) and scores_desc.shape == (B_GROUPS, 1)

    # correctness check vs the pure-JAX f32 reference (loose tol covers bf16 FFN)
    ref_prob, _ = reference_forward(src, raw)
    assert np.allclose(np.asarray(prob), np.asarray(ref_prob), atol=2e-2), (
        np.asarray(prob), np.asarray(ref_prob))
    print("KERNEL_OK")
</pallas_src>

<mosaic_0001>
module attributes {stable_mosaic.version = 11 : i64} {
  func.func @fused_kernel(%arg0: memref<128x16xf32, #tpu.memory_space<vmem>>, %arg1: memref<264x128xf32, #tpu.memory_space<vmem>>, %arg2: memref<32x2048xbf16, #tpu.memory_space<vmem>>, %arg3: memref<1x2048xf32, #tpu.memory_space<vmem>>, %arg4: memref<2048x32xbf16, #tpu.memory_space<vmem>>, %arg5: memref<4x2xf32, #tpu.memory_space<vmem>>) attributes {dimension_semantics = [], scalar_prefetch = 0 : i64, scratch_operands = 0 : i64, tpu.core_type = #tpu.core_type<tc>} {
    %c32 = arith.constant 32 : index
    %c0 = arith.constant 0 : index
    %0 = vector.load %arg1[%c32, %c0] : memref<264x128xf32, #tpu.memory_space<vmem>>, vector<16x64xf32>
    %c48 = arith.constant 48 : index
    %c0_0 = arith.constant 0 : index
    %1 = vector.load %arg1[%c48, %c0_0] : memref<264x128xf32, #tpu.memory_space<vmem>>, vector<1x64xf32>
    %c0_1 = arith.constant 0 : index
    %c0_2 = arith.constant 0 : index
    %2 = vector.load %arg0[%c0_1, %c0_2] : memref<128x16xf32, #tpu.memory_space<vmem>>, vector<128x16xf32>
    %cst = arith.constant dense<0.000000e+00> : vector<128x64xf32>
    %3 = tpu.matmul %2, %0, %cst {dimension_numbers = #tpu.dot_dimension_numbers<[1], [0], [0], [1], [0, 0, 1, 1], [], []>} : vector<128x16xf32>, vector<16x64xf32>, vector<128x64xf32> -> vector<128x64xf32>
    %4 = vector.broadcast %1 : vector<1x64xf32> to vector<128x64xf32>
    %5 = arith.addf %3, %4 : vector<128x64xf32>
    %6 = math.tanh %5 : vector<128x64xf32>
    %c0_3 = arith.constant 0 : index
    %c0_4 = arith.constant 0 : index
    %7 = vector.load %arg1[%c0_3, %c0_4] : memref<264x128xf32, #tpu.memory_space<vmem>>, vector<32x128xf32>
    %cst_5 = arith.constant dense<0.000000e+00> : vector<32x64xf32>
    %8 = tpu.matmul %7, %6, %cst_5 {dimension_numbers = #tpu.dot_dimension_numbers<[1], [0], [0], [1], [0, 0, 1, 1], [], []>} : vector<32x128xf32>, vector<128x64xf32>, vector<32x64xf32> -> vector<32x64xf32>
    %c56 = arith.constant 56 : index
    %c0_6 = arith.constant 0 : index
    %9 = vector.load %arg1[%c56, %c0_6] : memref<264x128xf32, #tpu.memory_space<vmem>>, vector<64x32xf32>
    %c120 = arith.constant 120 : index
    %c0_7 = arith.constant 0 : index
    %10 = vector.load %arg1[%c120, %c0_7] : memref<264x128xf32, #tpu.memory_space<vmem>>, vector<1x32xf32>
    %cst_8 = arith.constant dense<0.000000e+00> : vector<32x32xf32>
    %11 = tpu.matmul %8, %9, %cst_8 {dimension_numbers = #tpu.dot_dimension_numbers<[1], [0], [0], [1], [0, 0, 1, 1], [], []>} : vector<32x64xf32>, vector<64x32xf32>, vector<32x32xf32> -> vector<32x32xf32>
    %12 = vector.broadcast %10 : vector<1x32xf32> to vector<32x32xf32>
    %13 = arith.addf %11, %12 : vector<32x32xf32>
    %14 = math.tanh %13 : vector<32x32xf32>
    %c128 = arith.constant 128 : index
    %c0_9 = arith.constant 0 : index
    %15 = vector.load %arg1[%c128, %c0_9] : memref<264x128xf32, #tpu.memory_space<vmem>>, vector<32x96xf32>
    %c160 = arith.constant 160 : index
    %c0_10 = arith.constant 0 : index
    %16 = vector.load %arg1[%c160, %c0_10] : memref<264x128xf32, #tpu.memory_space<vmem>>, vector<1x96xf32>
    %cst_11 = arith.constant dense<0.000000e+00> : vector<32x96xf32>
    %17 = tpu.matmul %14, %15, %cst_11 {dimension_numbers = #tpu.dot_dimension_numbers<[1], [0], [0], [1], [0, 0, 1, 1], [], []>} : vector<32x32xf32>, vector<32x96xf32>, vector<32x96xf32> -> vector<32x96xf32>
    %18 = vector.broadcast %16 : vector<1x96xf32> to vector<32x96xf32>
    %19 = arith.addf %17, %18 : vector<32x96xf32>
    %c208 = arith.constant 208 : index
    %c0_12 = arith.constant 0 : index
    %20 = vector.load %arg1[%c208, %c0_12] : memref<264x128xf32, #tpu.memory_space<vmem>>, vector<32x32xf32>
    %21 = vector.extract_strided_slice %19 {offsets = [0, 0], sizes = [32, 8], strides = [1, 1]} : vector<32x96xf32> to vector<32x8xf32>
    %22 = vector.extract_strided_slice %19 {offsets = [0, 32], sizes = [32, 8], strides = [1, 1]} : vector<32x96xf32> to vector<32x8xf32>
    %23 = vector.extract_strided_slice %19 {offsets = [0, 64], sizes = [32, 8], strides = [1, 1]} : vector<32x96xf32> to vector<32x8xf32>
    %24 = tpu.transpose %22, [1, 0] : vector<32x8xf32> -> vector<8x32xf32>
    %cst_13 = arith.constant dense<0.000000e+00> : vector<32x32xf32>
    %25 = tpu.matmul %21, %24, %cst_13 {dimension_numbers = #tpu.dot_dimension_numbers<[1], [0], [0], [1], [0, 0, 1, 1], [], []>} : vector<32x8xf32>, vector<8x32xf32>, vector<32x32xf32> -> vector<32x32xf32>
    %cst_14 = arith.constant 0.353553385 : f32
    %26 = vector.broadcast %cst_14 : f32 to vector<32x32xf32>
    %27 = arith.mulf %25, %26 : vector<32x32xf32>
    %28 = arith.addf %27, %20 : vector<32x32xf32>
    %cst_15 = arith.constant dense<0xFF800000> : vector<32xf32>
    %29 = vector.multi_reduction <maximumf>, %28, %cst_15 [1] : vector<32x32xf32> to vector<32xf32>
    %30 = vector.shape_cast %29 : vector<32xf32> to vector<32x1xf32>
    %31 = vector.broadcast %30 : vector<32x1xf32> to vector<32x32xf32>
    %32 = arith.subf %28, %31 : vector<32x32xf32>
    %33 = math.exp %32 : vector<32x32xf32>
    %cst_16 = arith.constant dense<0.000000e+00> : vector<32xf32>
    %34 = vector.multi_reduction <add>, %33, %cst_16 [1] : vector<32x32xf32> to vector<32xf32>
    %35 = vector.shape_cast %34 : vector<32xf32> to vector<32x1xf32>
    %36 = vector.broadcast %35 : vector<32x1xf32> to vector<32x32xf32>
    %37 = arith.divf %33, %36 : vector<32x32xf32>
    %cst_17 = arith.constant dense<0.000000e+00> : vector<32x8xf32>
    %38 = tpu.matmul %37, %23, %cst_17 {dimension_numbers = #tpu.dot_dimension_numbers<[1], [0], [0], [1], [0, 0, 1, 1], [], []>} : vector<32x32xf32>, vector<32x8xf32>, vector<32x8xf32> -> vector<32x8xf32>
    %39 = vector.extract_strided_slice %19 {offsets = [0, 8], sizes = [32, 8], strides = [1, 1]} : vector<32x96xf32> to vector<32x8xf32>
    %40 = vector.extract_strided_slice %19 {offsets = [0, 40], sizes = [32, 8], strides = [1, 1]} : vector<32x96xf32> to vector<32x8xf32>
    %41 = vector.extract_strided_slice %19 {offsets = [0, 72], sizes = [32, 8], strides = [1, 1]} : vector<32x96xf32> to vector<32x8xf32>
    %42 = tpu.transpose %40, [1, 0] : vector<32x8xf32> -> vector<8x32xf32>
    %cst_18 = arith.constant dense<0.000000e+00> : vector<32x32xf32>
    %43 = tpu.matmul %39, %42, %cst_18 {dimension_numbers = #tpu.dot_dimension_numbers<[1], [0], [0], [1], [0, 0, 1, 1], [], []>} : vector<32x8xf32>, vector<8x32xf32>, vector<32x32xf32> -> vector<32x32xf32>
    %cst_19 = arith.constant 0.353553385 : f32
    %44 = vector.broadcast %cst_19 : f32 to vector<32x32xf32>
    %45 = arith.mulf %43, %44 : vector<32x32xf32>
    %46 = arith.addf %45, %20 : vector<32x32xf32>
    %cst_20 = arith.constant dense<0xFF800000> : vector<32xf32>
    %47 = vector.multi_reduction <maximumf>, %46, %cst_20 [1] : vector<32x32xf32> to vector<32xf32>
    %48 = vector.shape_cast %47 : vector<32xf32> to vector<32x1xf32>
    %49 = vector.broadcast %48 : vector<32x1xf32> to vector<32x32xf32>
    %50 = arith.subf %46, %49 : vector<32x32xf32>
    %51 = math.exp %50 : vector<32x32xf32>
    %cst_21 = arith.constant dense<0.000000e+00> : vector<32xf32>
    %52 = vector.multi_reduction <add>, %51, %cst_21 [1] : vector<32x32xf32> to vector<32xf32>
    %53 = vector.shape_cast %52 : vector<32xf32> to vector<32x1xf32>
    %54 = vector.broadcast %53 : vector<32x1xf32> to vector<32x32xf32>
    %55 = arith.divf %51, %54 : vector<32x32xf32>
    %cst_22 = arith.constant dense<0.000000e+00> : vector<32x8xf32>
    %56 = tpu.matmul %55, %41, %cst_22 {dimension_numbers = #tpu.dot_dimension_numbers<[1], [0], [0], [1], [0, 0, 1, 1], [], []>} : vector<32x32xf32>, vector<32x8xf32>, vector<32x8xf32> -> vector<32x8xf32>
    %57 = vector.extract_strided_slice %19 {offsets = [0, 16], sizes = [32, 8], strides = [1, 1]} : vector<32x96xf32> to vector<32x8xf32>
    %58 = vector.extract_strided_slice %19 {offsets = [0, 48], sizes = [32, 8], strides = [1, 1]} : vector<32x96xf32> to vector<32x8xf32>
    %59 = vector.extract_strided_slice %19 {offsets = [0, 80], sizes = [32, 8], strides = [1, 1]} : vector<32x96xf32> to vector<32x8xf32>
    %60 = tpu.transpose %58, [1, 0] : vector<32x8xf32> -> vector<8x32xf32>
    %cst_23 = arith.constant dense<0.000000e+00> : vector<32x32xf32>
    %61 = tpu.matmul %57, %60, %cst_23 {dimension_numbers = #tpu.dot_dimension_numbers<[1], [0], [0], [1], [0, 0, 1, 1], [], []>} : vector<32x8xf32>, vector<8x32xf32>, vector<32x32xf32> -> vector<32x32xf32>
    %cst_24 = arith.constant 0.353553385 : f32
    %62 = vector.broadcast %cst_24 : f32 to vector<32x32xf32>
    %63 = arith.mulf %61, %62 : vector<32x32xf32>
    %64 = arith.addf %63, %20 : vector<32x32xf32>
    %cst_25 = arith.constant dense<0xFF800000> : vector<32xf32>
    %65 = vector.multi_reduction <maximumf>, %64, %cst_25 [1] : vector<32x32xf32> to vector<32xf32>
    %66 = vector.shape_cast %65 : vector<32xf32> to vector<32x1xf32>
    %67 = vector.broadcast %66 : vector<32x1xf32> to vector<32x32xf32>
    %68 = arith.subf %64, %67 : vector<32x32xf32>
    %69 = math.exp %68 : vector<32x32xf32>
    %cst_26 = arith.constant dense<0.000000e+00> : vector<32xf32>
    %70 = vector.multi_reduction <add>, %69, %cst_26 [1] : vector<32x32xf32> to vector<32xf32>
    %71 = vector.shape_cast %70 : vector<32xf32> to vector<32x1xf32>
    %72 = vector.broadcast %71 : vector<32x1xf32> to vector<32x32xf32>
    %73 = arith.divf %69, %72 : vector<32x32xf32>
    %cst_27 = arith.constant dense<0.000000e+00> : vector<32x8xf32>
    %74 = tpu.matmul %73, %59, %cst_27 {dimension_numbers = #tpu.dot_dimension_numbers<[1], [0], [0], [1], [0, 0, 1, 1], [], []>} : vector<32x32xf32>, vector<32x8xf32>, vector<32x8xf32> -> vector<32x8xf32>
    %75 = vector.extract_strided_slice %19 {offsets = [0, 24], sizes = [32, 8], strides = [1, 1]} : vector<32x96xf32> to vector<32x8xf32>
    %76 = vector.extract_strided_slice %19 {offsets = [0, 56], sizes = [32, 8], strides = [1, 1]} : vector<32x96xf32> to vector<32x8xf32>
    %77 = vector.extract_strided_slice %19 {offsets = [0, 88], sizes = [32, 8], strides = [1, 1]} : vector<32x96xf32> to vector<32x8xf32>
    %78 = tpu.transpose %76, [1, 0] : vector<32x8xf32> -> vector<8x32xf32>
    %cst_28 = arith.constant dense<0.000000e+00> : vector<32x32xf32>
    %79 = tpu.matmul %75, %78, %cst_28 {dimension_numbers = #tpu.dot_dimension_numbers<[1], [0], [0], [1], [0, 0, 1, 1], [], []>} : vector<32x8xf32>, vector<8x32xf32>, vector<32x32xf32> -> vector<32x32xf32>
    %cst_29 = arith.constant 0.353553385 : f32
    %80 = vector.broadcast %cst_29 : f32 to vector<32x32xf32>
    %81 = arith.mulf %79, %80 : vector<32x32xf32>
    %82 = arith.addf %81, %20 : vector<32x32xf32>
    %cst_30 = arith.constant dense<0xFF800000> : vector<32xf32>
    %83 = vector.multi_reduction <maximumf>, %82, %cst_30 [1] : vector<32x32xf32> to vector<32xf32>
    %84 = vector.shape_cast %83 : vector<32xf32> to vector<32x1xf32>
    %85 = vector.broadcast %84 : vector<32x1xf32> to vector<32x32xf32>
    %86 = arith.subf %82, %85 : vector<32x32xf32>
    %87 = math.exp %86 : vector<32x32xf32>
    %cst_31 = arith.constant dense<0.000000e+00> : vector<32xf32>
    %88 = vector.multi_reduction <add>, %87, %cst_31 [1] : vector<32x32xf32> to vector<32xf32>
    %89 = vector.shape_cast %88 : vector<32xf32> to vector<32x1xf32>
    %90 = vector.broadcast %89 : vector<32x1xf32> to vector<32x32xf32>
    %91 = arith.divf %87, %90 : vector<32x32xf32>
    %cst_32 = arith.constant dense<0.000000e+00> : vector<32x8xf32>
    %92 = tpu.matmul %91, %77, %cst_32 {dimension_numbers = #tpu.dot_dimension_numbers<[1], [0], [0], [1], [0, 0, 1, 1], [], []>} : vector<32x32xf32>, vector<32x8xf32>, vector<32x8xf32> -> vector<32x8xf32>
    %93 = tpu.concatenate %38, %56, %74, %92 in 1 : vector<32x8xf32>, vector<32x8xf32>, vector<32x8xf32>, vector<32x8xf32> -> vector<32x32xf32>
    %c168 = arith.constant 168 : index
    %c0_33 = arith.constant 0 : index
    %94 = vector.load %arg1[%c168, %c0_33] : memref<264x128xf32, #tpu.memory_space<vmem>>, vector<32x32xf32>
    %c200 = arith.constant 200 : index
    %c0_34 = arith.constant 0 : index
    %95 = vector.load %arg1[%c200, %c0_34] : memref<264x128xf32, #tpu.memory_space<vmem>>, vector<1x32xf32>
    %cst_35 = arith.constant dense<0.000000e+00> : vector<32x32xf32>
    %96 = tpu.matmul %93, %94, %cst_35 {dimension_numbers = #tpu.dot_dimension_numbers<[1], [0], [0], [1], [0, 0, 1, 1], [], []>} : vector<32x32xf32>, vector<32x32xf32>, vector<32x32xf32> -> vector<32x32xf32>
    %97 = vector.broadcast %95 : vector<1x32xf32> to vector<32x32xf32>
    %98 = arith.addf %96, %97 : vector<32x32xf32>
    %99 = arith.truncf %98 : vector<32x32xf32> to vector<32x32xbf16>
    %cst_36 = arith.constant 0.000000e+00 : f32
    %100 = vector.broadcast %cst_36 : f32 to vector<32x32xf32>
    %c0_37 = arith.constant 0 : index
    %c0_38 = arith.constant 0 : index
    %101 = vector.load %arg2[%c0_37, %c0_38] : memref<32x2048xbf16, #tpu.memory_space<vmem>>, vector<32x512xbf16>
    %cst_39 = arith.constant dense<0.000000e+00> : vector<32x512xf32>
    %102 = tpu.matmul %99, %101, %cst_39 {dimension_numbers = #tpu.dot_dimension_numbers<[1], [0], [0], [1], [0, 0, 1, 1], [], []>} : vector<32x32xbf16>, vector<32x512xbf16>, vector<32x512xf32> -> vector<32x512xf32>
    %c0_40 = arith.constant 0 : index
    %c0_41 = arith.constant 0 : index
    %103 = vector.load %arg3[%c0_40, %c0_41] : memref<1x2048xf32, #tpu.memory_space<vmem>>, vector<1x512xf32>
    %104 = vector.broadcast %103 : vector<1x512xf32> to vector<32x512xf32>
    %105 = arith.addf %102, %104 : vector<32x512xf32>
    %cst_42 = arith.constant 0.000000e+00 : f32
    %106 = vector.broadcast %cst_42 : f32 to vector<32x512xf32>
    %107 = arith.maximumf %105, %106 : vector<32x512xf32>
    %108 = arith.truncf %107 : vector<32x512xf32> to vector<32x512xbf16>
    %c0_43 = arith.constant 0 : index
    %c0_44 = arith.constant 0 : index
    %109 = vector.load %arg4[%c0_43, %c0_44] : memref<2048x32xbf16, #tpu.memory_space<vmem>>, vector<512x32xbf16>
    %cst_45 = arith.constant dense<0.000000e+00> : vector<32x32xf32>
    %110 = tpu.matmul %108, %109, %cst_45 {dimension_numbers = #tpu.dot_dimension_numbers<[1], [0], [0], [1], [0, 0, 1, 1], [], []>} : vector<32x512xbf16>, vector<512x32xbf16>, vector<32x32xf32> -> vector<32x32xf32>
    %111 = arith.addf %100, %110 : vector<32x32xf32>
    %c0_46 = arith.constant 0 : index
    %c512 = arith.constant 512 : index
    %112 = vector.load %arg2[%c0_46, %c512] : memref<32x2048xbf16, #tpu.memory_space<vmem>>, vector<32x512xbf16>
    %cst_47 = arith.constant dense<0.000000e+00> : vector<32x512xf32>
    %113 = tpu.matmul %99, %112, %cst_47 {dimension_numbers = #tpu.dot_dimension_numbers<[1], [0], [0], [1], [0, 0, 1, 1], [], []>} : vector<32x32xbf16>, vector<32x512xbf16>, vector<32x512xf32> -> vector<32x512xf32>
    %c0_48 = arith.constant 0 : index
    %c512_49 = arith.constant 512 : index
    %114 = vector.load %arg3[%c0_48, %c512_49] : memref<1x2048xf32, #tpu.memory_space<vmem>>, vector<1x512xf32>
    %115 = vector.broadcast %114 : vector<1x512xf32> to vector<32x512xf32>
    %116 = arith.addf %113, %115 : vector<32x512xf32>
    %cst_50 = arith.constant 0.000000e+00 : f32
    %117 = vector.broadcast %cst_50 : f32 to vector<32x512xf32>
    %118 = arith.maximumf %116, %117 : vector<32x512xf32>
    %119 = arith.truncf %118 : vector<32x512xf32> to vector<32x512xbf16>
    %c512_51 = arith.constant 512 : index
    %c0_52 = arith.constant 0 : index
    %120 = vector.load %arg4[%c512_51, %c0_52] : memref<2048x32xbf16, #tpu.memory_space<vmem>>, vector<512x32xbf16>
    %cst_53 = arith.constant dense<0.000000e+00> : vector<32x32xf32>
    %121 = tpu.matmul %119, %120, %cst_53 {dimension_numbers = #tpu.dot_dimension_numbers<[1], [0], [0], [1], [0, 0, 1, 1], [], []>} : vector<32x512xbf16>, vector<512x32xbf16>, vector<32x32xf32> -> vector<32x32xf32>
    %122 = arith.addf %111, %121 : vector<32x32xf32>
    %c0_54 = arith.constant 0 : index
    %c1024 = arith.constant 1024 : index
    %123 = vector.load %arg2[%c0_54, %c1024] : memref<32x2048xbf16, #tpu.memory_space<vmem>>, vector<32x512xbf16>
    %cst_55 = arith.constant dense<0.000000e+00> : vector<32x512xf32>
    %124 = tpu.matmul %99, %123, %cst_55 {dimension_numbers = #tpu.dot_dimension_numbers<[1], [0], [0], [1], [0, 0, 1, 1], [], []>} : vector<32x32xbf16>, vector<32x512xbf16>, vector<32x512xf32> -> vector<32x512xf32>
    %c0_56 = arith.constant 0 : index
    %c1024_57 = arith.constant 1024 : index
    %125 = vector.load %arg3[%c0_56, %c1024_57] : memref<1x2048xf32, #tpu.memory_space<vmem>>, vector<1x512xf32>
    %126 = vector.broadcast %125 : vector<1x512xf32> to vector<32x512xf32>
    %127 = arith.addf %124, %126 : vector<32x512xf32>
    %cst_58 = arith.constant 0.000000e+00 : f32
    %128 = vector.broadcast %cst_58 : f32 to vector<32x512xf32>
    %129 = arith.maximumf %127, %128 : vector<32x512xf32>
    %130 = arith.truncf %129 : vector<32x512xf32> to vector<32x512xbf16>
    %c1024_59 = arith.constant 1024 : index
    %c0_60 = arith.constant 0 : index
    %131 = vector.load %arg4[%c1024_59, %c0_60] : memref<2048x32xbf16, #tpu.memory_space<vmem>>, vector<512x32xbf16>
    %cst_61 = arith.constant dense<0.000000e+00> : vector<32x32xf32>
    %132 = tpu.matmul %130, %131, %cst_61 {dimension_numbers = #tpu.dot_dimension_numbers<[1], [0], [0], [1], [0, 0, 1, 1], [], []>} : vector<32x512xbf16>, vector<512x32xbf16>, vector<32x32xf32> -> vector<32x32xf32>
    %133 = arith.addf %122, %132 : vector<32x32xf32>
    %c0_62 = arith.constant 0 : index
    %c1536 = arith.constant 1536 : index
    %134 = vector.load %arg2[%c0_62, %c1536] : memref<32x2048xbf16, #tpu.memory_space<vmem>>, vector<32x512xbf16>
    %cst_63 = arith.constant dense<0.000000e+00> : vector<32x512xf32>
    %135 = tpu.matmul %99, %134, %cst_63 {dimension_numbers = #tpu.dot_dimension_numbers<[1], [0], [0], [1], [0, 0, 1, 1], [], []>} : vector<32x32xbf16>, vector<32x512xbf16>, vector<32x512xf32> -> vector<32x512xf32>
    %c0_64 = arith.constant 0 : index
    %c1536_65 = arith.constant 1536 : index
    %136 = vector.load %arg3[%c0_64, %c1536_65] : memref<1x2048xf32, #tpu.memory_space<vmem>>, vector<1x512xf32>
    %137 = vector.broadcast %136 : vector<1x512xf32> to vector<32x512xf32>
    %138 = arith.addf %135, %137 : vector<32x512xf32>
    %cst_66 = arith.constant 0.000000e+00 : f32
    %139 = vector.broadcast %cst_66 : f32 to vector<32x512xf32>
    %140 = arith.maximumf %138, %139 : vector<32x512xf32>
    %141 = arith.truncf %140 : vector<32x512xf32> to vector<32x512xbf16>
    %c1536_67 = arith.constant 1536 : index
    %c0_68 = arith.constant 0 : index
    %142 = vector.load %arg4[%c1536_67, %c0_68] : memref<2048x32xbf16, #tpu.memory_space<vmem>>, vector<512x32xbf16>
    %cst_69 = arith.constant dense<0.000000e+00> : vector<32x32xf32>
    %143 = tpu.matmul %141, %142, %cst_69 {dimension_numbers = #tpu.dot_dimension_numbers<[1], [0], [0], [1], [0, 0, 1, 1], [], []>} : vector<32x512xbf16>, vector<512x32xbf16>, vector<32x32xf32> -> vector<32x32xf32>
    %144 = arith.addf %133, %143 : vector<32x32xf32>
    %c256 = arith.constant 256 : index
    %c0_70 = arith.constant 0 : index
    %145 = vector.load %arg1[%c256, %c0_70] : memref<264x128xf32, #tpu.memory_space<vmem>>, vector<1x32xf32>
    %146 = vector.broadcast %145 : vector<1x32xf32> to vector<32x32xf32>
    %147 = arith.addf %144, %146 : vector<32x32xf32>
    %c240 = arith.constant 240 : index
    %c0_71 = arith.constant 0 : index
    %148 = vector.load %arg1[%c240, %c0_71] : memref<264x128xf32, #tpu.memory_space<vmem>>, vector<4x32xf32>
    %c248 = arith.constant 248 : index
    %c0_72 = arith.constant 0 : index
    %149 = vector.load %arg1[%c248, %c0_72] : memref<264x128xf32, #tpu.memory_space<vmem>>, vector<1x32xf32>
    %c249 = arith.constant 249 : index
    %c0_73 = arith.constant 0 : index
    %150 = vector.load %arg1[%c249, %c0_73] : memref<264x128xf32, #tpu.memory_space<vmem>>, vector<1x32xf32>
    %c256_74 = arith.constant 256 : index
    %c32_75 = arith.constant 32 : index
    %151 = vector.load %arg1[%c256_74, %c32_75] : memref<264x128xf32, #tpu.memory_space<vmem>>, vector<1x1xf32>
    %cst_76 = arith.constant dense<0.000000e+00> : vector<4x32xf32>
    %152 = tpu.matmul %148, %147, %cst_76 {dimension_numbers = #tpu.dot_dimension_numbers<[1], [0], [0], [1], [0, 0, 1, 1], [], []>} : vector<4x32xf32>, vector<32x32xf32>, vector<4x32xf32> -> vector<4x32xf32>
    %153 = vector.broadcast %149 : vector<1x32xf32> to vector<4x32xf32>
    %154 = arith.mulf %152, %153 : vector<4x32xf32>
    %155 = vector.extract_strided_slice %147 {offsets = [0, 0], sizes = [4, 32], strides = [1, 1]} : vector<32x32xf32> to vector<4x32xf32>
    %156 = vector.broadcast %150 : vector<1x32xf32> to vector<4x32xf32>
    %157 = arith.mulf %155, %156 : vector<4x32xf32>
    %158 = arith.addf %154, %157 : vector<4x32xf32>
    %cst_77 = arith.constant dense<0.000000e+00> : vector<4xf32>
    %159 = vector.multi_reduction <add>, %158, %cst_77 [1] : vector<4x32xf32> to vector<4xf32>
    %160 = vector.shape_cast %159 : vector<4xf32> to vector<4x1xf32>
    %161 = vector.broadcast %151 : vector<1x1xf32> to vector<4x1xf32>
    %162 = arith.addf %160, %161 : vector<4x1xf32>
    %163 = arith.negf %162 : vector<4x1xf32>
    %164 = math.exp %163 : vector<4x1xf32>
    %cst_78 = arith.constant 1.000000e+00 : f32
    %165 = vector.broadcast %cst_78 : f32 to vector<4x1xf32>
    %166 = arith.addf %165, %164 : vector<4x1xf32>
    %167 = arith.divf %165, %166 : vector<4x1xf32>
    %c0_79 = arith.constant 0 : index
    %c0_80 = arith.constant 0 : index
    %168 = vector.load %arg5[%c0_79, %c0_80] : memref<4x2xf32, #tpu.memory_space<vmem>>, vector<4x1xf32>
    tpu.vector_store %arg5[%c0_79, %c0_80], %167 {strides = array<i32>} : memref<4x2xf32, #tpu.memory_space<vmem>>, vector<4x1xf32>,
    %c0_81 = arith.constant 0 : index
    %c1 = arith.constant 1 : index
    %169 = vector.load %arg5[%c0_81, %c1] : memref<4x2xf32, #tpu.memory_space<vmem>>, vector<4x1xf32>
    tpu.vector_store %arg5[%c0_81, %c1], %162 {strides = array<i32>} : memref<4x2xf32, #tpu.memory_space<vmem>>, vector<4x1xf32>,
    return
  }
}

</mosaic_0001>

<llo_original>
// kernel: trans_lstm_nra_forward.1
$region0: #{trans_lstm_nra_forward.1}
  #allocation0 [shape = 'u32[]', space=smem, size = 0x4, offset = 0x4, fixed_abs, tag = 'smem constant byte address 0x4 - core index']
  #allocation1 [shape = 'u32[144,128]{1,0:T(1,128)}', space=vmem, size = 0x12000, scoped, tag = 'internal scratch']
  %s0 = inlined_call_operand.vmem [shape: f32[128,16], index: 0, kind: input, shape index: {}]
  %s1 = inlined_call_operand.vmem [shape: f32[264,128], index: 1, kind: input, shape index: {}]
  %s2 = inlined_call_operand.vmem [shape: bf16[32,2048], index: 2, kind: input, shape index: {}]
  %s3 = inlined_call_operand.vmem [shape: f32[1,2048], index: 3, kind: input, shape index: {}]
  %s4 = inlined_call_operand.vmem [shape: bf16[2048,32], index: 4, kind: input, shape index: {}]
  %s5 = inlined_call_operand.vmem [shape: f32[4,2], index: 5, kind: output, shape index: {}]
  %s6 = sld [smem:[#allocation0]]
  $region30: #{trans_lstm_nra_forward.1} parent=0
    _
  %s8 = ssub.s32 1, %s6
  %s9 = scalar_select 0, %s8, %s6
  // Predicated region
  $region2: #{trans_lstm_nra_forward.1} parent=0 // pred_check
    _
  $region3: #{trans_lstm_nra_forward.1} parent=0 // pred_check_branch
    %11 = sbr.rel (0) target = $region5
  $region4: #{trans_lstm_nra_forward.1} parent=0 // pred_region
    _
  $region5: #{trans_lstm_nra_forward.1} parent=0 // pred_fallthru
    _
  // Predicated region
  $region6: #{trans_lstm_nra_forward.1} parent=0 // pred_check
    _
  $region7: #{trans_lstm_nra_forward.1} parent=0 // pred_check_branch
    %13 = sbr.rel (0) target = $region9
  $region8: #{trans_lstm_nra_forward.1} parent=0 // pred_region
    _
  $region9: #{trans_lstm_nra_forward.1} parent=0 // pred_fallthru
    _
  // Predicated region
  $region10: #{trans_lstm_nra_forward.1} parent=0 // pred_check
    _
  $region11: #{trans_lstm_nra_forward.1} parent=0 // pred_check_branch
    %15 = sbr.rel (0) target = $region13
  $region12: #{trans_lstm_nra_forward.1} parent=0 // pred_region
    _
  $region13: #{trans_lstm_nra_forward.1} parent=0 // pred_fallthru
    _
  // Predicated region
  $region14: #{trans_lstm_nra_forward.1} parent=0 // pred_check
    _
  $region15: #{trans_lstm_nra_forward.1} parent=0 // pred_check_branch
    %17 = sbr.rel (0) target = $region17
  $region16: #{trans_lstm_nra_forward.1} parent=0 // pred_region
    _
  $region17: #{trans_lstm_nra_forward.1} parent=0 // pred_fallthru
    _
  // Predicated region
  $region18: #{trans_lstm_nra_forward.1} parent=0 // pred_check
    _
  $region19: #{trans_lstm_nra_forward.1} parent=0 // pred_check_branch
    %19 = sbr.rel (0) target = $region21
  $region20: #{trans_lstm_nra_forward.1} parent=0 // pred_region
    _
  $region21: #{trans_lstm_nra_forward.1} parent=0 // pred_fallthru
    _
  %v21 = vld [vmem:[%s1 + $0x20] sm:$0xff]
  %v22 = vld [vmem:[%s1 + $0x28] sm:$0xff]
  %v23 = vld [vmem:[%s1 + $0x30] sm:$0x1]
  %v24 = vld [vmem:[%s0] sm:$0xff]
  %v25 = vld [vmem:[%s0 + $0x8] sm:$0xff]
  %v26 = vld [vmem:[%s0 + $0x10] sm:$0xff]
  %v27 = vld [vmem:[%s0 + $0x18] sm:$0xff]
  %v28 = vld [vmem:[%s0 + $0x20] sm:$0xff]
  %v29 = vld [vmem:[%s0 + $0x28] sm:$0xff]
  %v30 = vld [vmem:[%s0 + $0x30] sm:$0xff]
  %v31 = vld [vmem:[%s0 + $0x38] sm:$0xff]
  %v32 = vld [vmem:[%s0 + $0x40] sm:$0xff]
  %v33 = vld [vmem:[%s0 + $0x48] sm:$0xff]
  %v34 = vld [vmem:[%s0 + $0x50] sm:$0xff]
  %v35 = vld [vmem:[%s0 + $0x58] sm:$0xff]
  %v36 = vld [vmem:[%s0 + $0x60] sm:$0xff]
  %v37 = vld [vmem:[%s0 + $0x68] sm:$0xff]
  %v38 = vld [vmem:[%s0 + $0x70] sm:$0xff]
  %v39 = vld [vmem:[%s0 + $0x78] sm:$0xff]
  %v40 = vlaneseq
  %v41 = vshrl.u32 %v40, 7
  %v42 = vsub.s32 0, %v41
  %v43 = vrot.slane %v23, %v42
  %vm44 = vcmask 130048
  %v46 = vsel %vm44, %v24, 0
  %v49 = vsel %vm44, %v25, 0
  %v52 = vsel %vm44, %v26, 0
  %v55 = vsel %vm44, %v27, 0
  %v58 = vsel %vm44, %v28, 0
  %v61 = vsel %vm44, %v29, 0
  %v64 = vsel %vm44, %v30, 0
  %v67 = vsel %vm44, %v31, 0
  %v70 = vsel %vm44, %v32, 0
  %v73 = vsel %vm44, %v33, 0
  %v76 = vsel %vm44, %v34, 0
  %v79 = vsel %vm44, %v35, 0
  %v82 = vsel %vm44, %v36, 0
  %v85 = vsel %vm44, %v37, 0
  %v88 = vsel %vm44, %v38, 0
  %v91 = vsel %vm44, %v39, 0
  %93 = vmatprep.subr.mxu0 0.0
  %94 = vmatpush1.msra.mxu0 0.0
  %95 = vmatprep.subr.mxu0 0.0
  %96 = vmatpush1.msra.mxu0 0.0
  %97 = vmatprep.subr.mxu0 0.0
  %98 = vmatpush1.msra.mxu0 0.0
  %99 = vmatprep.subr.mxu0 0.0
  %100 = vmatpush1.msra.mxu0 0.0
  %101 = vmatprep.subr.mxu0 0.0
  %102 = vmatpush1.msra.mxu0 0.0
  %103 = vmatprep.subr.mxu0 0.0
  %104 = vmatpush1.msra.mxu0 0.0
  %105 = vmatprep.subr.mxu0 0.0
  %106 = vmatpush1.msra.mxu0 0.0
  %107 = vmatprep.subr.mxu0 0.0
  %108 = vmatpush1.msra.mxu0 0.0
  %109 = vmatprep.subr.mxu0 0.0
  %110 = vmatpush1.msra.mxu0 0.0
  %111 = vmatprep.subr.mxu0 0.0
  %112 = vmatpush1.msra.mxu0 0.0
  %113 = vmatprep.subr.mxu0 0.0
  %114 = vmatpush1.msra.mxu0 0.0
  %115 = vmatprep.subr.mxu0 0.0
  %116 = vmatpush1.msra.mxu0 0.0
  %117 = vmatprep.subr.mxu0 0.0
  %118 = vmatpush1.msra.mxu0 0.0
  %119 = vmatprep.subr.mxu0 0.0
  %120 = vmatpush1.msra.mxu0 0.0
  %121 = vmatprep.subr.mxu0 0.0
  %122 = vmatpush1.msra.mxu0 %v22
  %123 = vmatprep.subr.mxu0 0.0
  %124 = vmatpush1.msra.mxu0 %v21
  %125 = vmatprep.subr.mxu0 0.0
  %126 = vmatpush2.msra.mxu0 0.0
  %127 = vmatprep.subr.mxu0 0.0
  %128 = vmatpush2.msra.mxu0 0.0
  %129 = vmatprep.subr.mxu0 0.0
  %130 = vmatpush2.msra.mxu0 0.0
  %131 = vmatprep.subr.mxu0 0.0
  %132 = vmatpush2.msra.mxu0 0.0
  %133 = vmatprep.subr.mxu0 0.0
  %134 = vmatpush2.msra.mxu0 0.0
  %135 = vmatprep.subr.mxu0 0.0
  %136 = vmatpush2.msra.mxu0 0.0
  %137 = vmatprep.subr.mxu0 0.0
  %138 = vmatpush2.msra.mxu0 0.0
  %139 = vmatprep.subr.mxu0 0.0
  %140 = vmatpush2.msra.mxu0 0.0
  %141 = vmatprep.subr.mxu0 0.0
  %142 = vmatpush2.msra.mxu0 0.0
  %143 = vmatprep.subr.mxu0 0.0
  %144 = vmatpush2.msra.mxu0 0.0
  %145 = vmatprep.subr.mxu0 0.0
  %146 = vmatpush2.msra.mxu0 0.0
  %147 = vmatprep.subr.mxu0 0.0
  %148 = vmatpush2.msra.mxu0 0.0
  %149 = vmatprep.subr.mxu0 0.0
  %150 = vmatpush2.msra.mxu0 0.0
  %151 = vmatprep.subr.mxu0 0.0
  %152 = vmatpush2.msra.mxu0 0.0
  %153 = vmatprep.subr.mxu0 0.0
  %154 = vmatpush2.msra.mxu0 0.0
  %155 = vmatprep.subr.mxu0 0.0
  %156 = vmatpush2.msra.mxu0 0.0
  %157 = vmatprep.mubr.f32.mxu0 0.0
  %158 = vmatmul.mubr.f32.gmra.mxu0 %v46
  %v159 = vpop.f32.mrf.mxu0
  %v160 = vadd.f32 %v43, %v159
  %v161 = vpop.f32.mrf.mxu0
  %162 = vmatprep.mubr.f32.mxu0 0.0
  %163 = vmatmul.mubr.f32.gmra.mxu0 %v49
  %v164 = vpop.f32.mrf.mxu0
  %v165 = vadd.f32 %v43, %v164
  %v166 = vpop.f32.mrf.mxu0
  %167 = vmatprep.mubr.f32.mxu0 0.0
  %168 = vmatmul.mubr.f32.gmra.mxu0 %v52
  %v169 = vpop.f32.mrf.mxu0
  %v170 = vadd.f32 %v43, %v169
  %v171 = vpop.f32.mrf.mxu0
  %172 = vmatprep.mubr.f32.mxu0 0.0
  %173 = vmatmul.mubr.f32.gmra.mxu0 %v55
  %v174 = vpop.f32.mrf.mxu0
  %v175 = vadd.f32 %v43, %v174
  %v176 = vpop.f32.mrf.mxu0
  %177 = vmatprep.mubr.f32.mxu0 0.0
  %178 = vmatmul.mubr.f32.gmra.mxu0 %v58
  %v179 = vpop.f32.mrf.mxu0
  %v180 = vadd.f32 %v43, %v179
  %v181 = vpop.f32.mrf.mxu0
  %182 = vmatprep.mubr.f32.mxu0 0.0
  %183 = vmatmul.mubr.f32.gmra.mxu0 %v61
  %v184 = vpop.f32.mrf.mxu0
  %v185 = vadd.f32 %v43, %v184
  %v186 = vpop.f32.mrf.mxu0
  %187 = vmatprep.mubr.f32.mxu0 0.0
  %188 = vmatmul.mubr.f32.gmra.mxu0 %v64
  %v189 = vpop.f32.mrf.mxu0
  %v190 = vadd.f32 %v43, %v189
  %v191 = vpop.f32.mrf.mxu0
  %192 = vmatprep.mubr.f32.mxu0 0.0
  %193 = vmatmul.mubr.f32.gmra.mxu0 %v67
  %v194 = vpop.f32.mrf.mxu0
  %v195 = vadd.f32 %v43, %v194
  %v196 = vpop.f32.mrf.mxu0
  %197 = vmatprep.mubr.f32.mxu0 0.0
  %198 = vmatmul.mubr.f32.gmra.mxu0 %v70
  %v199 = vpop.f32.mrf.mxu0
  %v200 = vadd.f32 %v43, %v199
  %v201 = vpop.f32.mrf.mxu0
  %202 = vmatprep.mubr.f32.mxu0 0.0
  %203 = vmatmul.mubr.f32.gmra.mxu0 %v73
  %v204 = vpop.f32.mrf.mxu0
  %v205 = vadd.f32 %v43, %v204
  %v206 = vpop.f32.mrf.mxu0
  %207 = vmatprep.mubr.f32.mxu0 0.0
  %208 = vmatmul.mubr.f32.gmra.mxu0 %v76
  %v209 = vpop.f32.mrf.mxu0
  %v210 = vadd.f32 %v43, %v209
  %v211 = vpop.f32.mrf.mxu0
  %212 = vmatprep.mubr.f32.mxu0 0.0
  %213 = vmatmul.mubr.f32.gmra.mxu0 %v79
  %v214 = vpop.f32.mrf.mxu0
  %v215 = vadd.f32 %v43, %v214
  %v216 = vpop.f32.mrf.mxu0
  %217 = vmatprep.mubr.f32.mxu0 0.0
  %218 = vmatmul.mubr.f32.gmra.mxu0 %v82
  %v219 = vpop.f32.mrf.mxu0
  %v220 = vadd.f32 %v43, %v219
  %v221 = vpop.f32.mrf.mxu0
  %222 = vmatprep.mubr.f32.mxu0 0.0
  %223 = vmatmul.mubr.f32.gmra.mxu0 %v85
  %v224 = vpop.f32.mrf.mxu0
  %v225 = vadd.f32 %v43, %v224
  %v226 = vpop.f32.mrf.mxu0
  %227 = vmatprep.mubr.f32.mxu0 0.0
  %228 = vmatmul.mubr.f32.gmra.mxu0 %v88
  %v229 = vpop.f32.mrf.mxu0
  %v230 = vadd.f32 %v43, %v229
  %v231 = vpop.f32.mrf.mxu0
  %232 = vmatprep.mubr.f32.mxu0 0.0
  %233 = vmatmul.mubr.f32.gmra.mxu0 %v91
  %v234 = vpop.f32.mrf.mxu0
  %v235 = vadd.f32 %v43, %v234
  %v236 = vpop.f32.mrf.mxu0
  %237 = vdwg.mxu0
  %v238 = vtanh.pop %v160
  %v239 = vtanh.pop %v165
  %v240 = vtanh.pop %v170
  %v241 = vtanh.pop %v175
  %v242 = vtanh.pop %v180
  %v243 = vtanh.pop %v185
  %v244 = vtanh.pop %v190
  %v245 = vtanh.pop %v195
  %v246 = vtanh.pop %v200
  %v247 = vtanh.pop %v205
  %v248 = vtanh.pop %v210
  %v249 = vtanh.pop %v215
  %v250 = vtanh.pop %v220
  %v251 = vtanh.pop %v225
  %v252 = vtanh.pop %v230
  %v253 = vtanh.pop %v235
  %v254 = vld [vmem:[%s1] sm:$0xff]
  %v255 = vld [vmem:[%s1 + $0x8] sm:$0xff]
  %v256 = vld [vmem:[%s1 + $0x10] sm:$0xff]
  %v257 = vld [vmem:[%s1 + $0x18] sm:$0xff]
  %258 = vmatprep.subr.mxu0 0.0
  %259 = vmatpush1.msra.mxu0 %v253
  %260 = vmatprep.subr.mxu0 0.0
  %261 = vmatpush1.msra.mxu0 %v252
  %262 = vmatprep.subr.mxu0 0.0
  %263 = vmatpush1.msra.mxu0 %v251
  %264 = vmatprep.subr.mxu0 0.0
  %265 = vmatpush1.msra.mxu0 %v250
  %266 = vmatprep.subr.mxu0 0.0
  %267 = vmatpush1.msra.mxu0 %v249
  %268 = vmatprep.subr.mxu0 0.0
  %269 = vmatpush1.msra.mxu0 %v248
  %270 = vmatprep.subr.mxu0 0.0
  %271 = vmatpush1.msra.mxu0 %v247
  %272 = vmatprep.subr.mxu0 0.0
  %273 = vmatpush1.msra.mxu0 %v246
  %274 = vmatprep.subr.mxu0 0.0
  %275 = vmatpush1.msra.mxu0 %v245
  %276 = vmatprep.subr.mxu0 0.0
  %277 = vmatpush1.msra.mxu0 %v244
  %278 = vmatprep.subr.mxu0 0.0
  %279 = vmatpush1.msra.mxu0 %v243
  %280 = vmatprep.subr.mxu0 0.0
  %281 = vmatpush1.msra.mxu0 %v242
  %282 = vmatprep.subr.mxu0 0.0
  %283 = vmatpush1.msra.mxu0 %v241
  %284 = vmatprep.subr.mxu0 0.0
  %285 = vmatpush1.msra.mxu0 %v240
  %286 = vmatprep.subr.mxu0 0.0
  %287 = vmatpush1.msra.mxu0 %v239
  %288 = vmatprep.subr.mxu0 0.0
  %289 = vmatpush1.msra.mxu0 %v238
  %290 = vmatprep.subr.mxu0 0.0
  %291 = vmatpush2.msra.mxu0 0.0
  %292 = vmatprep.subr.mxu0 0.0
  %293 = vmatpush2.msra.mxu0 0.0
  %294 = vmatprep.subr.mxu0 0.0
  %295 = vmatpush2.msra.mxu0 0.0
  %296 = vmatprep.subr.mxu0 0.0
  %297 = vmatpush2.msra.mxu0 0.0
  %298 = vmatprep.subr.mxu0 0.0
  %299 = vmatpush2.msra.mxu0 0.0
  %300 = vmatprep.subr.mxu0 0.0
  %301 = vmatpush2.msra.mxu0 0.0
  %302 = vmatprep.subr.mxu0 0.0
  %303 = vmatpush2.msra.mxu0 0.0
  %304 = vmatprep.subr.mxu0 0.0
  %305 = vmatpush2.msra.mxu0 0.0
  %306 = vmatprep.subr.mxu0 0.0
  %307 = vmatpush2.msra.mxu0 0.0
  %308 = vmatprep.subr.mxu0 0.0
  %309 = vmatpush2.msra.mxu0 0.0
  %310 = vmatprep.subr.mxu0 0.0
  %311 = vmatpush2.msra.mxu0 0.0
  %312 = vmatprep.subr.mxu0 0.0
  %313 = vmatpush2.msra.mxu0 0.0
  %314 = vmatprep.subr.mxu0 0.0
  %315 = vmatpush2.msra.mxu0 0.0
  %316 = vmatprep.subr.mxu0 0.0
  %317 = vmatpush2.msra.mxu0 0.0
  %318 = vmatprep.subr.mxu0 0.0
  %319 = vmatpush2.msra.mxu0 0.0
  %320 = vmatprep.subr.mxu0 0.0
  %321 = vmatpush2.msra.mxu0 0.0
  %322 = vmatprep.mubr.f32.mxu0 0.0
  %323 = vmatmul.mubr.f32.gmra.mxu0 %v254
  %v324 = vpop.f32.mrf.mxu0
  %v325 = vadd.f32 0.0, %v324
  %v326 = vpop.f32.mrf.mxu0
  %327 = vmatprep.mubr.f32.mxu0 0.0
  %328 = vmatmul.mubr.f32.gmra.mxu0 %v255
  %v329 = vpop.f32.mrf.mxu0
  %v330 = vadd.f32 0.0, %v329
  %v331 = vpop.f32.mrf.mxu0
  %332 = vmatprep.mubr.f32.mxu0 0.0
  %333 = vmatmul.mubr.f32.gmra.mxu0 %v256
  %v334 = vpop.f32.mrf.mxu0
  %v335 = vadd.f32 0.0, %v334
  %v336 = vpop.f32.mrf.mxu0
  %337 = vmatprep.mubr.f32.mxu0 0.0
  %338 = vmatmul.mubr.f32.gmra.mxu0 %v257
  %v339 = vpop.f32.mrf.mxu0
  %v340 = vadd.f32 0.0, %v339
  %v341 = vpop.f32.mrf.mxu0
  %342 = vdwg.mxu0
  %v343 = vld [vmem:[%s1 + $0x38] sm:$0xff]
  %v344 = vld [vmem:[%s1 + $0x40] sm:$0xff]
  %v345 = vld [vmem:[%s1 + $0x48] sm:$0xff]
  %v346 = vld [vmem:[%s1 + $0x50] sm:$0xff]
  %v347 = vld [vmem:[%s1 + $0x58] sm:$0xff]
  %v348 = vld [vmem:[%s1 + $0x60] sm:$0xff]
  %v349 = vld [vmem:[%s1 + $0x68] sm:$0xff]
  %v350 = vld [vmem:[%s1 + $0x70] sm:$0xff]
  %v351 = vld [vmem:[%s1 + $0x78] sm:$0x1]
  %v352 = vlaneseq
  %v353 = vshrl.u32 %v352, 7
  %v354 = vsub.s32 0, %v353
  %v355 = vrot.slane %v351, %v354
  %vm356 = vcmask 523264
  %v358 = vsel %vm356, %v325, 0
  %v361 = vsel %vm356, %v330, 0
  %v364 = vsel %vm356, %v335, 0
  %v367 = vsel %vm356, %v340, 0
  %369 = vmatprep.subr.mxu0 0.0
  %370 = vmatpush1.msra.mxu0 0.0
  %371 = vmatprep.subr.mxu0 0.0
  %372 = vmatpush1.msra.mxu0 0.0
  %373 = vmatprep.subr.mxu0 0.0
  %374 = vmatpush1.msra.mxu0 0.0
  %375 = vmatprep.subr.mxu0 0.0
  %376 = vmatpush1.msra.mxu0 0.0
  %377 = vmatprep.subr.mxu0 0.0
  %378 = vmatpush1.msra.mxu0 0.0
  %379 = vmatprep.subr.mxu0 0.0
  %380 = vmatpush1.msra.mxu0 0.0
  %381 = vmatprep.subr.mxu0 0.0
  %382 = vmatpush1.msra.mxu0 0.0
  %383 = vmatprep.subr.mxu0 0.0
  %384 = vmatpush1.msra.mxu0 0.0
  %385 = vmatprep.subr.mxu0 0.0
  %386 = vmatpush1.msra.mxu0 %v350
  %387 = vmatprep.subr.mxu0 0.0
  %388 = vmatpush1.msra.mxu0 %v349
  %389 = vmatprep.subr.mxu0 0.0
  %390 = vmatpush1.msra.mxu0 %v348
  %391 = vmatprep.subr.mxu0 0.0
  %392 = vmatpush1.msra.mxu0 %v347
  %393 = vmatprep.subr.mxu0 0.0
  %394 = vmatpush1.msra.mxu0 %v346
  %395 = vmatprep.subr.mxu0 0.0
  %396 = vmatpush1.msra.mxu0 %v345
  %397 = vmatprep.subr.mxu0 0.0
  %398 = vmatpush1.msra.mxu0 %v344
  %399 = vmatprep.subr.mxu0 0.0
  %400 = vmatpush1.msra.mxu0 %v343
  %401 = vmatprep.subr.mxu0 0.0
  %402 = vmatpush2.msra.mxu0 0.0
  %403 = vmatprep.subr.mxu0 0.0
  %404 = vmatpush2.msra.mxu0 0.0
  %405 = vmatprep.subr.mxu0 0.0
  %406 = vmatpush2.msra.mxu0 0.0
  %407 = vmatprep.subr.mxu0 0.0
  %408 = vmatpush2.msra.mxu0 0.0
  %409 = vmatprep.subr.mxu0 0.0
  %410 = vmatpush2.msra.mxu0 0.0
  %411 = vmatprep.subr.mxu0 0.0
  %412 = vmatpush2.msra.mxu0 0.0
  %413 = vmatprep.subr.mxu0 0.0
  %414 = vmatpush2.msra.mxu0 0.0
  %415 = vmatprep.subr.mxu0 0.0
  %416 = vmatpush2.msra.mxu0 0.0
  %417 = vmatprep.subr.mxu0 0.0
  %418 = vmatpush2.msra.mxu0 0.0
  %419 = vmatprep.subr.mxu0 0.0
  %420 = vmatpush2.msra.mxu0 0.0
  %421 = vmatprep.subr.mxu0 0.0
  %422 = vmatpush2.msra.mxu0 0.0
  %423 = vmatprep.subr.mxu0 0.0
  %424 = vmatpush2.msra.mxu0 0.0
  %425 = vmatprep.subr.mxu0 0.0
  %426 = vmatpush2.msra.mxu0 0.0
  %427 = vmatprep.subr.mxu0 0.0
  %428 = vmatpush2.msra.mxu0 0.0
  %429 = vmatprep.subr.mxu0 0.0
  %430 = vmatpush2.msra.mxu0 0.0
  %431 = vmatprep.subr.mxu0 0.0
  %432 = vmatpush2.msra.mxu0 0.0
  %433 = vmatprep.mubr.f32.mxu0 0.0
  %434 = vmatmul.mubr.f32.gmra.mxu0 %v358
  %v435 = vpop.f32.mrf.mxu0
  %v436 = vadd.f32 %v355, %v435
  %v437 = vpop.f32.mrf.mxu0
  %438 = vmatprep.mubr.f32.mxu0 0.0
  %439 = vmatmul.mubr.f32.gmra.mxu0 %v361
  %v440 = vpop.f32.mrf.mxu0
  %v441 = vadd.f32 %v355, %v440
  %v442 = vpop.f32.mrf.mxu0
  %443 = vmatprep.mubr.f32.mxu0 0.0
  %444 = vmatmul.mubr.f32.gmra.mxu0 %v364
  %v445 = vpop.f32.mrf.mxu0
  %v446 = vadd.f32 %v355, %v445
  %v447 = vpop.f32.mrf.mxu0
  %448 = vmatprep.mubr.f32.mxu0 0.0
  %449 = vmatmul.mubr.f32.gmra.mxu0 %v367
  %v450 = vpop.f32.mrf.mxu0
  %v451 = vadd.f32 %v355, %v450
  %v452 = vpop.f32.mrf.mxu0
  %453 = vdwg.mxu0
  %v454 = vtanh.pop %v436
  %v455 = vtanh.pop %v441
  %v456 = vtanh.pop %v446
  %v457 = vtanh.pop %v451
  %v458 = vld [vmem:[%s1 + $0x80] sm:$0xff]
  %v459 = vld [vmem:[%s1 + $0x88] sm:$0xff]
  %v460 = vld [vmem:[%s1 + $0x90] sm:$0xff]
  %v461 = vld [vmem:[%s1 + $0x98] sm:$0xff]
  %v462 = vld [vmem:[%s1 + $0xa0] sm:$0x1]
  %v463 = vlaneseq
  %v464 = vshrl.u32 %v463, 7
  %v465 = vsub.s32 0, %v464
  %v466 = vrot.slane %v462, %v465
  %vm467 = vcmask 261120
  %v469 = vsel %vm467, %v454, 0
  %v472 = vsel %vm467, %v455, 0
  %v475 = vsel %vm467, %v456, 0
  %v478 = vsel %vm467, %v457, 0
  %480 = vmatprep.subr.mxu0 0.0
  %481 = vmatpush1.msra.mxu0 0.0
  %482 = vmatprep.subr.mxu0 0.0
  %483 = vmatpush1.msra.mxu0 0.0
  %484 = vmatprep.subr.mxu0 0.0
  %485 = vmatpush1.msra.mxu0 0.0
  %486 = vmatprep.subr.mxu0 0.0
  %487 = vmatpush1.msra.mxu0 0.0
  %488 = vmatprep.subr.mxu0 0.0
  %489 = vmatpush1.msra.mxu0 0.0
  %490 = vmatprep.subr.mxu0 0.0
  %491 = vmatpush1.msra.mxu0 0.0
  %492 = vmatprep.subr.mxu0 0.0
  %493 = vmatpush1.msra.mxu0 0.0
  %494 = vmatprep.subr.mxu0 0.0
  %495 = vmatpush1.msra.mxu0 0.0
  %496 = vmatprep.subr.mxu0 0.0
  %497 = vmatpush1.msra.mxu0 0.0
  %498 = vmatprep.subr.mxu0 0.0
  %499 = vmatpush1.msra.mxu0 0.0
  %500 = vmatprep.subr.mxu0 0.0
  %501 = vmatpush1.msra.mxu0 0.0
  %502 = vmatprep.subr.mxu0 0.0
  %503 = vmatpush1.msra.mxu0 0.0
  %504 = vmatprep.subr.mxu0 0.0
  %505 = vmatpush1.msra.mxu0 %v461
  %506 = vmatprep.subr.mxu0 0.0
  %507 = vmatpush1.msra.mxu0 %v460
  %508 = vmatprep.subr.mxu0 0.0
  %509 = vmatpush1.msra.mxu0 %v459
  %510 = vmatprep.subr.mxu0 0.0
  %511 = vmatpush1.msra.mxu0 %v458
  %512 = vmatprep.subr.mxu0 0.0
  %513 = vmatpush2.msra.mxu0 0.0
  %514 = vmatprep.subr.mxu0 0.0
  %515 = vmatpush2.msra.mxu0 0.0
  %516 = vmatprep.subr.mxu0 0.0
  %517 = vmatpush2.msra.mxu0 0.0
  %518 = vmatprep.subr.mxu0 0.0
  %519 = vmatpush2.msra.mxu0 0.0
  %520 = vmatprep.subr.mxu0 0.0
  %521 = vmatpush2.msra.mxu0 0.0
  %522 = vmatprep.subr.mxu0 0.0
  %523 = vmatpush2.msra.mxu0 0.0
  %524 = vmatprep.subr.mxu0 0.0
  %525 = vmatpush2.msra.mxu0 0.0
  %526 = vmatprep.subr.mxu0 0.0
  %527 = vmatpush2.msra.mxu0 0.0
  %528 = vmatprep.subr.mxu0 0.0
  %529 = vmatpush2.msra.mxu0 0.0
  %530 = vmatprep.subr.mxu0 0.0
  %531 = vmatpush2.msra.mxu0 0.0
  %532 = vmatprep.subr.mxu0 0.0
  %533 = vmatpush2.msra.mxu0 0.0
  %534 = vmatprep.subr.mxu0 0.0
  %535 = vmatpush2.msra.mxu0 0.0
  %536 = vmatprep.subr.mxu0 0.0
  %537 = vmatpush2.msra.mxu0 0.0
  %538 = vmatprep.subr.mxu0 0.0
  %539 = vmatpush2.msra.mxu0 0.0
  %540 = vmatprep.subr.mxu0 0.0
  %541 = vmatpush2.msra.mxu0 0.0
  %542 = vmatprep.subr.mxu0 0.0
  %543 = vmatpush2.msra.mxu0 0.0
  %544 = vmatprep.mubr.f32.mxu0 0.0
  %545 = vmatmul.mubr.f32.gmra.mxu0 %v469
  %v546 = vpop.f32.mrf.mxu0
  %v547 = vadd.f32 %v466, %v546
  %v548 = vpop.f32.mrf.mxu0
  %549 = vmatprep.mubr.f32.mxu0 0.0
  %550 = vmatmul.mubr.f32.gmra.mxu0 %v472
  %v551 = vpop.f32.mrf.mxu0
  %v552 = vadd.f32 %v466, %v551
  %v553 = vpop.f32.mrf.mxu0
  %554 = vmatprep.mubr.f32.mxu0 0.0
  %555 = vmatmul.mubr.f32.gmra.mxu0 %v475
  %v556 = vpop.f32.mrf.mxu0
  %v557 = vadd.f32 %v466, %v556
  %v558 = vpop.f32.mrf.mxu0
  %559 = vmatprep.mubr.f32.mxu0 0.0
  %560 = vmatmul.mubr.f32.gmra.mxu0 %v478
  %v561 = vpop.f32.mrf.mxu0
  %v562 = vadd.f32 %v466, %v561
  %v563 = vpop.f32.mrf.mxu0
  %564 = vdwg.mxu0
  %v565 = vld [vmem:[%s1 + $0xd0] sm:$0xff]
  %v566 = vld [vmem:[%s1 + $0xd8] sm:$0xff]
  %v567 = vld [vmem:[%s1 + $0xe0] sm:$0xff]
  %v568 = vld [vmem:[%s1 + $0xe8] sm:$0xff]
  %573 = vrot.lane.b32.xlu0 %v547, 96
  %v574 = vpop.permute.xlu0 %573
  %575 = vrot.lane.b32.xlu0 %v552, 96
  %v576 = vpop.permute.xlu0 %575
  %577 = vrot.lane.b32.xlu0 %v557, 96
  %v578 = vpop.permute.xlu0 %577
  %579 = vrot.lane.b32.xlu0 %v562, 96
  %v580 = vpop.permute.xlu0 %579
  %vm581 = vcmask 64512
  %v582 = vsel %vm581, %v547, 0
  %v584 = vsel %vm581, %v552, 0
  %v586 = vsel %vm581, %v557, 0
  %v588 = vsel %vm581, %v562, 0
  %v590 = vsel %vm581, %v574, 0
  %v592 = vsel %vm581, %v576, 0
  %v594 = vsel %vm581, %v578, 0
  %v596 = vsel %vm581, %v580, 0
  %598 = vmatprep.subr.mxu0 0.0
  %599 = vmatpush1.xpose.msra.mxu0 0.0
  %600 = vmatprep.subr.mxu0 0.0
  %601 = vmatpush1.xpose.msra.mxu0 0.0
  %602 = vmatprep.subr.mxu0 0.0
  %603 = vmatpush1.xpose.msra.mxu0 0.0
  %604 = vmatprep.subr.mxu0 0.0
  %605 = vmatpush1.xpose.msra.mxu0 0.0
  %606 = vmatprep.subr.mxu0 0.0
  %607 = vmatpush1.xpose.msra.mxu0 0.0
  %608 = vmatprep.subr.mxu0 0.0
  %609 = vmatpush1.xpose.msra.mxu0 0.0
  %610 = vmatprep.subr.mxu0 0.0
  %611 = vmatpush1.xpose.msra.mxu0 0.0
  %612 = vmatprep.subr.mxu0 0.0
  %613 = vmatpush1.xpose.msra.mxu0 0.0
  %614 = vmatprep.subr.mxu0 0.0
  %615 = vmatpush1.xpose.msra.mxu0 0.0
  %616 = vmatprep.subr.mxu0 0.0
  %617 = vmatpush1.xpose.msra.mxu0 0.0
  %618 = vmatprep.subr.mxu0 0.0
  %619 = vmatpush1.xpose.msra.mxu0 0.0
  %620 = vmatprep.subr.mxu0 0.0
  %621 = vmatpush1.xpose.msra.mxu0 0.0
  %622 = vmatprep.subr.mxu0 0.0
  %623 = vmatpush1.xpose.msra.mxu0 %v596
  %624 = vmatprep.subr.mxu0 0.0
  %625 = vmatpush1.xpose.msra.mxu0 %v594
  %626 = vmatprep.subr.mxu0 0.0
  %627 = vmatpush1.xpose.msra.mxu0 %v592
  %628 = vmatprep.subr.mxu0 0.0
  %629 = vmatpush1.xpose.msra.mxu0 %v590
  %630 = vmatprep.subr.mxu0 0.0
  %631 = vmatpush2.xpose.msra.mxu0 0.0
  %632 = vmatprep.subr.mxu0 0.0
  %633 = vmatpush2.xpose.msra.mxu0 0.0
  %634 = vmatprep.subr.mxu0 0.0
  %635 = vmatpush2.xpose.msra.mxu0 0.0
  %636 = vmatprep.subr.mxu0 0.0
  %637 = vmatpush2.xpose.msra.mxu0 0.0
  %638 = vmatprep.subr.mxu0 0.0
  %639 = vmatpush2.xpose.msra.mxu0 0.0
  %640 = vmatprep.subr.mxu0 0.0
  %641 = vmatpush2.xpose.msra.mxu0 0.0
  %642 = vmatprep.subr.mxu0 0.0
  %643 = vmatpush2.xpose.msra.mxu0 0.0
  %644 = vmatprep.subr.mxu0 0.0
  %645 = vmatpush2.xpose.msra.mxu0 0.0
  %646 = vmatprep.subr.mxu0 0.0
  %647 = vmatpush2.xpose.msra.mxu0 0.0
  %648 = vmatprep.subr.mxu0 0.0
  %649 = vmatpush2.xpose.msra.mxu0 0.0
  %650 = vmatprep.subr.mxu0 0.0
  %651 = vmatpush2.xpose.msra.mxu0 0.0
  %652 = vmatprep.subr.mxu0 0.0
  %653 = vmatpush2.xpose.msra.mxu0 0.0
  %654 = vmatprep.subr.mxu0 0.0
  %655 = vmatpush2.xpose.msra.mxu0 0.0
  %656 = vmatprep.subr.mxu0 0.0
  %657 = vmatpush2.xpose.msra.mxu0 0.0
  %658 = vmatprep.subr.mxu0 0.0
  %659 = vmatpush2.xpose.msra.mxu0 0.0
  %660 = vmatprep.subr.mxu0 0.0
  %661 = vmatpush2.xpose.msra.mxu0 0.0
  %662 = vmatprep.mubr.f32.mxu0 0.0
  %663 = vmatmul.mubr.f32.gmra.mxu0 %v582
  %v664 = vpop.f32.mrf.mxu0
  %v665 = vadd.f32 0.0, %v664
  %v666 = vpop.f32.mrf.mxu0
  %667 = vmatprep.mubr.f32.mxu0 0.0
  %668 = vmatmul.mubr.f32.gmra.mxu0 %v584
  %v669 = vpop.f32.mrf.mxu0
  %v670 = vadd.f32 0.0, %v669
  %v671 = vpop.f32.mrf.mxu0
  %672 = vmatprep.mubr.f32.mxu0 0.0
  %673 = vmatmul.mubr.f32.gmra.mxu0 %v586
  %v674 = vpop.f32.mrf.mxu0
  %v675 = vadd.f32 0.0, %v674
  %v676 = vpop.f32.mrf.mxu0
  %677 = vmatprep.mubr.f32.mxu0 0.0
  %678 = vmatmul.mubr.f32.gmra.mxu0 %v588
  %v679 = vpop.f32.mrf.mxu0
  %v680 = vadd.f32 0.0, %v679
  %v681 = vpop.f32.mrf.mxu0
  %682 = vdwg.mxu0
  %v683 = vmul.f32 %v665, 0.35355338
  %v684 = vmul.f32 %v670, 0.35355338
  %v685 = vmul.f32 %v675, 0.35355338
  %v686 = vmul.f32 %v680, 0.35355338
  %v687 = vadd.f32 %v683, %v565
  %v688 = vadd.f32 %v684, %v566
  %v689 = vadd.f32 %v685, %v567
  %v690 = vadd.f32 %v686, %v568
  %v691 = vsel %vm467, %v687, -inf
  %692 = vmax.xlane.f32.xlu0 %v691
  %v693 = vpop.xlane.xlu0 %692
  %v694 = vsel %vm467, %v688, -inf
  %695 = vmax.xlane.f32.xlu0 %v694
  %v696 = vpop.xlane.xlu0 %695
  %v697 = vsel %vm467, %v689, -inf
  %698 = vmax.xlane.f32.xlu0 %v697
  %v699 = vpop.xlane.xlu0 %698
  %v700 = vsel %vm467, %v690, -inf
  %701 = vmax.xlane.f32.xlu0 %v700
  %v702 = vpop.xlane.xlu0 %701
  %v703 = vsub.f32 %v687, %v693
  %v704 = vsub.f32 %v688, %v696
  %v705 = vsub.f32 %v689, %v699
  %v706 = vsub.f32 %v690, %v702
  %v707 = vmul.f32 %v703, 1.442695
  %v708 = vpow.pop %v707
  %v709 = vmul.f32 %v704, 1.442695
  %v710 = vpow.pop %v709
  %v711 = vmul.f32 %v705, 1.442695
  %v712 = vpow.pop %v711
  %v713 = vmul.f32 %v706, 1.442695
  %v714 = vpow.pop %v713
  %v715 = vsel %vm467, %v708, 0.0
  %716 = vadd.xlane.f32.xlu0 %v715
  %v717 = vpop.xlane.xlu0 %716
  %v718 = vsel %vm467, %v710, 0.0
  %719 = vadd.xlane.f32.xlu0 %v718
  %v720 = vpop.xlane.xlu0 %719
  %v721 = vsel %vm467, %v712, 0.0
  %722 = vadd.xlane.f32.xlu0 %v721
  %v723 = vpop.xlane.xlu0 %722
  %v724 = vsel %vm467, %v714, 0.0
  %725 = vadd.xlane.f32.xlu0 %v724
  %v726 = vpop.xlane.xlu0 %725
  %v727 = vrcp.pop %v717
  %v728 = vmul.f32 %v708, %v727
  %v729 = vrcp.pop %v720
  %v730 = vmul.f32 %v710, %v729
  %v731 = vrcp.pop %v723
  %v732 = vmul.f32 %v712, %v731
  %v733 = vrcp.pop %v726
  %v734 = vmul.f32 %v714, %v733
  %735 = vrot.lane.b32.xlu0 %v547, 64
  %v736 = vpop.permute.xlu0 %735
  %737 = vrot.lane.b32.xlu0 %v552, 64
  %v738 = vpop.permute.xlu0 %737
  %739 = vrot.lane.b32.xlu0 %v557, 64
  %v740 = vpop.permute.xlu0 %739
  %741 = vrot.lane.b32.xlu0 %v562, 64
  %v742 = vpop.permute.xlu0 %741
  %v748 = vsel %vm467, %v728, 0
  %v751 = vsel %vm467, %v730, 0
  %v754 = vsel %vm467, %v732, 0
  %v757 = vsel %vm467, %v734, 0
  %759 = vmatprep.subr.mxu0 0.0
  %760 = vmatpush1.msra.mxu0 0.0
  %761 = vmatprep.subr.mxu0 0.0
  %762 = vmatpush1.msra.mxu0 0.0
  %763 = vmatprep.subr.mxu0 0.0
  %764 = vmatpush1.msra.mxu0 0.0
  %765 = vmatprep.subr.mxu0 0.0
  %766 = vmatpush1.msra.mxu0 0.0
  %767 = vmatprep.subr.mxu0 0.0
  %768 = vmatpush1.msra.mxu0 0.0
  %769 = vmatprep.subr.mxu0 0.0
  %770 = vmatpush1.msra.mxu0 0.0
  %771 = vmatprep.subr.mxu0 0.0
  %772 = vmatpush1.msra.mxu0 0.0
  %773 = vmatprep.subr.mxu0 0.0
  %774 = vmatpush1.msra.mxu0 0.0
  %775 = vmatprep.subr.mxu0 0.0
  %776 = vmatpush1.msra.mxu0 0.0
  %777 = vmatprep.subr.mxu0 0.0
  %778 = vmatpush1.msra.mxu0 0.0
  %779 = vmatprep.subr.mxu0 0.0
  %780 = vmatpush1.msra.mxu0 0.0
  %781 = vmatprep.subr.mxu0 0.0
  %782 = vmatpush1.msra.mxu0 0.0
  %783 = vmatprep.subr.mxu0 0.0
  %784 = vmatpush1.msra.mxu0 %v742
  %785 = vmatprep.subr.mxu0 0.0
  %786 = vmatpush1.msra.mxu0 %v740
  %787 = vmatprep.subr.mxu0 0.0
  %788 = vmatpush1.msra.mxu0 %v738
  %789 = vmatprep.subr.mxu0 0.0
  %790 = vmatpush1.msra.mxu0 %v736
  %791 = vmatprep.subr.mxu0 0.0
  %792 = vmatpush2.msra.mxu0 0.0
  %793 = vmatprep.subr.mxu0 0.0
  %794 = vmatpush2.msra.mxu0 0.0
  %795 = vmatprep.subr.mxu0 0.0
  %796 = vmatpush2.msra.mxu0 0.0
  %797 = vmatprep.subr.mxu0 0.0
  %798 = vmatpush2.msra.mxu0 0.0
  %799 = vmatprep.subr.mxu0 0.0
  %800 = vmatpush2.msra.mxu0 0.0
  %801 = vmatprep.subr.mxu0 0.0
  %802 = vmatpush2.msra.mxu0 0.0
  %803 = vmatprep.subr.mxu0 0.0
  %804 = vmatpush2.msra.mxu0 0.0
  %805 = vmatprep.subr.mxu0 0.0
  %806 = vmatpush2.msra.mxu0 0.0
  %807 = vmatprep.subr.mxu0 0.0
  %808 = vmatpush2.msra.mxu0 0.0
  %809 = vmatprep.subr.mxu0 0.0
  %810 = vmatpush2.msra.mxu0 0.0
  %811 = vmatprep.subr.mxu0 0.0
  %812 = vmatpush2.msra.mxu0 0.0
  %813 = vmatprep.subr.mxu0 0.0
  %814 = vmatpush2.msra.mxu0 0.0
  %815 = vmatprep.subr.mxu0 0.0
  %816 = vmatpush2.msra.mxu0 0.0
  %817 = vmatprep.subr.mxu0 0.0
  %818 = vmatpush2.msra.mxu0 0.0
  %819 = vmatprep.subr.mxu0 0.0
  %820 = vmatpush2.msra.mxu0 0.0
  %821 = vmatprep.subr.mxu0 0.0
  %822 = vmatpush2.msra.mxu0 0.0
  %823 = vmatprep.mubr.f32.mxu0 0.0
  %824 = vmatmul.mubr.f32.gmra.mxu0 %v748
  %v825 = vpop.f32.mrf.mxu0
  %v826 = vadd.f32 0.0, %v825
  %v827 = vpop.f32.mrf.mxu0
  %828 = vmatprep.mubr.f32.mxu0 0.0
  %829 = vmatmul.mubr.f32.gmra.mxu0 %v751
  %v830 = vpop.f32.mrf.mxu0
  %v831 = vadd.f32 0.0, %v830
  %v832 = vpop.f32.mrf.mxu0
  %833 = vmatprep.mubr.f32.mxu0 0.0
  %834 = vmatmul.mubr.f32.gmra.mxu0 %v754
  %v835 = vpop.f32.mrf.mxu0
  %v836 = vadd.f32 0.0, %v835
  %v837 = vpop.f32.mrf.mxu0
  %838 = vmatprep.mubr.f32.mxu0 0.0
  %839 = vmatmul.mubr.f32.gmra.mxu0 %v757
  %v840 = vpop.f32.mrf.mxu0
  %v841 = vadd.f32 0.0, %v840
  %v842 = vpop.f32.mrf.mxu0
  %843 = vdwg.mxu0
  %844 = vrot.lane.b32.xlu0 %v547, 120
  %v845 = vpop.permute.xlu0 %844
  %846 = vrot.lane.b32.xlu0 %v552, 120
  %v847 = vpop.permute.xlu0 %846
  %848 = vrot.lane.b32.xlu0 %v557, 120
  %v849 = vpop.permute.xlu0 %848
  %850 = vrot.lane.b32.xlu0 %v562, 120
  %v851 = vpop.permute.xlu0 %850
  %852 = vrot.lane.b32.xlu0 %v547, 88
  %v853 = vpop.permute.xlu0 %852
  %854 = vrot.lane.b32.xlu0 %v552, 88
  %v855 = vpop.permute.xlu0 %854
  %856 = vrot.lane.b32.xlu0 %v557, 88
  %v857 = vpop.permute.xlu0 %856
  %858 = vrot.lane.b32.xlu0 %v562, 88
  %v859 = vpop.permute.xlu0 %858
  %v860 = vsel %vm581, %v845, 0
  %v862 = vsel %vm581, %v847, 0
  %v864 = vsel %vm581, %v849, 0
  %v866 = vsel %vm581, %v851, 0
  %v868 = vsel %vm581, %v853, 0
  %v870 = vsel %vm581, %v855, 0
  %v872 = vsel %vm581, %v857, 0
  %v874 = vsel %vm581, %v859, 0
  %876 = vmatprep.subr.mxu0 0.0
  %877 = vmatpush1.xpose.msra.mxu0 0.0
  %878 = vmatprep.subr.mxu0 0.0
  %879 = vmatpush1.xpose.msra.mxu0 0.0
  %880 = vmatprep.subr.mxu0 0.0
  %881 = vmatpush1.xpose.msra.mxu0 0.0
  %882 = vmatprep.subr.mxu0 0.0
  %883 = vmatpush1.xpose.msra.mxu0 0.0
  %884 = vmatprep.subr.mxu0 0.0
  %885 = vmatpush1.xpose.msra.mxu0 0.0
  %886 = vmatprep.subr.mxu0 0.0
  %887 = vmatpush1.xpose.msra.mxu0 0.0
  %888 = vmatprep.subr.mxu0 0.0
  %889 = vmatpush1.xpose.msra.mxu0 0.0
  %890 = vmatprep.subr.mxu0 0.0
  %891 = vmatpush1.xpose.msra.mxu0 0.0
  %892 = vmatprep.subr.mxu0 0.0
  %893 = vmatpush1.xpose.msra.mxu0 0.0
  %894 = vmatprep.subr.mxu0 0.0
  %895 = vmatpush1.xpose.msra.mxu0 0.0
  %896 = vmatprep.subr.mxu0 0.0
  %897 = vmatpush1.xpose.msra.mxu0 0.0
  %898 = vmatprep.subr.mxu0 0.0
  %899 = vmatpush1.xpose.msra.mxu0 0.0
  %900 = vmatprep.subr.mxu0 0.0
  %901 = vmatpush1.xpose.msra.mxu0 %v874
  %902 = vmatprep.subr.mxu0 0.0
  %903 = vmatpush1.xpose.msra.mxu0 %v872
  %904 = vmatprep.subr.mxu0 0.0
  %905 = vmatpush1.xpose.msra.mxu0 %v870
  %906 = vmatprep.subr.mxu0 0.0
  %907 = vmatpush1.xpose.msra.mxu0 %v868
  %908 = vmatprep.subr.mxu0 0.0
  %909 = vmatpush2.xpose.msra.mxu0 0.0
  %910 = vmatprep.subr.mxu0 0.0
  %911 = vmatpush2.xpose.msra.mxu0 0.0
  %912 = vmatprep.subr.mxu0 0.0
  %913 = vmatpush2.xpose.msra.mxu0 0.0
  %914 = vmatprep.subr.mxu0 0.0
  %915 = vmatpush2.xpose.msra.mxu0 0.0
  %916 = vmatprep.subr.mxu0 0.0
  %917 = vmatpush2.xpose.msra.mxu0 0.0
  %918 = vmatprep.subr.mxu0 0.0
  %919 = vmatpush2.xpose.msra.mxu0 0.0
  %920 = vmatprep.subr.mxu0 0.0
  %921 = vmatpush2.xpose.msra.mxu0 0.0
  %922 = vmatprep.subr.mxu0 0.0
  %923 = vmatpush2.xpose.msra.mxu0 0.0
  %924 = vmatprep.subr.mxu0 0.0
  %925 = vmatpush2.xpose.msra.mxu0 0.0
  %926 = vmatprep.subr.mxu0 0.0
  %927 = vmatpush2.xpose.msra.mxu0 0.0
  %928 = vmatprep.subr.mxu0 0.0
  %929 = vmatpush2.xpose.msra.mxu0 0.0
  %930 = vmatprep.subr.mxu0 0.0
  %931 = vmatpush2.xpose.msra.mxu0 0.0
  %932 = vmatprep.subr.mxu0 0.0
  %933 = vmatpush2.xpose.msra.mxu0 0.0
  %934 = vmatprep.subr.mxu0 0.0
  %935 = vmatpush2.xpose.msra.mxu0 0.0
  %936 = vmatprep.subr.mxu0 0.0
  %937 = vmatpush2.xpose.msra.mxu0 0.0
  %938 = vmatprep.subr.mxu0 0.0
  %939 = vmatpush2.xpose.msra.mxu0 0.0
  %940 = vmatprep.mubr.f32.mxu0 0.0
  %941 = vmatmul.mubr.f32.gmra.mxu0 %v860
  %v942 = vpop.f32.mrf.mxu0
  %v943 = vadd.f32 0.0, %v942
  %v944 = vpop.f32.mrf.mxu0
  %945 = vmatprep.mubr.f32.mxu0 0.0
  %946 = vmatmul.mubr.f32.gmra.mxu0 %v862
  %v947 = vpop.f32.mrf.mxu0
  %v948 = vadd.f32 0.0, %v947
  %v949 = vpop.f32.mrf.mxu0
  %950 = vmatprep.mubr.f32.mxu0 0.0
  %951 = vmatmul.mubr.f32.gmra.mxu0 %v864
  %v952 = vpop.f32.mrf.mxu0
  %v953 = vadd.f32 0.0, %v952
  %v954 = vpop.f32.mrf.mxu0
  %955 = vmatprep.mubr.f32.mxu0 0.0
  %956 = vmatmul.mubr.f32.gmra.mxu0 %v866
  %v957 = vpop.f32.mrf.mxu0
  %v958 = vadd.f32 0.0, %v957
  %v959 = vpop.f32.mrf.mxu0
  %960 = vdwg.mxu0
  %v961 = vmul.f32 %v943, 0.35355338
  %v962 = vmul.f32 %v948, 0.35355338
  %v963 = vmul.f32 %v953, 0.35355338
  %v964 = vmul.f32 %v958, 0.35355338
  %v965 = vadd.f32 %v961, %v565
  %v966 = vadd.f32 %v962, %v566
  %v967 = vadd.f32 %v963, %v567
  %v968 = vadd.f32 %v964, %v568
  %v969 = vsel %vm467, %v965, -inf
  %970 = vmax.xlane.f32.xlu0 %v969
  %v971 = vpop.xlane.xlu0 %970
  %v972 = vsel %vm467, %v966, -inf
  %973 = vmax.xlane.f32.xlu0 %v972
  %v974 = vpop.xlane.xlu0 %973
  %v975 = vsel %vm467, %v967, -inf
  %976 = vmax.xlane.f32.xlu0 %v975
  %v977 = vpop.xlane.xlu0 %976
  %v978 = vsel %vm467, %v968, -inf
  %979 = vmax.xlane.f32.xlu0 %v978
  %v980 = vpop.xlane.xlu0 %979
  %v981 = vsub.f32 %v965, %v971
  %v982 = vsub.f32 %v966, %v974
  %v983 = vsub.f32 %v967, %v977
  %v984 = vsub.f32 %v968, %v980
  %v985 = vmul.f32 %v981, 1.442695
  %v986 = vpow.pop %v985
  %v987 = vmul.f32 %v982, 1.442695
  %v988 = vpow.pop %v987
  %v989 = vmul.f32 %v983, 1.442695
  %v990 = vpow.pop %v989
  %v991 = vmul.f32 %v984, 1.442695
  %v992 = vpow.pop %v991
  %v993 = vsel %vm467, %v986, 0.0
  %994 = vadd.xlane.f32.xlu0 %v993
  %v995 = vpop.xlane.xlu0 %994
  %v996 = vsel %vm467, %v988, 0.0
  %997 = vadd.xlane.f32.xlu0 %v996
  %v998 = vpop.xlane.xlu0 %997
  %v999 = vsel %vm467, %v990, 0.0
  %1000 = vadd.xlane.f32.xlu0 %v999
  %v1001 = vpop.xlane.xlu0 %1000
  %v1002 = vsel %vm467, %v992, 0.0
  %1003 = vadd.xlane.f32.xlu0 %v1002
  %v1004 = vpop.xlane.xlu0 %1003
  %v1005 = vrcp.pop %v995
  %v1006 = vmul.f32 %v986, %v1005
  %v1007 = vrcp.pop %v998
  %v1008 = vmul.f32 %v988, %v1007
  %v1009 = vrcp.pop %v1001
  %v1010 = vmul.f32 %v990, %v1009
  %v1011 = vrcp.pop %v1004
  %v1012 = vmul.f32 %v992, %v1011
  %1013 = vrot.lane.b32.xlu0 %v547, 56
  %v1014 = vpop.permute.xlu0 %1013
  %1015 = vrot.lane.b32.xlu0 %v552, 56
  %v1016 = vpop.permute.xlu0 %1015
  %1017 = vrot.lane.b32.xlu0 %v557, 56
  %v1018 = vpop.permute.xlu0 %1017
  %1019 = vrot.lane.b32.xlu0 %v562, 56
  %v1020 = vpop.permute.xlu0 %1019
  %v1026 = vsel %vm467, %v1006, 0
  %v1029 = vsel %vm467, %v1008, 0
  %v1032 = vsel %vm467, %v1010, 0
  %v1035 = vsel %vm467, %v1012, 0
  %1037 = vmatprep.subr.mxu0 0.0
  %1038 = vmatpush1.msra.mxu0 0.0
  %1039 = vmatprep.subr.mxu0 0.0
  %1040 = vmatpush1.msra.mxu0 0.0
  %1041 = vmatprep.subr.mxu0 0.0
  %1042 = vmatpush1.msra.mxu0 0.0
  %1043 = vmatprep.subr.mxu0 0.0
  %1044 = vmatpush1.msra.mxu0 0.0
  %1045 = vmatprep.subr.mxu0 0.0
  %1046 = vmatpush1.msra.mxu0 0.0
  %1047 = vmatprep.subr.mxu0 0.0
  %1048 = vmatpush1.msra.mxu0 0.0
  %1049 = vmatprep.subr.mxu0 0.0
  %1050 = vmatpush1.msra.mxu0 0.0
  %1051 = vmatprep.subr.mxu0 0.0
  %1052 = vmatpush1.msra.mxu0 0.0
  %1053 = vmatprep.subr.mxu0 0.0
  %1054 = vmatpush1.msra.mxu0 0.0
  %1055 = vmatprep.subr.mxu0 0.0
  %1056 = vmatpush1.msra.mxu0 0.0
  %1057 = vmatprep.subr.mxu0 0.0
  %1058 = vmatpush1.msra.mxu0 0.0
  %1059 = vmatprep.subr.mxu0 0.0
  %1060 = vmatpush1.msra.mxu0 0.0
  %1061 = vmatprep.subr.mxu0 0.0
  %1062 = vmatpush1.msra.mxu0 %v1020
  %1063 = vmatprep.subr.mxu0 0.0
  %1064 = vmatpush1.msra.mxu0 %v1018
  %1065 = vmatprep.subr.mxu0 0.0
  %1066 = vmatpush1.msra.mxu0 %v1016
  %1067 = vmatprep.subr.mxu0 0.0
  %1068 = vmatpush1.msra.mxu0 %v1014
  %1069 = vmatprep.subr.mxu0 0.0
  %1070 = vmatpush2.msra.mxu0 0.0
  %1071 = vmatprep.subr.mxu0 0.0
  %1072 = vmatpush2.msra.mxu0 0.0
  %1073 = vmatprep.subr.mxu0 0.0
  %1074 = vmatpush2.msra.mxu0 0.0
  %1075 = vmatprep.subr.mxu0 0.0
  %1076 = vmatpush2.msra.mxu0 0.0
  %1077 = vmatprep.subr.mxu0 0.0
  %1078 = vmatpush2.msra.mxu0 0.0
  %1079 = vmatprep.subr.mxu0 0.0
  %1080 = vmatpush2.msra.mxu0 0.0
  %1081 = vmatprep.subr.mxu0 0.0
  %1082 = vmatpush2.msra.mxu0 0.0
  %1083 = vmatprep.subr.mxu0 0.0
  %1084 = vmatpush2.msra.mxu0 0.0
  %1085 = vmatprep.subr.mxu0 0.0
  %1086 = vmatpush2.msra.mxu0 0.0
  %1087 = vmatprep.subr.mxu0 0.0
  %1088 = vmatpush2.msra.mxu0 0.0
  %1089 = vmatprep.subr.mxu0 0.0
  %1090 = vmatpush2.msra.mxu0 0.0
  %1091 = vmatprep.subr.mxu0 0.0
  %1092 = vmatpush2.msra.mxu0 0.0
  %1093 = vmatprep.subr.mxu0 0.0
  %1094 = vmatpush2.msra.mxu0 0.0
  %1095 = vmatprep.subr.mxu0 0.0
  %1096 = vmatpush2.msra.mxu0 0.0
  %1097 = vmatprep.subr.mxu0 0.0
  %1098 = vmatpush2.msra.mxu0 0.0
  %1099 = vmatprep.subr.mxu0 0.0
  %1100 = vmatpush2.msra.mxu0 0.0
  %1101 = vmatprep.mubr.f32.mxu0 0.0
  %1102 = vmatmul.mubr.f32.gmra.mxu0 %v1026
  %v1103 = vpop.f32.mrf.mxu0
  %v1104 = vadd.f32 0.0, %v1103
  %v1105 = vpop.f32.mrf.mxu0
  %1106 = vmatprep.mubr.f32.mxu0 0.0
  %1107 = vmatmul.mubr.f32.gmra.mxu0 %v1029
  %v1108 = vpop.f32.mrf.mxu0
  %v1109 = vadd.f32 0.0, %v1108
  %v1110 = vpop.f32.mrf.mxu0
  %1111 = vmatprep.mubr.f32.mxu0 0.0
  %1112 = vmatmul.mubr.f32.gmra.mxu0 %v1032
  %v1113 = vpop.f32.mrf.mxu0
  %v1114 = vadd.f32 0.0, %v1113
  %v1115 = vpop.f32.mrf.mxu0
  %1116 = vmatprep.mubr.f32.mxu0 0.0
  %1117 = vmatmul.mubr.f32.gmra.mxu0 %v1035
  %v1118 = vpop.f32.mrf.mxu0
  %v1119 = vadd.f32 0.0, %v1118
  %v1120 = vpop.f32.mrf.mxu0
  %1121 = vdwg.mxu0
  %1122 = vrot.lane.b32.xlu0 %v547, 112
  %v1123 = vpop.permute.xlu0 %1122
  %1124 = vrot.lane.b32.xlu0 %v552, 112
  %v1125 = vpop.permute.xlu0 %1124
  %1126 = vrot.lane.b32.xlu0 %v557, 112
  %v1127 = vpop.permute.xlu0 %1126
  %1128 = vrot.lane.b32.xlu0 %v562, 112
  %v1129 = vpop.permute.xlu0 %1128
  %1130 = vrot.lane.b32.xlu0 %v547, 80
  %v1131 = vpop.permute.xlu0 %1130
  %1132 = vrot.lane.b32.xlu0 %v552, 80
  %v1133 = vpop.permute.xlu0 %1132
  %1134 = vrot.lane.b32.xlu0 %v557, 80
  %v1135 = vpop.permute.xlu0 %1134
  %1136 = vrot.lane.b32.xlu0 %v562, 80
  %v1137 = vpop.permute.xlu0 %1136
  %v1138 = vsel %vm581, %v1123, 0
  %v1140 = vsel %vm581, %v1125, 0
  %v1142 = vsel %vm581, %v1127, 0
  %v1144 = vsel %vm581, %v1129, 0
  %v1146 = vsel %vm581, %v1131, 0
  %v1148 = vsel %vm581, %v1133, 0
  %v1150 = vsel %vm581, %v1135, 0
  %v1152 = vsel %vm581, %v1137, 0
  %1154 = vmatprep.subr.mxu0 0.0
  %1155 = vmatpush1.xpose.msra.mxu0 0.0
  %1156 = vmatprep.subr.mxu0 0.0
  %1157 = vmatpush1.xpose.msra.mxu0 0.0
  %1158 = vmatprep.subr.mxu0 0.0
  %1159 = vmatpush1.xpose.msra.mxu0 0.0
  %1160 = vmatprep.subr.mxu0 0.0
  %1161 = vmatpush1.xpose.msra.mxu0 0.0
  %1162 = vmatprep.subr.mxu0 0.0
  %1163 = vmatpush1.xpose.msra.mxu0 0.0
  %1164 = vmatprep.subr.mxu0 0.0
  %1165 = vmatpush1.xpose.msra.mxu0 0.0
  %1166 = vmatprep.subr.mxu0 0.0
  %1167 = vmatpush1.xpose.msra.mxu0 0.0
  %1168 = vmatprep.subr.mxu0 0.0
  %1169 = vmatpush1.xpose.msra.mxu0 0.0
  %1170 = vmatprep.subr.mxu0 0.0
  %1171 = vmatpush1.xpose.msra.mxu0 0.0
  %1172 = vmatprep.subr.mxu0 0.0
  %1173 = vmatpush1.xpose.msra.mxu0 0.0
  %1174 = vmatprep.subr.mxu0 0.0
  %1175 = vmatpush1.xpose.msra.mxu0 0.0
  %1176 = vmatprep.subr.mxu0 0.0
  %1177 = vmatpush1.xpose.msra.mxu0 0.0
  %1178 = vmatprep.subr.mxu0 0.0
  %1179 = vmatpush1.xpose.msra.mxu0 %v1152
  %1180 = vmatprep.subr.mxu0 0.0
  %1181 = vmatpush1.xpose.msra.mxu0 %v1150
  %1182 = vmatprep.subr.mxu0 0.0
  %1183 = vmatpush1.xpose.msra.mxu0 %v1148
  %1184 = vmatprep.subr.mxu0 0.0
  %1185 = vmatpush1.xpose.msra.mxu0 %v1146
  %1186 = vmatprep.subr.mxu0 0.0
  %1187 = vmatpush2.xpose.msra.mxu0 0.0
  %1188 = vmatprep.subr.mxu0 0.0
  %1189 = vmatpush2.xpose.msra.mxu0 0.0
  %1190 = vmatprep.subr.mxu0 0.0
  %1191 = vmatpush2.xpose.msra.mxu0 0.0
  %1192 = vmatprep.subr.mxu0 0.0
  %1193 = vmatpush2.xpose.msra.mxu0 0.0
  %1194 = vmatprep.subr.mxu0 0.0
  %1195 = vmatpush2.xpose.msra.mxu0 0.0
  %1196 = vmatprep.subr.mxu0 0.0
  %1197 = vmatpush2.xpose.msra.mxu0 0.0
  %1198 = vmatprep.subr.mxu0 0.0
  %1199 = vmatpush2.xpose.msra.mxu0 0.0
  %1200 = vmatprep.subr.mxu0 0.0
  %1201 = vmatpush2.xpose.msra.mxu0 0.0
  %1202 = vmatprep.subr.mxu0 0.0
  %1203 = vmatpush2.xpose.msra.mxu0 0.0
  %1204 = vmatprep.subr.mxu0 0.0
  %1205 = vmatpush2.xpose.msra.mxu0 0.0
  %1206 = vmatprep.subr.mxu0 0.0
  %1207 = vmatpush2.xpose.msra.mxu0 0.0
  %1208 = vmatprep.subr.mxu0 0.0
  %1209 = vmatpush2.xpose.msra.mxu0 0.0
  %1210 = vmatprep.subr.mxu0 0.0
  %1211 = vmatpush2.xpose.msra.mxu0 0.0
  %1212 = vmatprep.subr.mxu0 0.0
  %1213 = vmatpush2.xpose.msra.mxu0 0.0
  %1214 = vmatprep.subr.mxu0 0.0
  %1215 = vmatpush2.xpose.msra.mxu0 0.0
  %1216 = vmatprep.subr.mxu0 0.0
  %1217 = vmatpush2.xpose.msra.mxu0 0.0
  %1218 = vmatprep.mubr.f32.mxu0 0.0
  %1219 = vmatmul.mubr.f32.gmra.mxu0 %v1138
  %v1220 = vpop.f32.mrf.mxu0
  %v1221 = vadd.f32 0.0, %v1220
  %v1222 = vpop.f32.mrf.mxu0
  %1223 = vmatprep.mubr.f32.mxu0 0.0
  %1224 = vmatmul.mubr.f32.gmra.mxu0 %v1140
  %v1225 = vpop.f32.mrf.mxu0
  %v1226 = vadd.f32 0.0, %v1225
  %v1227 = vpop.f32.mrf.mxu0
  %1228 = vmatprep.mubr.f32.mxu0 0.0
  %1229 = vmatmul.mubr.f32.gmra.mxu0 %v1142
  %v1230 = vpop.f32.mrf.mxu0
  %v1231 = vadd.f32 0.0, %v1230
  %v1232 = vpop.f32.mrf.mxu0
  %1233 = vmatprep.mubr.f32.mxu0 0.0
  %1234 = vmatmul.mubr.f32.gmra.mxu0 %v1144
  %v1235 = vpop.f32.mrf.mxu0
  %v1236 = vadd.f32 0.0, %v1235
  %v1237 = vpop.f32.mrf.mxu0
  %1238 = vdwg.mxu0
  %v1239 = vmul.f32 %v1221, 0.35355338
  %v1240 = vmul.f32 %v1226, 0.35355338
  %v1241 = vmul.f32 %v1231, 0.35355338
  %v1242 = vmul.f32 %v1236, 0.35355338
  %v1243 = vadd.f32 %v1239, %v565
  %v1244 = vadd.f32 %v1240, %v566
  %v1245 = vadd.f32 %v1241, %v567
  %v1246 = vadd.f32 %v1242, %v568
  %v1247 = vsel %vm467, %v1243, -inf
  %1248 = vmax.xlane.f32.xlu0 %v1247
  %v1249 = vpop.xlane.xlu0 %1248
  %v1250 = vsel %vm467, %v1244, -inf
  %1251 = vmax.xlane.f32.xlu0 %v1250
  %v1252 = vpop.xlane.xlu0 %1251
  %v1253 = vsel %vm467, %v1245, -inf
  %1254 = vmax.xlane.f32.xlu0 %v1253
  %v1255 = vpop.xlane.xlu0 %1254
  %v1256 = vsel %vm467, %v1246, -inf
  %1257 = vmax.xlane.f32.xlu0 %v1256
  %v1258 = vpop.xlane.xlu0 %1257
  %v1259 = vsub.f32 %v1243, %v1249
  %v1260 = vsub.f32 %v1244, %v1252
  %v1261 = vsub.f32 %v1245, %v1255
  %v1262 = vsub.f32 %v1246, %v1258
  %v1263 = vmul.f32 %v1259, 1.442695
  %v1264 = vpow.pop %v1263
  %v1265 = vmul.f32 %v1260, 1.442695
  %v1266 = vpow.pop %v1265
  %v1267 = vmul.f32 %v1261, 1.442695
  %v1268 = vpow.pop %v1267
  %v1269 = vmul.f32 %v1262, 1.442695
  %v1270 = vpow.pop %v1269
  %v1271 = vsel %vm467, %v1264, 0.0
  %1272 = vadd.xlane.f32.xlu0 %v1271
  %v1273 = vpop.xlane.xlu0 %1272
  %v1274 = vsel %vm467, %v1266, 0.0
  %1275 = vadd.xlane.f32.xlu0 %v1274
  %v1276 = vpop.xlane.xlu0 %1275
  %v1277 = vsel %vm467, %v1268, 0.0
  %1278 = vadd.xlane.f32.xlu0 %v1277
  %v1279 = vpop.xlane.xlu0 %1278
  %v1280 = vsel %vm467, %v1270, 0.0
  %1281 = vadd.xlane.f32.xlu0 %v1280
  %v1282 = vpop.xlane.xlu0 %1281
  %v1283 = vrcp.pop %v1273
  %v1284 = vmul.f32 %v1264, %v1283
  %v1285 = vrcp.pop %v1276
  %v1286 = vmul.f32 %v1266, %v1285
  %v1287 = vrcp.pop %v1279
  %v1288 = vmul.f32 %v1268, %v1287
  %v1289 = vrcp.pop %v1282
  %v1290 = vmul.f32 %v1270, %v1289
  %1291 = vrot.lane.b32.xlu0 %v547, 48
  %v1292 = vpop.permute.xlu0 %1291
  %1293 = vrot.lane.b32.xlu0 %v552, 48
  %v1294 = vpop.permute.xlu0 %1293
  %1295 = vrot.lane.b32.xlu0 %v557, 48
  %v1296 = vpop.permute.xlu0 %1295
  %1297 = vrot.lane.b32.xlu0 %v562, 48
  %v1298 = vpop.permute.xlu0 %1297
  %v1304 = vsel %vm467, %v1284, 0
  %v1307 = vsel %vm467, %v1286, 0
  %v1310 = vsel %vm467, %v1288, 0
  %v1313 = vsel %vm467, %v1290, 0
  %1315 = vmatprep.subr.mxu0 0.0
  %1316 = vmatpush1.msra.mxu0 0.0
  %1317 = vmatprep.subr.mxu0 0.0
  %1318 = vmatpush1.msra.mxu0 0.0
  %1319 = vmatprep.subr.mxu0 0.0
  %1320 = vmatpush1.msra.mxu0 0.0
  %1321 = vmatprep.subr.mxu0 0.0
  %1322 = vmatpush1.msra.mxu0 0.0
  %1323 = vmatprep.subr.mxu0 0.0
  %1324 = vmatpush1.msra.mxu0 0.0
  %1325 = vmatprep.subr.mxu0 0.0
  %1326 = vmatpush1.msra.mxu0 0.0
  %1327 = vmatprep.subr.mxu0 0.0
  %1328 = vmatpush1.msra.mxu0 0.0
  %1329 = vmatprep.subr.mxu0 0.0
  %1330 = vmatpush1.msra.mxu0 0.0
  %1331 = vmatprep.subr.mxu0 0.0
  %1332 = vmatpush1.msra.mxu0 0.0
  %1333 = vmatprep.subr.mxu0 0.0
  %1334 = vmatpush1.msra.mxu0 0.0
  %1335 = vmatprep.subr.mxu0 0.0
  %1336 = vmatpush1.msra.mxu0 0.0
  %1337 = vmatprep.subr.mxu0 0.0
  %1338 = vmatpush1.msra.mxu0 0.0
  %1339 = vmatprep.subr.mxu0 0.0
  %1340 = vmatpush1.msra.mxu0 %v1298
  %1341 = vmatprep.subr.mxu0 0.0
  %1342 = vmatpush1.msra.mxu0 %v1296
  %1343 = vmatprep.subr.mxu0 0.0
  %1344 = vmatpush1.msra.mxu0 %v1294
  %1345 = vmatprep.subr.mxu0 0.0
  %1346 = vmatpush1.msra.mxu0 %v1292
  %1347 = vmatprep.subr.mxu0 0.0
  %1348 = vmatpush2.msra.mxu0 0.0
  %1349 = vmatprep.subr.mxu0 0.0
  %1350 = vmatpush2.msra.mxu0 0.0
  %1351 = vmatprep.subr.mxu0 0.0
  %1352 = vmatpush2.msra.mxu0 0.0
  %1353 = vmatprep.subr.mxu0 0.0
  %1354 = vmatpush2.msra.mxu0 0.0
  %1355 = vmatprep.subr.mxu0 0.0
  %1356 = vmatpush2.msra.mxu0 0.0
  %1357 = vmatprep.subr.mxu0 0.0
  %1358 = vmatpush2.msra.mxu0 0.0
  %1359 = vmatprep.subr.mxu0 0.0
  %1360 = vmatpush2.msra.mxu0 0.0
  %1361 = vmatprep.subr.mxu0 0.0
  %1362 = vmatpush2.msra.mxu0 0.0
  %1363 = vmatprep.subr.mxu0 0.0
  %1364 = vmatpush2.msra.mxu0 0.0
  %1365 = vmatprep.subr.mxu0 0.0
  %1366 = vmatpush2.msra.mxu0 0.0
  %1367 = vmatprep.subr.mxu0 0.0
  %1368 = vmatpush2.msra.mxu0 0.0
  %1369 = vmatprep.subr.mxu0 0.0
  %1370 = vmatpush2.msra.mxu0 0.0
  %1371 = vmatprep.subr.mxu0 0.0
  %1372 = vmatpush2.msra.mxu0 0.0
  %1373 = vmatprep.subr.mxu0 0.0
  %1374 = vmatpush2.msra.mxu0 0.0
  %1375 = vmatprep.subr.mxu0 0.0
  %1376 = vmatpush2.msra.mxu0 0.0
  %1377 = vmatprep.subr.mxu0 0.0
  %1378 = vmatpush2.msra.mxu0 0.0
  %1379 = vmatprep.mubr.f32.mxu0 0.0
  %1380 = vmatmul.mubr.f32.gmra.mxu0 %v1304
  %v1381 = vpop.f32.mrf.mxu0
  %v1382 = vadd.f32 0.0, %v1381
  %v1383 = vpop.f32.mrf.mxu0
  %1384 = vmatprep.mubr.f32.mxu0 0.0
  %1385 = vmatmul.mubr.f32.gmra.mxu0 %v1307
  %v1386 = vpop.f32.mrf.mxu0
  %v1387 = vadd.f32 0.0, %v1386
  %v1388 = vpop.f32.mrf.mxu0
  %1389 = vmatprep.mubr.f32.mxu0 0.0
  %1390 = vmatmul.mubr.f32.gmra.mxu0 %v1310
  %v1391 = vpop.f32.mrf.mxu0
  %v1392 = vadd.f32 0.0, %v1391
  %v1393 = vpop.f32.mrf.mxu0
  %1394 = vmatprep.mubr.f32.mxu0 0.0
  %1395 = vmatmul.mubr.f32.gmra.mxu0 %v1313
  %v1396 = vpop.f32.mrf.mxu0
  %v1397 = vadd.f32 0.0, %v1396
  %v1398 = vpop.f32.mrf.mxu0
  %1399 = vdwg.mxu0
  %1400 = vrot.lane.b32.xlu0 %v547, 104
  %v1401 = vpop.permute.xlu0 %1400
  %1402 = vrot.lane.b32.xlu0 %v552, 104
  %v1403 = vpop.permute.xlu0 %1402
  %1404 = vrot.lane.b32.xlu0 %v557, 104
  %v1405 = vpop.permute.xlu0 %1404
  %1406 = vrot.lane.b32.xlu0 %v562, 104
  %v1407 = vpop.permute.xlu0 %1406
  %1408 = vrot.lane.b32.xlu0 %v547, 72
  %v1409 = vpop.permute.xlu0 %1408
  %1410 = vrot.lane.b32.xlu0 %v552, 72
  %v1411 = vpop.permute.xlu0 %1410
  %1412 = vrot.lane.b32.xlu0 %v557, 72
  %v1413 = vpop.permute.xlu0 %1412
  %1414 = vrot.lane.b32.xlu0 %v562, 72
  %v1415 = vpop.permute.xlu0 %1414
  %v1416 = vsel %vm581, %v1401, 0
  %v1418 = vsel %vm581, %v1403, 0
  %v1420 = vsel %vm581, %v1405, 0
  %v1422 = vsel %vm581, %v1407, 0
  %v1424 = vsel %vm581, %v1409, 0
  %v1426 = vsel %vm581, %v1411, 0
  %v1428 = vsel %vm581, %v1413, 0
  %v1430 = vsel %vm581, %v1415, 0
  %1432 = vmatprep.subr.mxu0 0.0
  %1433 = vmatpush1.xpose.msra.mxu0 0.0
  %1434 = vmatprep.subr.mxu0 0.0
  %1435 = vmatpush1.xpose.msra.mxu0 0.0
  %1436 = vmatprep.subr.mxu0 0.0
  %1437 = vmatpush1.xpose.msra.mxu0 0.0
  %1438 = vmatprep.subr.mxu0 0.0
  %1439 = vmatpush1.xpose.msra.mxu0 0.0
  %1440 = vmatprep.subr.mxu0 0.0
  %1441 = vmatpush1.xpose.msra.mxu0 0.0
  %1442 = vmatprep.subr.mxu0 0.0
  %1443 = vmatpush1.xpose.msra.mxu0 0.0
  %1444 = vmatprep.subr.mxu0 0.0
  %1445 = vmatpush1.xpose.msra.mxu0 0.0
  %1446 = vmatprep.subr.mxu0 0.0
  %1447 = vmatpush1.xpose.msra.mxu0 0.0
  %1448 = vmatprep.subr.mxu0 0.0
  %1449 = vmatpush1.xpose.msra.mxu0 0.0
  %1450 = vmatprep.subr.mxu0 0.0
  %1451 = vmatpush1.xpose.msra.mxu0 0.0
  %1452 = vmatprep.subr.mxu0 0.0
  %1453 = vmatpush1.xpose.msra.mxu0 0.0
  %1454 = vmatprep.subr.mxu0 0.0
  %1455 = vmatpush1.xpose.msra.mxu0 0.0
  %1456 = vmatprep.subr.mxu0 0.0
  %1457 = vmatpush1.xpose.msra.mxu0 %v1430
  %1458 = vmatprep.subr.mxu0 0.0
  %1459 = vmatpush1.xpose.msra.mxu0 %v1428
  %1460 = vmatprep.subr.mxu0 0.0
  %1461 = vmatpush1.xpose.msra.mxu0 %v1426
  %1462 = vmatprep.subr.mxu0 0.0
  %1463 = vmatpush1.xpose.msra.mxu0 %v1424
  %1464 = vmatprep.subr.mxu0 0.0
  %1465 = vmatpush2.xpose.msra.mxu0 0.0
  %1466 = vmatprep.subr.mxu0 0.0
  %1467 = vmatpush2.xpose.msra.mxu0 0.0
  %1468 = vmatprep.subr.mxu0 0.0
  %1469 = vmatpush2.xpose.msra.mxu0 0.0
  %1470 = vmatprep.subr.mxu0 0.0
  %1471 = vmatpush2.xpose.msra.mxu0 0.0
  %1472 = vmatprep.subr.mxu0 0.0
  %1473 = vmatpush2.xpose.msra.mxu0 0.0
  %1474 = vmatprep.subr.mxu0 0.0
  %1475 = vmatpush2.xpose.msra.mxu0 0.0
  %1476 = vmatprep.subr.mxu0 0.0
  %1477 = vmatpush2.xpose.msra.mxu0 0.0
  %1478 = vmatprep.subr.mxu0 0.0
  %1479 = vmatpush2.xpose.msra.mxu0 0.0
  %1480 = vmatprep.subr.mxu0 0.0
  %1481 = vmatpush2.xpose.msra.mxu0 0.0
  %1482 = vmatprep.subr.mxu0 0.0
  %1483 = vmatpush2.xpose.msra.mxu0 0.0
  %1484 = vmatprep.subr.mxu0 0.0
  %1485 = vmatpush2.xpose.msra.mxu0 0.0
  %1486 = vmatprep.subr.mxu0 0.0
  %1487 = vmatpush2.xpose.msra.mxu0 0.0
  %1488 = vmatprep.subr.mxu0 0.0
  %1489 = vmatpush2.xpose.msra.mxu0 0.0
  %1490 = vmatprep.subr.mxu0 0.0
  %1491 = vmatpush2.xpose.msra.mxu0 0.0
  %1492 = vmatprep.subr.mxu0 0.0
  %1493 = vmatpush2.xpose.msra.mxu0 0.0
  %1494 = vmatprep.subr.mxu0 0.0
  %1495 = vmatpush2.xpose.msra.mxu0 0.0
  %1496 = vmatprep.mubr.f32.mxu0 0.0
  %1497 = vmatmul.mubr.f32.gmra.mxu0 %v1416
  %v1498 = vpop.f32.mrf.mxu0
  %v1499 = vadd.f32 0.0, %v1498
  %v1500 = vpop.f32.mrf.mxu0
  %1501 = vmatprep.mubr.f32.mxu0 0.0
  %1502 = vmatmul.mubr.f32.gmra.mxu0 %v1418
  %v1503 = vpop.f32.mrf.mxu0
  %v1504 = vadd.f32 0.0, %v1503
  %v1505 = vpop.f32.mrf.mxu0
  %1506 = vmatprep.mubr.f32.mxu0 0.0
  %1507 = vmatmul.mubr.f32.gmra.mxu0 %v1420
  %v1508 = vpop.f32.mrf.mxu0
  %v1509 = vadd.f32 0.0, %v1508
  %v1510 = vpop.f32.mrf.mxu0
  %1511 = vmatprep.mubr.f32.mxu0 0.0
  %1512 = vmatmul.mubr.f32.gmra.mxu0 %v1422
  %v1513 = vpop.f32.mrf.mxu0
  %v1514 = vadd.f32 0.0, %v1513
  %v1515 = vpop.f32.mrf.mxu0
  %1516 = vdwg.mxu0
  %v1517 = vmul.f32 %v1499, 0.35355338
  %v1518 = vmul.f32 %v1504, 0.35355338
  %v1519 = vmul.f32 %v1509, 0.35355338
  %v1520 = vmul.f32 %v1514, 0.35355338
  %v1521 = vadd.f32 %v1517, %v565
  %v1522 = vadd.f32 %v1518, %v566
  %v1523 = vadd.f32 %v1519, %v567
  %v1524 = vadd.f32 %v1520, %v568
  %v1525 = vsel %vm467, %v1521, -inf
  %1526 = vmax.xlane.f32.xlu0 %v1525
  %v1527 = vpop.xlane.xlu0 %1526
  %v1528 = vsel %vm467, %v1522, -inf
  %1529 = vmax.xlane.f32.xlu0 %v1528
  %v1530 = vpop.xlane.xlu0 %1529
  %v1531 = vsel %vm467, %v1523, -inf
  %1532 = vmax.xlane.f32.xlu0 %v1531
  %v1533 = vpop.xlane.xlu0 %1532
  %v1534 = vsel %vm467, %v1524, -inf
  %1535 = vmax.xlane.f32.xlu0 %v1534
  %v1536 = vpop.xlane.xlu0 %1535
  %v1537 = vsub.f32 %v1521, %v1527
  %v1538 = vsub.f32 %v1522, %v1530
  %v1539 = vsub.f32 %v1523, %v1533
  %v1540 = vsub.f32 %v1524, %v1536
  %v1541 = vmul.f32 %v1537, 1.442695
  %v1542 = vpow.pop %v1541
  %v1543 = vmul.f32 %v1538, 1.442695
  %v1544 = vpow.pop %v1543
  %v1545 = vmul.f32 %v1539, 1.442695
  %v1546 = vpow.pop %v1545
  %v1547 = vmul.f32 %v1540, 1.442695
  %v1548 = vpow.pop %v1547
  %v1549 = vsel %vm467, %v1542, 0.0
  %1550 = vadd.xlane.f32.xlu0 %v1549
  %v1551 = vpop.xlane.xlu0 %1550
  %v1552 = vsel %vm467, %v1544, 0.0
  %1553 = vadd.xlane.f32.xlu0 %v1552
  %v1554 = vpop.xlane.xlu0 %1553
  %v1555 = vsel %vm467, %v1546, 0.0
  %1556 = vadd.xlane.f32.xlu0 %v1555
  %v1557 = vpop.xlane.xlu0 %1556
  %v1558 = vsel %vm467, %v1548, 0.0
  %1559 = vadd.xlane.f32.xlu0 %v1558
  %v1560 = vpop.xlane.xlu0 %1559
  %v1561 = vrcp.pop %v1551
  %v1562 = vmul.f32 %v1542, %v1561
  %v1563 = vrcp.pop %v1554
  %v1564 = vmul.f32 %v1544, %v1563
  %v1565 = vrcp.pop %v1557
  %v1566 = vmul.f32 %v1546, %v1565
  %v1567 = vrcp.pop %v1560
  %v1568 = vmul.f32 %v1548, %v1567
  %1569 = vrot.lane.b32.xlu0 %v547, 40
  %v1570 = vpop.permute.xlu0 %1569
  %1571 = vrot.lane.b32.xlu0 %v552, 40
  %v1572 = vpop.permute.xlu0 %1571
  %1573 = vrot.lane.b32.xlu0 %v557, 40
  %v1574 = vpop.permute.xlu0 %1573
  %1575 = vrot.lane.b32.xlu0 %v562, 40
  %v1576 = vpop.permute.xlu0 %1575
  %v1582 = vsel %vm467, %v1562, 0
  %v1585 = vsel %vm467, %v1564, 0
  %v1588 = vsel %vm467, %v1566, 0
  %v1591 = vsel %vm467, %v1568, 0
  %1593 = vmatprep.subr.mxu0 0.0
  %1594 = vmatpush1.msra.mxu0 0.0
  %1595 = vmatprep.subr.mxu0 0.0
  %1596 = vmatpush1.msra.mxu0 0.0
  %1597 = vmatprep.subr.mxu0 0.0
  %1598 = vmatpush1.msra.mxu0 0.0
  %1599 = vmatprep.subr.mxu0 0.0
  %1600 = vmatpush1.msra.mxu0 0.0
  %1601 = vmatprep.subr.mxu0 0.0
  %1602 = vmatpush1.msra.mxu0 0.0
  %1603 = vmatprep.subr.mxu0 0.0
  %1604 = vmatpush1.msra.mxu0 0.0
  %1605 = vmatprep.subr.mxu0 0.0
  %1606 = vmatpush1.msra.mxu0 0.0
  %1607 = vmatprep.subr.mxu0 0.0
  %1608 = vmatpush1.msra.mxu0 0.0
  %1609 = vmatprep.subr.mxu0 0.0
  %1610 = vmatpush1.msra.mxu0 0.0
  %1611 = vmatprep.subr.mxu0 0.0
  %1612 = vmatpush1.msra.mxu0 0.0
  %1613 = vmatprep.subr.mxu0 0.0
  %1614 = vmatpush1.msra.mxu0 0.0
  %1615 = vmatprep.subr.mxu0 0.0
  %1616 = vmatpush1.msra.mxu0 0.0
  %1617 = vmatprep.subr.mxu0 0.0
  %1618 = vmatpush1.msra.mxu0 %v1576
  %1619 = vmatprep.subr.mxu0 0.0
  %1620 = vmatpush1.msra.mxu0 %v1574
  %1621 = vmatprep.subr.mxu0 0.0
  %1622 = vmatpush1.msra.mxu0 %v1572
  %1623 = vmatprep.subr.mxu0 0.0
  %1624 = vmatpush1.msra.mxu0 %v1570
  %1625 = vmatprep.subr.mxu0 0.0
  %1626 = vmatpush2.msra.mxu0 0.0
  %1627 = vmatprep.subr.mxu0 0.0
  %1628 = vmatpush2.msra.mxu0 0.0
  %1629 = vmatprep.subr.mxu0 0.0
  %1630 = vmatpush2.msra.mxu0 0.0
  %1631 = vmatprep.subr.mxu0 0.0
  %1632 = vmatpush2.msra.mxu0 0.0
  %1633 = vmatprep.subr.mxu0 0.0
  %1634 = vmatpush2.msra.mxu0 0.0
  %1635 = vmatprep.subr.mxu0 0.0
  %1636 = vmatpush2.msra.mxu0 0.0
  %1637 = vmatprep.subr.mxu0 0.0
  %1638 = vmatpush2.msra.mxu0 0.0
  %1639 = vmatprep.subr.mxu0 0.0
  %1640 = vmatpush2.msra.mxu0 0.0
  %1641 = vmatprep.subr.mxu0 0.0
  %1642 = vmatpush2.msra.mxu0 0.0
  %1643 = vmatprep.subr.mxu0 0.0
  %1644 = vmatpush2.msra.mxu0 0.0
  %1645 = vmatprep.subr.mxu0 0.0
  %1646 = vmatpush2.msra.mxu0 0.0
  %1647 = vmatprep.subr.mxu0 0.0
  %1648 = vmatpush2.msra.mxu0 0.0
  %1649 = vmatprep.subr.mxu0 0.0
  %1650 = vmatpush2.msra.mxu0 0.0
  %1651 = vmatprep.subr.mxu0 0.0
  %1652 = vmatpush2.msra.mxu0 0.0
  %1653 = vmatprep.subr.mxu0 0.0
  %1654 = vmatpush2.msra.mxu0 0.0
  %1655 = vmatprep.subr.mxu0 0.0
  %1656 = vmatpush2.msra.mxu0 0.0
  %1657 = vmatprep.mubr.f32.mxu0 0.0
  %1658 = vmatmul.mubr.f32.gmra.mxu0 %v1582
  %v1659 = vpop.f32.mrf.mxu0
  %v1660 = vadd.f32 0.0, %v1659
  %v1661 = vpop.f32.mrf.mxu0
  %1662 = vmatprep.mubr.f32.mxu0 0.0
  %1663 = vmatmul.mubr.f32.gmra.mxu0 %v1585
  %v1664 = vpop.f32.mrf.mxu0
  %v1665 = vadd.f32 0.0, %v1664
  %v1666 = vpop.f32.mrf.mxu0
  %1667 = vmatprep.mubr.f32.mxu0 0.0
  %1668 = vmatmul.mubr.f32.gmra.mxu0 %v1588
  %v1669 = vpop.f32.mrf.mxu0
  %v1670 = vadd.f32 0.0, %v1669
  %v1671 = vpop.f32.mrf.mxu0
  %1672 = vmatprep.mubr.f32.mxu0 0.0
  %1673 = vmatmul.mubr.f32.gmra.mxu0 %v1591
  %v1674 = vpop.f32.mrf.mxu0
  %v1675 = vadd.f32 0.0, %v1674
  %v1676 = vpop.f32.mrf.mxu0
  %1677 = vdwg.mxu0
  %1682 = vrot.lane.b32.xlu0 %v1104, 8
  %v1683 = vpop.permute.xlu0 %1682
  %1684 = vrot.lane.b32.xlu0 %v1109, 8
  %v1685 = vpop.permute.xlu0 %1684
  %1686 = vrot.lane.b32.xlu0 %v1114, 8
  %v1687 = vpop.permute.xlu0 %1686
  %1688 = vrot.lane.b32.xlu0 %v1119, 8
  %v1689 = vpop.permute.xlu0 %1688
  %1698 = vrot.lane.b32.xlu0 %v1382, 16
  %v1699 = vpop.permute.xlu0 %1698
  %1700 = vrot.lane.b32.xlu0 %v1387, 16
  %v1701 = vpop.permute.xlu0 %1700
  %1702 = vrot.lane.b32.xlu0 %v1392, 16
  %v1703 = vpop.permute.xlu0 %1702
  %1704 = vrot.lane.b32.xlu0 %v1397, 16
  %v1705 = vpop.permute.xlu0 %1704
  %1714 = vrot.lane.b32.xlu0 %v1660, 24
  %v1715 = vpop.permute.xlu0 %1714
  %1716 = vrot.lane.b32.xlu0 %v1665, 24
  %v1717 = vpop.permute.xlu0 %1716
  %1718 = vrot.lane.b32.xlu0 %v1670, 24
  %v1719 = vpop.permute.xlu0 %1718
  %1720 = vrot.lane.b32.xlu0 %v1675, 24
  %v1721 = vpop.permute.xlu0 %1720
  %v1726 = vsel %vm581, %v826, %v1683
  %v1727 = vsel %vm581, %v831, %v1685
  %v1728 = vsel %vm581, %v836, %v1687
  %v1729 = vsel %vm581, %v841, %v1689
  %v1730 = vsel %vm44, %v1726, %v1699
  %v1731 = vsel %vm44, %v1727, %v1701
  %v1732 = vsel %vm44, %v1728, %v1703
  %v1733 = vsel %vm44, %v1729, %v1705
  %vm1734 = vcmask 195584
  %v1735 = vsel %vm1734, %v1730, %v1715
  %v1736 = vsel %vm1734, %v1731, %v1717
  %v1737 = vsel %vm1734, %v1732, %v1719
  %v1738 = vsel %vm1734, %v1733, %v1721
  %v1739 = vld [vmem:[%s1 + $0xa8] sm:$0xff]
  %v1740 = vld [vmem:[%s1 + $0xb0] sm:$0xff]
  %v1741 = vld [vmem:[%s1 + $0xb8] sm:$0xff]
  %v1742 = vld [vmem:[%s1 + $0xc0] sm:$0xff]
  %v1743 = vld [vmem:[%s1 + $0xc8] sm:$0x1]
  %v1744 = vlaneseq
  %v1745 = vshrl.u32 %v1744, 7
  %v1746 = vsub.s32 0, %v1745
  %v1747 = vrot.slane %v1743, %v1746
  %v1749 = vsel %vm467, %v1735, 0
  %v1752 = vsel %vm467, %v1736, 0
  %v1755 = vsel %vm467, %v1737, 0
  %v1758 = vsel %vm467, %v1738, 0
  %1760 = vmatprep.subr.mxu0 0.0
  %1761 = vmatpush1.msra.mxu0 0.0
  %1762 = vmatprep.subr.mxu0 0.0
  %1763 = vmatpush1.msra.mxu0 0.0
  %1764 = vmatprep.subr.mxu0 0.0
  %1765 = vmatpush1.msra.mxu0 0.0
  %1766 = vmatprep.subr.mxu0 0.0
  %1767 = vmatpush1.msra.mxu0 0.0
  %1768 = vmatprep.subr.mxu0 0.0
  %1769 = vmatpush1.msra.mxu0 0.0
  %1770 = vmatprep.subr.mxu0 0.0
  %1771 = vmatpush1.msra.mxu0 0.0
  %1772 = vmatprep.subr.mxu0 0.0
  %1773 = vmatpush1.msra.mxu0 0.0
  %1774 = vmatprep.subr.mxu0 0.0
  %1775 = vmatpush1.msra.mxu0 0.0
  %1776 = vmatprep.subr.mxu0 0.0
  %1777 = vmatpush1.msra.mxu0 0.0
  %1778 = vmatprep.subr.mxu0 0.0
  %1779 = vmatpush1.msra.mxu0 0.0
  %1780 = vmatprep.subr.mxu0 0.0
  %1781 = vmatpush1.msra.mxu0 0.0
  %1782 = vmatprep.subr.mxu0 0.0
  %1783 = vmatpush1.msra.mxu0 0.0
  %1784 = vmatprep.subr.mxu0 0.0
  %1785 = vmatpush1.msra.mxu0 %v1742
  %1786 = vmatprep.subr.mxu0 0.0
  %1787 = vmatpush1.msra.mxu0 %v1741
  %1788 = vmatprep.subr.mxu0 0.0
  %1789 = vmatpush1.msra.mxu0 %v1740
  %1790 = vmatprep.subr.mxu0 0.0
  %1791 = vmatpush1.msra.mxu0 %v1739
  %1792 = vmatprep.subr.mxu0 0.0
  %1793 = vmatpush2.msra.mxu0 0.0
  %1794 = vmatprep.subr.mxu0 0.0
  %1795 = vmatpush2.msra.mxu0 0.0
  %1796 = vmatprep.subr.mxu0 0.0
  %1797 = vmatpush2.msra.mxu0 0.0
  %1798 = vmatprep.subr.mxu0 0.0
  %1799 = vmatpush2.msra.mxu0 0.0
  %1800 = vmatprep.subr.mxu0 0.0
  %1801 = vmatpush2.msra.mxu0 0.0
  %1802 = vmatprep.subr.mxu0 0.0
  %1803 = vmatpush2.msra.mxu0 0.0
  %1804 = vmatprep.subr.mxu0 0.0
  %1805 = vmatpush2.msra.mxu0 0.0
  %1806 = vmatprep.subr.mxu0 0.0
  %1807 = vmatpush2.msra.mxu0 0.0
  %1808 = vmatprep.subr.mxu0 0.0
  %1809 = vmatpush2.msra.mxu0 0.0
  %1810 = vmatprep.subr.mxu0 0.0
  %1811 = vmatpush2.msra.mxu0 0.0
  %1812 = vmatprep.subr.mxu0 0.0
  %1813 = vmatpush2.msra.mxu0 0.0
  %1814 = vmatprep.subr.mxu0 0.0
  %1815 = vmatpush2.msra.mxu0 0.0
  %1816 = vmatprep.subr.mxu0 0.0
  %1817 = vmatpush2.msra.mxu0 0.0
  %1818 = vmatprep.subr.mxu0 0.0
  %1819 = vmatpush2.msra.mxu0 0.0
  %1820 = vmatprep.subr.mxu0 0.0
  %1821 = vmatpush2.msra.mxu0 0.0
  %1822 = vmatprep.subr.mxu0 0.0
  %1823 = vmatpush2.msra.mxu0 0.0
  %1824 = vmatprep.mubr.f32.mxu0 0.0
  %1825 = vmatmul.mubr.f32.gmra.mxu0 %v1749
  %v1826 = vpop.f32.mrf.mxu0
  %v1827 = vadd.f32 %v1747, %v1826
  %v1828 = vpop.f32.mrf.mxu0
  %1829 = vmatprep.mubr.f32.mxu0 0.0
  %1830 = vmatmul.mubr.f32.gmra.mxu0 %v1752
  %v1831 = vpop.f32.mrf.mxu0
  %v1832 = vadd.f32 %v1747, %v1831
  %v1833 = vpop.f32.mrf.mxu0
  %1834 = vmatprep.mubr.f32.mxu0 0.0
  %1835 = vmatmul.mubr.f32.gmra.mxu0 %v1755
  %v1836 = vpop.f32.mrf.mxu0
  %v1837 = vadd.f32 %v1747, %v1836
  %v1838 = vpop.f32.mrf.mxu0
  %1839 = vmatprep.mubr.f32.mxu0 0.0
  %1840 = vmatmul.mubr.f32.gmra.mxu0 %v1758
  %v1841 = vpop.f32.mrf.mxu0
  %v1842 = vadd.f32 %v1747, %v1841
  %v1843 = vpop.f32.mrf.mxu0
  %1844 = vdwg.mxu0
  %v1845 = vpack.c.bf16 %v1832, %v1827
  %v1846 = vpack.c.bf16 %v1842, %v1837
  %v1847 = vld [vmem:[%s2] sm:$0xff]
  %v1848 = vld [vmem:[%s2 + $0x8] sm:$0xff]
  %v1849 = vld [vmem:[%s2 + $0x40] sm:$0xff]
  %v1850 = vld [vmem:[%s2 + $0x48] sm:$0xff]
  %v1851 = vld [vmem:[%s2 + $0x80] sm:$0xff]
  %v1852 = vld [vmem:[%s2 + $0x88] sm:$0xff]
  %v1853 = vld [vmem:[%s2 + $0xc0] sm:$0xff]
  %v1854 = vld [vmem:[%s2 + $0xc8] sm:$0xff]
  %v1855 = vld [vmem:[%s3] sm:$0xf]
  %v1857 = vlaneseq
  %v1858 = vshrl.u32 %v1857, 7
  %v1859 = vsub.s32 0, %v1858
  %v1860 = vrot.slane %v1855, %v1859
  %v1861 = vlaneseq
  %v1862 = vshrl.u32 %v1861, 7
  %v1863 = vsub.s32 1, %v1862
  %v1864 = vrot.slane %v1855, %v1863
  %v1865 = vlaneseq
  %v1866 = vshrl.u32 %v1865, 7
  %v1867 = vsub.s32 2, %v1866
  %v1868 = vrot.slane %v1855, %v1867
  %v1869 = vlaneseq
  %v1870 = vshrl.u32 %v1869, 7
  %v1871 = vsub.s32 3, %v1870
  %v1872 = vrot.slane %v1855, %v1871
  %v1885 = vunpack.c.l.b16 %v1847
  %v1886 = vunpack.c.h.b16 %v1847
  %v1887 = vunpack.c.l.b16 %v1848
  %v1888 = vunpack.c.h.b16 %v1848
  %v1889 = vunpack.c.l.b16 %v1849
  %v1890 = vunpack.c.h.b16 %v1849
  %v1891 = vunpack.c.l.b16 %v1850
  %v1892 = vunpack.c.h.b16 %v1850
  %v1893 = vunpack.c.l.b16 %v1851
  %v1894 = vunpack.c.h.b16 %v1851
  %v1895 = vunpack.c.l.b16 %v1852
  %v1896 = vunpack.c.h.b16 %v1852
  %v1897 = vunpack.c.l.b16 %v1853
  %v1898 = vunpack.c.h.b16 %v1853
  %v1899 = vunpack.c.l.b16 %v1854
  %v1900 = vunpack.c.h.b16 %v1854
  %v1901 = vpack.c.b16 %v1889, %v1885
  %v1902 = vpack.c.b16 %v1890, %v1886
  %v1903 = vpack.c.b16 %v1891, %v1887
  %v1904 = vpack.c.b16 %v1892, %v1888
  %v1905 = vpack.c.b16 %v1897, %v1893
  %v1906 = vpack.c.b16 %v1898, %v1894
  %v1907 = vpack.c.b16 %v1899, %v1895
  %v1908 = vpack.c.b16 %v1900, %v1896
  %v1918 = vsel %vm467, %v1845, 0
  %v1921 = vsel %vm467, %v1846, 0
  %1923 = vmatprep.subr.bf16.mxu0 0
  %1924 = vmatpush1.bf16.msra.mxu0 0
  %1925 = vmatprep.subr.bf16.mxu0 0
  %1926 = vmatpush1.bf16.msra.mxu0 0
  %1927 = vmatprep.subr.bf16.mxu0 0
  %1928 = vmatpush1.bf16.msra.mxu0 0
  %1929 = vmatprep.subr.bf16.mxu0 0
  %1930 = vmatpush1.bf16.msra.mxu0 0
  %1931 = vmatprep.subr.bf16.mxu0 0
  %1932 = vmatpush1.bf16.msra.mxu0 0
  %1933 = vmatprep.subr.bf16.mxu0 0
  %1934 = vmatpush1.bf16.msra.mxu0 0
  %1935 = vmatprep.subr.bf16.mxu0 %v1906
  %1936 = vmatpush1.bf16.msra.mxu0 %v1905
  %1937 = vmatprep.subr.bf16.mxu0 %v1902
  %1938 = vmatpush1.bf16.msra.mxu0 %v1901
  %1939 = vmatprep.subr.bf16.mxu0 0
  %1940 = vmatpush2.bf16.msra.mxu0 0
  %1941 = vmatprep.subr.bf16.mxu0 0
  %1942 = vmatpush2.bf16.msra.mxu0 0
  %1943 = vmatprep.subr.bf16.mxu0 0
  %1944 = vmatpush2.bf16.msra.mxu0 0
  %1945 = vmatprep.subr.bf16.mxu0 0
  %1946 = vmatpush2.bf16.msra.mxu0 0
  %1947 = vmatprep.subr.bf16.mxu0 0
  %1948 = vmatpush2.bf16.msra.mxu0 0
  %1949 = vmatprep.subr.bf16.mxu0 0
  %1950 = vmatpush2.bf16.msra.mxu0 0
  %1951 = vmatprep.subr.bf16.mxu0 0
  %1952 = vmatpush2.bf16.msra.mxu0 0
  %1953 = vmatprep.subr.bf16.mxu0 0
  %1954 = vmatpush2.bf16.msra.mxu0 0
  %1955 = vmatprep.mubr.bf16.mxu0 0
  %1956 = vmatmul.mubr.bf16.gmra.mxu0 %v1918
  %v1957 = vpop.f32.mrf.mxu0
  %v1958 = vadd.f32 %v1860, %v1957
  %v1959 = vpop.f32.mrf.mxu0
  %v1960 = vadd.f32 %v1864, %v1959
  %v1961 = vpop.f32.mrf.mxu0
  %v1962 = vadd.f32 %v1860, %v1961
  %v1963 = vpop.f32.mrf.mxu0
  %v1964 = vadd.f32 %v1864, %v1963
  %1965 = vmatprep.mubr.bf16.mxu0 0
  %1966 = vmatmul.mubr.bf16.gmra.mxu0 %v1921
  %v1967 = vpop.f32.mrf.mxu0
  %v1968 = vadd.f32 %v1860, %v1967
  %v1969 = vpop.f32.mrf.mxu0
  %v1970 = vadd.f32 %v1864, %v1969
  %v1971 = vpop.f32.mrf.mxu0
  %v1972 = vadd.f32 %v1860, %v1971
  %v1973 = vpop.f32.mrf.mxu0
  %v1974 = vadd.f32 %v1864, %v1973
  %1975 = vdwg.mxu0
  %1976 = vmatprep.subr.bf16.mxu0 0
  %1977 = vmatpush1.bf16.msra.mxu0 0
  %1978 = vmatprep.subr.bf16.mxu0 0
  %1979 = vmatpush1.bf16.msra.mxu0 0
  %1980 = vmatprep.subr.bf16.mxu0 0
  %1981 = vmatpush1.bf16.msra.mxu0 0
  %1982 = vmatprep.subr.bf16.mxu0 0
  %1983 = vmatpush1.bf16.msra.mxu0 0
  %1984 = vmatprep.subr.bf16.mxu0 0
  %1985 = vmatpush1.bf16.msra.mxu0 0
  %1986 = vmatprep.subr.bf16.mxu0 0
  %1987 = vmatpush1.bf16.msra.mxu0 0
  %1988 = vmatprep.subr.bf16.mxu0 %v1908
  %1989 = vmatpush1.bf16.msra.mxu0 %v1907
  %1990 = vmatprep.subr.bf16.mxu0 %v1904
  %1991 = vmatpush1.bf16.msra.mxu0 %v1903
  %1992 = vmatprep.subr.bf16.mxu0 0
  %1993 = vmatpush2.bf16.msra.mxu0 0
  %1994 = vmatprep.subr.bf16.mxu0 0
  %1995 = vmatpush2.bf16.msra.mxu0 0
  %1996 = vmatprep.subr.bf16.mxu0 0
  %1997 = vmatpush2.bf16.msra.mxu0 0
  %1998 = vmatprep.subr.bf16.mxu0 0
  %1999 = vmatpush2.bf16.msra.mxu0 0
  %2000 = vmatprep.subr.bf16.mxu0 0
  %2001 = vmatpush2.bf16.msra.mxu0 0
  %2002 = vmatprep.subr.bf16.mxu0 0
  %2003 = vmatpush2.bf16.msra.mxu0 0
  %2004 = vmatprep.subr.bf16.mxu0 0
  %2005 = vmatpush2.bf16.msra.mxu0 0
  %2006 = vmatprep.subr.bf16.mxu0 0
  %2007 = vmatpush2.bf16.msra.mxu0 0
  %2008 = vmatprep.mubr.bf16.mxu0 0
  %2009 = vmatmul.mubr.bf16.gmra.mxu0 %v1918
  %v2010 = vpop.f32.mrf.mxu0
  %v2011 = vadd.f32 %v1868, %v2010
  %v2012 = vpop.f32.mrf.mxu0
  %v2013 = vadd.f32 %v1872, %v2012
  %v2014 = vpop.f32.mrf.mxu0
  %v2015 = vadd.f32 %v1868, %v2014
  %v2016 = vpop.f32.mrf.mxu0
  %v2017 = vadd.f32 %v1872, %v2016
  %2018 = vmatprep.mubr.bf16.mxu0 0
  %2019 = vmatmul.mubr.bf16.gmra.mxu0 %v1921
  %v2020 = vpop.f32.mrf.mxu0
  %v2021 = vadd.f32 %v1868, %v2020
  %v2022 = vpop.f32.mrf.mxu0
  %v2023 = vadd.f32 %v1872, %v2022
  %v2024 = vpop.f32.mrf.mxu0
  %v2025 = vadd.f32 %v1868, %v2024
  %v2026 = vpop.f32.mrf.mxu0
  %v2027 = vadd.f32 %v1872, %v2026
  %2028 = vdwg.mxu0
  %v2029 = vmax.f32 %v1958, 0.0
  %v2030 = vmax.f32 %v1960, 0.0
  %v2031 = vmax.f32 %v2011, 0.0
  %v2032 = vmax.f32 %v2013, 0.0
  %v2033 = vmax.f32 %v1962, 0.0
  %v2034 = vmax.f32 %v1964, 0.0
  %v2035 = vmax.f32 %v2015, 0.0
  %v2036 = vmax.f32 %v2017, 0.0
  %v2037 = vmax.f32 %v1968, 0.0
  %v2038 = vmax.f32 %v1970, 0.0
  %v2039 = vmax.f32 %v2021, 0.0
  %v2040 = vmax.f32 %v2023, 0.0
  %v2041 = vmax.f32 %v1972, 0.0
  %v2042 = vmax.f32 %v1974, 0.0
  %v2043 = vmax.f32 %v2025, 0.0
  %v2044 = vmax.f32 %v2027, 0.0
  %v2045 = vpack.c.bf16 %v2033, %v2029
  %v2046 = vpack.c.bf16 %v2034, %v2030
  %v2047 = vpack.c.bf16 %v2035, %v2031
  %v2048 = vpack.c.bf16 %v2036, %v2032
  %v2049 = vpack.c.bf16 %v2041, %v2037
  %v2050 = vpack.c.bf16 %v2042, %v2038
  %v2051 = vpack.c.bf16 %v2043, %v2039
  %v2052 = vpack.c.bf16 %v2044, %v2040
  %v2053 = vld [vmem:[%s4] sm:$0xf]
  %v2054 = vld [vmem:[%s4 + $0x4] sm:$0xf]
  %v2055 = vld [vmem:[%s4 + $0x8] sm:$0xf]
  %v2056 = vld [vmem:[%s4 + $0xc] sm:$0xf]
  %v2057 = vld [vmem:[%s4 + $0x10] sm:$0xf]
  %v2058 = vld [vmem:[%s4 + $0x14] sm:$0xf]
  %v2059 = vld [vmem:[%s4 + $0x18] sm:$0xf]
  %v2060 = vld [vmem:[%s4 + $0x1c] sm:$0xf]
  %v2061 = vld [vmem:[%s4 + $0x20] sm:$0xf]
  %v2062 = vld [vmem:[%s4 + $0x24] sm:$0xf]
  %v2063 = vld [vmem:[%s4 + $0x28] sm:$0xf]
  %v2064 = vld [vmem:[%s4 + $0x2c] sm:$0xf]
  %v2065 = vld [vmem:[%s4 + $0x30] sm:$0xf]
  %v2066 = vld [vmem:[%s4 + $0x34] sm:$0xf]
  %v2067 = vld [vmem:[%s4 + $0x38] sm:$0xf]
  %v2068 = vld [vmem:[%s4 + $0x3c] sm:$0xf]
  %v2069 = vld [vmem:[%s4 + $0x40] sm:$0xf]
  %v2070 = vld [vmem:[%s4 + $0x44] sm:$0xf]
  %v2071 = vld [vmem:[%s4 + $0x48] sm:$0xf]
  %v2072 = vld [vmem:[%s4 + $0x4c] sm:$0xf]
  %v2073 = vld [vmem:[%s4 + $0x50] sm:$0xf]
  %v2074 = vld [vmem:[%s4 + $0x54] sm:$0xf]
  %v2075 = vld [vmem:[%s4 + $0x58] sm:$0xf]
  %v2076 = vld [vmem:[%s4 + $0x5c] sm:$0xf]
  %v2077 = vld [vmem:[%s4 + $0x60] sm:$0xf]
  %v2078 = vld [vmem:[%s4 + $0x64] sm:$0xf]
  %v2079 = vld [vmem:[%s4 + $0x68] sm:$0xf]
  %v2080 = vld [vmem:[%s4 + $0x6c] sm:$0xf]
  %v2081 = vld [vmem:[%s4 + $0x70] sm:$0xf]
  %v2082 = vld [vmem:[%s4 + $0x74] sm:$0xf]
  %v2083 = vld [vmem:[%s4 + $0x78] sm:$0xf]
  %v2084 = vld [vmem:[%s4 + $0x7c] sm:$0xf]
  %v2085 = vld [vmem:[%s4 + $0x80] sm:$0xf]
  %v2086 = vld [vmem:[%s4 + $0x84] sm:$0xf]
  %v2087 = vld [vmem:[%s4 + $0x88] sm:$0xf]
  %v2088 = vld [vmem:[%s4 + $0x8c] sm:$0xf]
  %v2089 = vld [vmem:[%s4 + $0x90] sm:$0xf]
  %v2090 = vld [vmem:[%s4 + $0x94] sm:$0xf]
  %v2091 = vld [vmem:[%s4 + $0x98] sm:$0xf]
  %v2092 = vld [vmem:[%s4 + $0x9c] sm:$0xf]
  %v2093 = vld [vmem:[%s4 + $0xa0] sm:$0xf]
  %v2094 = vld [vmem:[%s4 + $0xa4] sm:$0xf]
  %v2095 = vld [vmem:[%s4 + $0xa8] sm:$0xf]
  %v2096 = vld [vmem:[%s4 + $0xac] sm:$0xf]
  %v2097 = vld [vmem:[%s4 + $0xb0] sm:$0xf]
  %v2098 = vld [vmem:[%s4 + $0xb4] sm:$0xf]
  %v2099 = vld [vmem:[%s4 + $0xb8] sm:$0xf]
  %v2100 = vld [vmem:[%s4 + $0xbc] sm:$0xf]
  %v2101 = vld [vmem:[%s4 + $0xc0] sm:$0xf]
  %v2102 = vld [vmem:[%s4 + $0xc4] sm:$0xf]
  %v2103 = vld [vmem:[%s4 + $0xc8] sm:$0xf]
  %v2104 = vld [vmem:[%s4 + $0xcc] sm:$0xf]
  %v2105 = vld [vmem:[%s4 + $0xd0] sm:$0xf]
  %v2106 = vld [vmem:[%s4 + $0xd4] sm:$0xf]
  %v2107 = vld [vmem:[%s4 + $0xd8] sm:$0xf]
  %v2108 = vld [vmem:[%s4 + $0xdc] sm:$0xf]
  %v2109 = vld [vmem:[%s4 + $0xe0] sm:$0xf]
  %v2110 = vld [vmem:[%s4 + $0xe4] sm:$0xf]
  %v2111 = vld [vmem:[%s4 + $0xe8] sm:$0xf]
  %v2112 = vld [vmem:[%s4 + $0xec] sm:$0xf]
  %v2113 = vld [vmem:[%s4 + $0xf0] sm:$0xf]
  %v2114 = vld [vmem:[%s4 + $0xf4] sm:$0xf]
  %v2115 = vld [vmem:[%s4 + $0xf8] sm:$0xf]
  %v2116 = vld [vmem:[%s4 + $0xfc] sm:$0xf]
  %v2117 = vld [vmem:[%s2 + $0x10] sm:$0xff]
  %v2118 = vld [vmem:[%s2 + $0x18] sm:$0xff]
  %v2119 = vld [vmem:[%s2 + $0x50] sm:$0xff]
  %v2120 = vld [vmem:[%s2 + $0x58] sm:$0xff]
  %v2121 = vld [vmem:[%s2 + $0x90] sm:$0xff]
  %v2122 = vld [vmem:[%s2 + $0x98] sm:$0xff]
  %v2123 = vld [vmem:[%s2 + $0xd0] sm:$0xff]
  %v2124 = vld [vmem:[%s2 + $0xd8] sm:$0xff]
  %v2125 = vld [vmem:[%s3 + $0x4] sm:$0xf]
  %v2127 = vlaneseq
  %v2128 = vshrl.u32 %v2127, 7
  %v2129 = vsub.s32 0, %v2128
  %v2130 = vrot.slane %v2125, %v2129
  %v2131 = vlaneseq
  %v2132 = vshrl.u32 %v2131, 7
  %v2133 = vsub.s32 1, %v2132
  %v2134 = vrot.slane %v2125, %v2133
  %v2135 = vlaneseq
  %v2136 = vshrl.u32 %v2135, 7
  %v2137 = vsub.s32 2, %v2136
  %v2138 = vrot.slane %v2125, %v2137
  %v2139 = vlaneseq
  %v2140 = vshrl.u32 %v2139, 7
  %v2141 = vsub.s32 3, %v2140
  %v2142 = vrot.slane %v2125, %v2141
  %v2155 = vunpack.c.l.b16 %v2117
  %v2156 = vunpack.c.h.b16 %v2117
  %v2157 = vunpack.c.l.b16 %v2118
  %v2158 = vunpack.c.h.b16 %v2118
  %v2159 = vunpack.c.l.b16 %v2119
  %v2160 = vunpack.c.h.b16 %v2119
  %v2161 = vunpack.c.l.b16 %v2120
  %v2162 = vunpack.c.h.b16 %v2120
  %v2163 = vunpack.c.l.b16 %v2121
  %v2164 = vunpack.c.h.b16 %v2121
  %v2165 = vunpack.c.l.b16 %v2122
  %v2166 = vunpack.c.h.b16 %v2122
  %v2167 = vunpack.c.l.b16 %v2123
  %v2168 = vunpack.c.h.b16 %v2123
  %v2169 = vunpack.c.l.b16 %v2124
  %v2170 = vunpack.c.h.b16 %v2124
  %v2171 = vpack.c.b16 %v2159, %v2155
  %v2172 = vpack.c.b16 %v2160, %v2156
  %v2173 = vpack.c.b16 %v2161, %v2157
  %v2174 = vpack.c.b16 %v2162, %v2158
  %v2175 = vpack.c.b16 %v2167, %v2163
  %v2176 = vpack.c.b16 %v2168, %v2164
  %v2177 = vpack.c.b16 %v2169, %v2165
  %v2178 = vpack.c.b16 %v2170, %v2166
  %2187 = vmatprep.subr.bf16.mxu0 0
  %2188 = vmatpush1.bf16.msra.mxu0 0
  %2189 = vmatprep.subr.bf16.mxu0 0
  %2190 = vmatpush1.bf16.msra.mxu0 0
  %2191 = vmatprep.subr.bf16.mxu0 0
  %2192 = vmatpush1.bf16.msra.mxu0 0
  %2193 = vmatprep.subr.bf16.mxu0 0
  %2194 = vmatpush1.bf16.msra.mxu0 0
  %2195 = vmatprep.subr.bf16.mxu0 0
  %2196 = vmatpush1.bf16.msra.mxu0 0
  %2197 = vmatprep.subr.bf16.mxu0 0
  %2198 = vmatpush1.bf16.msra.mxu0 0
  %2199 = vmatprep.subr.bf16.mxu0 %v2176
  %2200 = vmatpush1.bf16.msra.mxu0 %v2175
  %2201 = vmatprep.subr.bf16.mxu0 %v2172
  %2202 = vmatpush1.bf16.msra.mxu0 %v2171
  %2203 = vmatprep.subr.bf16.mxu0 0
  %2204 = vmatpush2.bf16.msra.mxu0 0
  %2205 = vmatprep.subr.bf16.mxu0 0
  %2206 = vmatpush2.bf16.msra.mxu0 0
  %2207 = vmatprep.subr.bf16.mxu0 0
  %2208 = vmatpush2.bf16.msra.mxu0 0
  %2209 = vmatprep.subr.bf16.mxu0 0
  %2210 = vmatpush2.bf16.msra.mxu0 0
  %2211 = vmatprep.subr.bf16.mxu0 0
  %2212 = vmatpush2.bf16.msra.mxu0 0
  %2213 = vmatprep.subr.bf16.mxu0 0
  %2214 = vmatpush2.bf16.msra.mxu0 0
  %2215 = vmatprep.subr.bf16.mxu0 0
  %2216 = vmatpush2.bf16.msra.mxu0 0
  %2217 = vmatprep.subr.bf16.mxu0 0
  %2218 = vmatpush2.bf16.msra.mxu0 0
  %2219 = vmatprep.mubr.bf16.mxu0 0
  %2220 = vmatmul.mubr.bf16.gmra.mxu0 %v1918
  %v2221 = vpop.f32.mrf.mxu0
  %v2222 = vadd.f32 %v2130, %v2221
  %v2223 = vpop.f32.mrf.mxu0
  %v2224 = vadd.f32 %v2134, %v2223
  %v2225 = vpop.f32.mrf.mxu0
  %v2226 = vadd.f32 %v2130, %v2225
  %v2227 = vpop.f32.mrf.mxu0
  %v2228 = vadd.f32 %v2134, %v2227
  %2229 = vmatprep.mubr.bf16.mxu0 0
  %2230 = vmatmul.mubr.bf16.gmra.mxu0 %v1921
  %v2231 = vpop.f32.mrf.mxu0
  %v2232 = vadd.f32 %v2130, %v2231
  %v2233 = vpop.f32.mrf.mxu0
  %v2234 = vadd.f32 %v2134, %v2233
  %v2235 = vpop.f32.mrf.mxu0
  %v2236 = vadd.f32 %v2130, %v2235
  %v2237 = vpop.f32.mrf.mxu0
  %v2238 = vadd.f32 %v2134, %v2237
  %2239 = vdwg.mxu0
  %2240 = vmatprep.subr.bf16.mxu0 0
  %2241 = vmatpush1.bf16.msra.mxu0 0
  %2242 = vmatprep.subr.bf16.mxu0 0
  %2243 = vmatpush1.bf16.msra.mxu0 0
  %2244 = vmatprep.subr.bf16.mxu0 0
  %2245 = vmatpush1.bf16.msra.mxu0 0
  %2246 = vmatprep.subr.bf16.mxu0 0
  %2247 = vmatpush1.bf16.msra.mxu0 0
  %2248 = vmatprep.subr.bf16.mxu0 0
  %2249 = vmatpush1.bf16.msra.mxu0 0
  %2250 = vmatprep.subr.bf16.mxu0 0
  %2251 = vmatpush1.bf16.msra.mxu0 0
  %2252 = vmatprep.subr.bf16.mxu0 %v2178
  %2253 = vmatpush1.bf16.msra.mxu0 %v2177
  %2254 = vmatprep.subr.bf16.mxu0 %v2174
  %2255 = vmatpush1.bf16.msra.mxu0 %v2173
  %2256 = vmatprep.subr.bf16.mxu0 0
  %2257 = vmatpush2.bf16.msra.mxu0 0
  %2258 = vmatprep.subr.bf16.mxu0 0
  %2259 = vmatpush2.bf16.msra.mxu0 0
  %2260 = vmatprep.subr.bf16.mxu0 0
  %2261 = vmatpush2.bf16.msra.mxu0 0
  %2262 = vmatprep.subr.bf16.mxu0 0
  %2263 = vmatpush2.bf16.msra.mxu0 0
  %2264 = vmatprep.subr.bf16.mxu0 0
  %2265 = vmatpush2.bf16.msra.mxu0 0
  %2266 = vmatprep.subr.bf16.mxu0 0
  %2267 = vmatpush2.bf16.msra.mxu0 0
  %2268 = vmatprep.subr.bf16.mxu0 0
  %2269 = vmatpush2.bf16.msra.mxu0 0
  %2270 = vmatprep.subr.bf16.mxu0 0
  %2271 = vmatpush2.bf16.msra.mxu0 0
  %2272 = vmatprep.mubr.bf16.mxu0 0
  %2273 = vmatmul.mubr.bf16.gmra.mxu0 %v1918
  %v2274 = vpop.f32.mrf.mxu0
  %v2275 = vadd.f32 %v2138, %v2274
  %v2276 = vpop.f32.mrf.mxu0
  %v2277 = vadd.f32 %v2142, %v2276
  %v2278 = vpop.f32.mrf.mxu0
  %v2279 = vadd.f32 %v2138, %v2278
  %v2280 = vpop.f32.mrf.mxu0
  %v2281 = vadd.f32 %v2142, %v2280
  %2282 = vmatprep.mubr.bf16.mxu0 0
  %2283 = vmatmul.mubr.bf16.gmra.mxu0 %v1921
  %v2284 = vpop.f32.mrf.mxu0
  %v2285 = vadd.f32 %v2138, %v2284
  %v2286 = vpop.f32.mrf.mxu0
  %v2287 = vadd.f32 %v2142, %v2286
  %v2288 = vpop.f32.mrf.mxu0
  %v2289 = vadd.f32 %v2138, %v2288
  %v2290 = vpop.f32.mrf.mxu0
  %v2291 = vadd.f32 %v2142, %v2290
  %2292 = vdwg.mxu0
  %v2293 = vmax.f32 %v2222, 0.0
  %v2294 = vmax.f32 %v2224, 0.0
  %v2295 = vmax.f32 %v2275, 0.0
  %v2296 = vmax.f32 %v2277, 0.0
  %v2297 = vmax.f32 %v2226, 0.0
  %v2298 = vmax.f32 %v2228, 0.0
  %v2299 = vmax.f32 %v2279, 0.0
  %v2300 = vmax.f32 %v2281, 0.0
  %v2301 = vmax.f32 %v2232, 0.0
  %v2302 = vmax.f32 %v2234, 0.0
  %v2303 = vmax.f32 %v2285, 0.0
  %v2304 = vmax.f32 %v2287, 0.0
  %v2305 = vmax.f32 %v2236, 0.0
  %v2306 = vmax.f32 %v2238, 0.0
  %v2307 = vmax.f32 %v2289, 0.0
  %v2308 = vmax.f32 %v2291, 0.0
  %v2309 = vpack.c.bf16 %v2297, %v2293
  %v2310 = vpack.c.bf16 %v2298, %v2294
  %v2311 = vpack.c.bf16 %v2299, %v2295
  %v2312 = vpack.c.bf16 %v2300, %v2296
  %v2313 = vpack.c.bf16 %v2305, %v2301
  %v2314 = vpack.c.bf16 %v2306, %v2302
  %v2315 = vpack.c.bf16 %v2307, %v2303
  %v2316 = vpack.c.bf16 %v2308, %v2304
  %v2317 = vld [vmem:[%s4 + $0x100] sm:$0xf]
  %v2318 = vld [vmem:[%s4 + $0x104] sm:$0xf]
  %v2319 = vld [vmem:[%s4 + $0x108] sm:$0xf]
  %v2320 = vld [vmem:[%s4 + $0x10c] sm:$0xf]
  %v2321 = vld [vmem:[%s4 + $0x110] sm:$0xf]
  %v2322 = vld [vmem:[%s4 + $0x114] sm:$0xf]
  %v2323 = vld [vmem:[%s4 + $0x118] sm:$0xf]
  %v2324 = vld [vmem:[%s4 + $0x11c] sm:$0xf]
  %v2325 = vld [vmem:[%s4 + $0x120] sm:$0xf]
  %v2326 = vld [vmem:[%s4 + $0x124] sm:$0xf]
  %v2327 = vld [vmem:[%s4 + $0x128] sm:$0xf]
  %v2328 = vld [vmem:[%s4 + $0x12c] sm:$0xf]
  %v2329 = vld [vmem:[%s4 + $0x130] sm:$0xf]
  %v2330 = vld [vmem:[%s4 + $0x134] sm:$0xf]
  %v2331 = vld [vmem:[%s4 + $0x138] sm:$0xf]
  %v2332 = vld [vmem:[%s4 + $0x13c] sm:$0xf]
  %v2333 = vld [vmem:[%s4 + $0x140] sm:$0xf]
  %v2334 = vld [vmem:[%s4 + $0x144] sm:$0xf]
  %v2335 = vld [vmem:[%s4 + $0x148] sm:$0xf]
  %v2336 = vld [vmem:[%s4 + $0x14c] sm:$0xf]
  %v2337 = vld [vmem:[%s4 + $0x150] sm:$0xf]
  %v2338 = vld [vmem:[%s4 + $0x154] sm:$0xf]
  %v2339 = vld [vmem:[%s4 + $0x158] sm:$0xf]
  %v2340 = vld [vmem:[%s4 + $0x15c] sm:$0xf]
  %v2341 = vld [vmem:[%s4 + $0x160] sm:$0xf]
  %v2342 = vld [vmem:[%s4 + $0x164] sm:$0xf]
  %v2343 = vld [vmem:[%s4 + $0x168] sm:$0xf]
  %v2344 = vld [vmem:[%s4 + $0x16c] sm:$0xf]
  %v2345 = vld [vmem:[%s4 + $0x170] sm:$0xf]
  %v2346 = vld [vmem:[%s4 + $0x174] sm:$0xf]
  %v2347 = vld [vmem:[%s4 + $0x178] sm:$0xf]
  %v2348 = vld [vmem:[%s4 + $0x17c] sm:$0xf]
  %v2349 = vld [vmem:[%s4 + $0x180] sm:$0xf]
  %v2350 = vld [vmem:[%s4 + $0x184] sm:$0xf]
  %v2351 = vld [vmem:[%s4 + $0x188] sm:$0xf]
  %v2352 = vld [vmem:[%s4 + $0x18c] sm:$0xf]
  %v2353 = vld [vmem:[%s4 + $0x190] sm:$0xf]
  %v2354 = vld [vmem:[%s4 + $0x194] sm:$0xf]
  %v2355 = vld [vmem:[%s4 + $0x198] sm:$0xf]
  %v2356 = vld [vmem:[%s4 + $0x19c] sm:$0xf]
  %v2357 = vld [vmem:[%s4 + $0x1a0] sm:$0xf]
  %v2358 = vld [vmem:[%s4 + $0x1a4] sm:$0xf]
  %v2359 = vld [vmem:[%s4 + $0x1a8] sm:$0xf]
  %v2360 = vld [vmem:[%s4 + $0x1ac] sm:$0xf]
  %v2361 = vld [vmem:[%s4 + $0x1b0] sm:$0xf]
  %v2362 = vld [vmem:[%s4 + $0x1b4] sm:$0xf]
  %v2363 = vld [vmem:[%s4 + $0x1b8] sm:$0xf]
  %v2364 = vld [vmem:[%s4 + $0x1bc] sm:$0xf]
  %v2365 = vld [vmem:[%s4 + $0x1c0] sm:$0xf]
  %v2366 = vld [vmem:[%s4 + $0x1c4] sm:$0xf]
  %v2367 = vld [vmem:[%s4 + $0x1c8] sm:$0xf]
  %v2368 = vld [vmem:[%s4 + $0x1cc] sm:$0xf]
  %v2369 = vld [vmem:[%s4 + $0x1d0] sm:$0xf]
  %v2370 = vld [vmem:[%s4 + $0x1d4] sm:$0xf]
  %v2371 = vld [vmem:[%s4 + $0x1d8] sm:$0xf]
  %v2372 = vld [vmem:[%s4 + $0x1dc] sm:$0xf]
  %v2373 = vld [vmem:[%s4 + $0x1e0] sm:$0xf]
  %v2374 = vld [vmem:[%s4 + $0x1e4] sm:$0xf]
  %v2375 = vld [vmem:[%s4 + $0x1e8] sm:$0xf]
  %v2376 = vld [vmem:[%s4 + $0x1ec] sm:$0xf]
  %v2377 = vld [vmem:[%s4 + $0x1f0] sm:$0xf]
  %v2378 = vld [vmem:[%s4 + $0x1f4] sm:$0xf]
  %v2379 = vld [vmem:[%s4 + $0x1f8] sm:$0xf]
  %v2380 = vld [vmem:[%s4 + $0x1fc] sm:$0xf]
  %v2445 = vunpack.c.l.b16 %v2317
  %v2446 = vunpack.c.l.b16 %v2318
  %v2447 = vunpack.c.l.b16 %v2319
  %v2448 = vunpack.c.l.b16 %v2320
  %v2449 = vunpack.c.l.b16 %v2321
  %v2450 = vunpack.c.l.b16 %v2322
  %v2451 = vunpack.c.l.b16 %v2323
  %v2452 = vunpack.c.l.b16 %v2324
  %v2453 = vunpack.c.l.b16 %v2325
  %v2454 = vunpack.c.l.b16 %v2326
  %v2455 = vunpack.c.l.b16 %v2327
  %v2456 = vunpack.c.l.b16 %v2328
  %v2457 = vunpack.c.l.b16 %v2329
  %v2458 = vunpack.c.l.b16 %v2330
  %v2459 = vunpack.c.l.b16 %v2331
  %v2460 = vunpack.c.l.b16 %v2332
  %v2461 = vunpack.c.l.b16 %v2333
  %v2462 = vunpack.c.l.b16 %v2334
  %v2463 = vunpack.c.l.b16 %v2335
  %v2464 = vunpack.c.l.b16 %v2336
  %v2465 = vunpack.c.l.b16 %v2337
  %v2466 = vunpack.c.l.b16 %v2338
  %v2467 = vunpack.c.l.b16 %v2339
  %v2468 = vunpack.c.l.b16 %v2340
  %v2469 = vunpack.c.l.b16 %v2341
  %v2470 = vunpack.c.l.b16 %v2342
  %v2471 = vunpack.c.l.b16 %v2343
  %v2472 = vunpack.c.l.b16 %v2344
  %v2473 = vunpack.c.l.b16 %v2345
  %v2474 = vunpack.c.l.b16 %v2346
  %v2475 = vunpack.c.l.b16 %v2347
  %v2476 = vunpack.c.l.b16 %v2348
  %v2477 = vunpack.c.l.b16 %v2349
  %v2478 = vunpack.c.l.b16 %v2350
  %v2479 = vunpack.c.l.b16 %v2351
  %v2480 = vunpack.c.l.b16 %v2352
  %v2481 = vunpack.c.l.b16 %v2353
  %v2482 = vunpack.c.l.b16 %v2354
  %v2483 = vunpack.c.l.b16 %v2355
  %v2484 = vunpack.c.l.b16 %v2356
  %v2485 = vunpack.c.l.b16 %v2357
  %v2486 = vunpack.c.l.b16 %v2358
  %v2487 = vunpack.c.l.b16 %v2359
  %v2488 = vunpack.c.l.b16 %v2360
  %v2489 = vunpack.c.l.b16 %v2361
  %v2490 = vunpack.c.l.b16 %v2362
  %v2491 = vunpack.c.l.b16 %v2363
  %v2492 = vunpack.c.l.b16 %v2364
  %v2493 = vunpack.c.l.b16 %v2365
  %v2494 = vunpack.c.l.b16 %v2366
  %v2495 = vunpack.c.l.b16 %v2367
  %v2496 = vunpack.c.l.b16 %v2368
  %v2497 = vunpack.c.l.b16 %v2369
  %v2498 = vunpack.c.l.b16 %v2370
  %v2499 = vunpack.c.l.b16 %v2371
  %v2500 = vunpack.c.l.b16 %v2372
  %v2501 = vunpack.c.l.b16 %v2373
  %v2502 = vunpack.c.l.b16 %v2374
  %v2503 = vunpack.c.l.b16 %v2375
  %v2504 = vunpack.c.l.b16 %v2376
  %v2505 = vunpack.c.l.b16 %v2377
  %v2506 = vunpack.c.l.b16 %v2378
  %v2507 = vunpack.c.l.b16 %v2379
  %v2508 = vunpack.c.l.b16 %v2380
  %v2509 = vpack.c.b16 %v2446, %v2445
  %v2510 = vpack.c.b16 %v2448, %v2447
  %v2511 = vpack.c.b16 %v2450, %v2449
  %v2512 = vpack.c.b16 %v2452, %v2451
  %v2513 = vpack.c.b16 %v2454, %v2453
  %v2514 = vpack.c.b16 %v2456, %v2455
  %v2515 = vpack.c.b16 %v2458, %v2457
  %v2516 = vpack.c.b16 %v2460, %v2459
  %v2517 = vpack.c.b16 %v2462, %v2461
  %v2518 = vpack.c.b16 %v2464, %v2463
  %v2519 = vpack.c.b16 %v2466, %v2465
  %v2520 = vpack.c.b16 %v2468, %v2467
  %v2521 = vpack.c.b16 %v2470, %v2469
  %v2522 = vpack.c.b16 %v2472, %v2471
  %v2523 = vpack.c.b16 %v2474, %v2473
  %v2524 = vpack.c.b16 %v2476, %v2475
  %v2525 = vpack.c.b16 %v2478, %v2477
  %v2526 = vpack.c.b16 %v2480, %v2479
  %v2527 = vpack.c.b16 %v2482, %v2481
  %v2528 = vpack.c.b16 %v2484, %v2483
  %v2529 = vpack.c.b16 %v2486, %v2485
  %v2530 = vpack.c.b16 %v2488, %v2487
  %v2531 = vpack.c.b16 %v2490, %v2489
  %v2532 = vpack.c.b16 %v2492, %v2491
  %v2533 = vpack.c.b16 %v2494, %v2493
  %v2534 = vpack.c.b16 %v2496, %v2495
  %v2535 = vpack.c.b16 %v2498, %v2497
  %v2536 = vpack.c.b16 %v2500, %v2499
  %v2537 = vpack.c.b16 %v2502, %v2501
  %v2538 = vpack.c.b16 %v2504, %v2503
  %v2539 = vpack.c.b16 %v2506, %v2505
  %v2540 = vpack.c.b16 %v2508, %v2507
  %2573 = vmatprep.subr.bf16.mxu0 0
  %2574 = vmatpush1.bf16.msra.mxu0 %v2516
  %2575 = vmatprep.subr.bf16.mxu0 0
  %2576 = vmatpush1.bf16.msra.mxu0 %v2515
  %2577 = vmatprep.subr.bf16.mxu0 0
  %2578 = vmatpush1.bf16.msra.mxu0 %v2514
  %2579 = vmatprep.subr.bf16.mxu0 0
  %2580 = vmatpush1.bf16.msra.mxu0 %v2513
  %2581 = vmatprep.subr.bf16.mxu0 0
  %2582 = vmatpush1.bf16.msra.mxu0 %v2512
  %2583 = vmatprep.subr.bf16.mxu0 0
  %2584 = vmatpush1.bf16.msra.mxu0 %v2511
  %2585 = vmatprep.subr.bf16.mxu0 0
  %2586 = vmatpush1.bf16.msra.mxu0 %v2510
  %2587 = vmatprep.subr.bf16.mxu0 0
  %2588 = vmatpush1.bf16.msra.mxu0 %v2509
  %2589 = vmatprep.subr.bf16.mxu0 0
  %2590 = vmatpush2.bf16.msra.mxu0 %v2524
  %2591 = vmatprep.subr.bf16.mxu0 0
  %2592 = vmatpush2.bf16.msra.mxu0 %v2523
  %2593 = vmatprep.subr.bf16.mxu0 0
  %2594 = vmatpush2.bf16.msra.mxu0 %v2522
  %2595 = vmatprep.subr.bf16.mxu0 0
  %2596 = vmatpush2.bf16.msra.mxu0 %v2521
  %2597 = vmatprep.subr.bf16.mxu0 0
  %2598 = vmatpush2.bf16.msra.mxu0 %v2520
  %2599 = vmatprep.subr.bf16.mxu0 0
  %2600 = vmatpush2.bf16.msra.mxu0 %v2519
  %2601 = vmatprep.subr.bf16.mxu0 0
  %2602 = vmatpush2.bf16.msra.mxu0 %v2518
  %2603 = vmatprep.subr.bf16.mxu0 0
  %2604 = vmatpush2.bf16.msra.mxu0 %v2517
  %2605 = vmatprep.mubr.bf16.mxu0 %v2310
  %2606 = vmatmul.mubr.bf16.gmra.mxu0 %v2309
  %v2607 = vpop.f32.mrf.mxu0
  %v2608 = vadd.f32 0.0, %v2607
  %v2609 = vpop.f32.mrf.mxu0
  %v2610 = vpop.f32.mrf.mxu0
  %v2611 = vadd.f32 0.0, %v2610
  %v2612 = vpop.f32.mrf.mxu0
  %2613 = vmatprep.mubr.bf16.mxu0 %v2314
  %2614 = vmatmul.mubr.bf16.gmra.mxu0 %v2313
  %v2615 = vpop.f32.mrf.mxu0
  %v2616 = vadd.f32 0.0, %v2615
  %v2617 = vpop.f32.mrf.mxu0
  %v2618 = vpop.f32.mrf.mxu0
  %v2619 = vadd.f32 0.0, %v2618
  %v2620 = vpop.f32.mrf.mxu0
  %2621 = vdwg.mxu0
  %2622 = vmatprep.subr.bf16.mxu0 0
  %2623 = vmatpush1.bf16.msra.mxu0 %v2532
  %2624 = vmatprep.subr.bf16.mxu0 0
  %2625 = vmatpush1.bf16.msra.mxu0 %v2531
  %2626 = vmatprep.subr.bf16.mxu0 0
  %2627 = vmatpush1.bf16.msra.mxu0 %v2530
  %2628 = vmatprep.subr.bf16.mxu0 0
  %2629 = vmatpush1.bf16.msra.mxu0 %v2529
  %2630 = vmatprep.subr.bf16.mxu0 0
  %2631 = vmatpush1.bf16.msra.mxu0 %v2528
  %2632 = vmatprep.subr.bf16.mxu0 0
  %2633 = vmatpush1.bf16.msra.mxu0 %v2527
  %2634 = vmatprep.subr.bf16.mxu0 0
  %2635 = vmatpush1.bf16.msra.mxu0 %v2526
  %2636 = vmatprep.subr.bf16.mxu0 0
  %2637 = vmatpush1.bf16.msra.mxu0 %v2525
  %2638 = vmatprep.subr.bf16.mxu0 0
  %2639 = vmatpush2.bf16.msra.mxu0 %v2540
  %2640 = vmatprep.subr.bf16.mxu0 0
  %2641 = vmatpush2.bf16.msra.mxu0 %v2539
  %2642 = vmatprep.subr.bf16.mxu0 0
  %2643 = vmatpush2.bf16.msra.mxu0 %v2538
  %2644 = vmatprep.subr.bf16.mxu0 0
  %2645 = vmatpush2.bf16.msra.mxu0 %v2537
  %2646 = vmatprep.subr.bf16.mxu0 0
  %2647 = vmatpush2.bf16.msra.mxu0 %v2536
  %2648 = vmatprep.subr.bf16.mxu0 0
  %2649 = vmatpush2.bf16.msra.mxu0 %v2535
  %2650 = vmatprep.subr.bf16.mxu0 0
  %2651 = vmatpush2.bf16.msra.mxu0 %v2534
  %2652 = vmatprep.subr.bf16.mxu0 0
  %2653 = vmatpush2.bf16.msra.mxu0 %v2533
  %2654 = vmatprep.mubr.bf16.mxu0 %v2312
  %2655 = vmatmul.mubr.bf16.gmra.mxu0 %v2311
  %v2656 = vpop.f32.mrf.mxu0
  %v2657 = vadd.f32 %v2608, %v2656
  %v2658 = vpop.f32.mrf.mxu0
  %v2659 = vpop.f32.mrf.mxu0
  %v2660 = vadd.f32 %v2611, %v2659
  %v2661 = vpop.f32.mrf.mxu0
  %2662 = vmatprep.mubr.bf16.mxu0 %v2316
  %2663 = vmatmul.mubr.bf16.gmra.mxu0 %v2315
  %v2664 = vpop.f32.mrf.mxu0
  %v2665 = vadd.f32 %v2616, %v2664
  %v2666 = vpop.f32.mrf.mxu0
  %v2667 = vpop.f32.mrf.mxu0
  %v2668 = vadd.f32 %v2619, %v2667
  %v2669 = vpop.f32.mrf.mxu0
  %2670 = vdwg.mxu0
  %v2735 = vunpack.c.l.b16 %v2053
  %v2736 = vunpack.c.l.b16 %v2054
  %v2737 = vunpack.c.l.b16 %v2055
  %v2738 = vunpack.c.l.b16 %v2056
  %v2739 = vunpack.c.l.b16 %v2057
  %v2740 = vunpack.c.l.b16 %v2058
  %v2741 = vunpack.c.l.b16 %v2059
  %v2742 = vunpack.c.l.b16 %v2060
  %v2743 = vunpack.c.l.b16 %v2061
  %v2744 = vunpack.c.l.b16 %v2062
  %v2745 = vunpack.c.l.b16 %v2063
  %v2746 = vunpack.c.l.b16 %v2064
  %v2747 = vunpack.c.l.b16 %v2065
  %v2748 = vunpack.c.l.b16 %v2066
  %v2749 = vunpack.c.l.b16 %v2067
  %v2750 = vunpack.c.l.b16 %v2068
  %v2751 = vunpack.c.l.b16 %v2069
  %v2752 = vunpack.c.l.b16 %v2070
  %v2753 = vunpack.c.l.b16 %v2071
  %v2754 = vunpack.c.l.b16 %v2072
  %v2755 = vunpack.c.l.b16 %v2073
  %v2756 = vunpack.c.l.b16 %v2074
  %v2757 = vunpack.c.l.b16 %v2075
  %v2758 = vunpack.c.l.b16 %v2076
  %v2759 = vunpack.c.l.b16 %v2077
  %v2760 = vunpack.c.l.b16 %v2078
  %v2761 = vunpack.c.l.b16 %v2079
  %v2762 = vunpack.c.l.b16 %v2080
  %v2763 = vunpack.c.l.b16 %v2081
  %v2764 = vunpack.c.l.b16 %v2082
  %v2765 = vunpack.c.l.b16 %v2083
  %v2766 = vunpack.c.l.b16 %v2084
  %v2767 = vunpack.c.l.b16 %v2085
  %v2768 = vunpack.c.l.b16 %v2086
  %v2769 = vunpack.c.l.b16 %v2087
  %v2770 = vunpack.c.l.b16 %v2088
  %v2771 = vunpack.c.l.b16 %v2089
  %v2772 = vunpack.c.l.b16 %v2090
  %v2773 = vunpack.c.l.b16 %v2091
  %v2774 = vunpack.c.l.b16 %v2092
  %v2775 = vunpack.c.l.b16 %v2093
  %v2776 = vunpack.c.l.b16 %v2094
  %v2777 = vunpack.c.l.b16 %v2095
  %v2778 = vunpack.c.l.b16 %v2096
  %v2779 = vunpack.c.l.b16 %v2097
  %v2780 = vunpack.c.l.b16 %v2098
  %v2781 = vunpack.c.l.b16 %v2099
  %v2782 = vunpack.c.l.b16 %v2100
  %v2783 = vunpack.c.l.b16 %v2101
  %v2784 = vunpack.c.l.b16 %v2102
  %v2785 = vunpack.c.l.b16 %v2103
  %v2786 = vunpack.c.l.b16 %v2104
  %v2787 = vunpack.c.l.b16 %v2105
  %v2788 = vunpack.c.l.b16 %v2106
  %v2789 = vunpack.c.l.b16 %v2107
  %v2790 = vunpack.c.l.b16 %v2108
  %v2791 = vunpack.c.l.b16 %v2109
  %v2792 = vunpack.c.l.b16 %v2110
  %v2793 = vunpack.c.l.b16 %v2111
  %v2794 = vunpack.c.l.b16 %v2112
  %v2795 = vunpack.c.l.b16 %v2113
  %v2796 = vunpack.c.l.b16 %v2114
  %v2797 = vunpack.c.l.b16 %v2115
  %v2798 = vunpack.c.l.b16 %v2116
  %v2799 = vpack.c.b16 %v2736, %v2735
  %v2800 = vpack.c.b16 %v2738, %v2737
  %v2801 = vpack.c.b16 %v2740, %v2739
  %v2802 = vpack.c.b16 %v2742, %v2741
  %v2803 = vpack.c.b16 %v2744, %v2743
  %v2804 = vpack.c.b16 %v2746, %v2745
  %v2805 = vpack.c.b16 %v2748, %v2747
  %v2806 = vpack.c.b16 %v2750, %v2749
  %v2807 = vpack.c.b16 %v2752, %v2751
  %v2808 = vpack.c.b16 %v2754, %v2753
  %v2809 = vpack.c.b16 %v2756, %v2755
  %v2810 = vpack.c.b16 %v2758, %v2757
  %v2811 = vpack.c.b16 %v2760, %v2759
  %v2812 = vpack.c.b16 %v2762, %v2761
  %v2813 = vpack.c.b16 %v2764, %v2763
  %v2814 = vpack.c.b16 %v2766, %v2765
  %v2815 = vpack.c.b16 %v2768, %v2767
  %v2816 = vpack.c.b16 %v2770, %v2769
  %v2817 = vpack.c.b16 %v2772, %v2771
  %v2818 = vpack.c.b16 %v2774, %v2773
  %v2819 = vpack.c.b16 %v2776, %v2775
  %v2820 = vpack.c.b16 %v2778, %v2777
  %v2821 = vpack.c.b16 %v2780, %v2779
  %v2822 = vpack.c.b16 %v2782, %v2781
  %v2823 = vpack.c.b16 %v2784, %v2783
  %v2824 = vpack.c.b16 %v2786, %v2785
  %v2825 = vpack.c.b16 %v2788, %v2787
  %v2826 = vpack.c.b16 %v2790, %v2789
  %v2827 = vpack.c.b16 %v2792, %v2791
  %v2828 = vpack.c.b16 %v2794, %v2793
  %v2829 = vpack.c.b16 %v2796, %v2795
  %v2830 = vpack.c.b16 %v2798, %v2797
  %2863 = vmatprep.subr.bf16.mxu0 0
  %2864 = vmatpush1.bf16.msra.mxu0 %v2806
  %2865 = vmatprep.subr.bf16.mxu0 0
  %2866 = vmatpush1.bf16.msra.mxu0 %v2805
  %2867 = vmatprep.subr.bf16.mxu0 0
  %2868 = vmatpush1.bf16.msra.mxu0 %v2804
  %2869 = vmatprep.subr.bf16.mxu0 0
  %2870 = vmatpush1.bf16.msra.mxu0 %v2803
  %2871 = vmatprep.subr.bf16.mxu0 0
  %2872 = vmatpush1.bf16.msra.mxu0 %v2802
  %2873 = vmatprep.subr.bf16.mxu0 0
  %2874 = vmatpush1.bf16.msra.mxu0 %v2801
  %2875 = vmatprep.subr.bf16.mxu0 0
  %2876 = vmatpush1.bf16.msra.mxu0 %v2800
  %2877 = vmatprep.subr.bf16.mxu0 0
  %2878 = vmatpush1.bf16.msra.mxu0 %v2799
  %2879 = vmatprep.subr.bf16.mxu0 0
  %2880 = vmatpush2.bf16.msra.mxu0 %v2814
  %2881 = vmatprep.subr.bf16.mxu0 0
  %2882 = vmatpush2.bf16.msra.mxu0 %v2813
  %2883 = vmatprep.subr.bf16.mxu0 0
  %2884 = vmatpush2.bf16.msra.mxu0 %v2812
  %2885 = vmatprep.subr.bf16.mxu0 0
  %2886 = vmatpush2.bf16.msra.mxu0 %v2811
  %2887 = vmatprep.subr.bf16.mxu0 0
  %2888 = vmatpush2.bf16.msra.mxu0 %v2810
  %2889 = vmatprep.subr.bf16.mxu0 0
  %2890 = vmatpush2.bf16.msra.mxu0 %v2809
  %2891 = vmatprep.subr.bf16.mxu0 0
  %2892 = vmatpush2.bf16.msra.mxu0 %v2808
  %2893 = vmatprep.subr.bf16.mxu0 0
  %2894 = vmatpush2.bf16.msra.mxu0 %v2807
  %2895 = vmatprep.mubr.bf16.mxu0 %v2046
  %2896 = vmatmul.mubr.bf16.gmra.mxu0 %v2045
  %v2897 = vpop.f32.mrf.mxu0
  %v2898 = vadd.f32 %v2657, %v2897
  %v2899 = vpop.f32.mrf.mxu0
  %v2900 = vpop.f32.mrf.mxu0
  %v2901 = vadd.f32 %v2660, %v2900
  %v2902 = vpop.f32.mrf.mxu0
  %2903 = vmatprep.mubr.bf16.mxu0 %v2050
  %2904 = vmatmul.mubr.bf16.gmra.mxu0 %v2049
  %v2905 = vpop.f32.mrf.mxu0
  %v2906 = vadd.f32 %v2665, %v2905
  %v2907 = vpop.f32.mrf.mxu0
  %v2908 = vpop.f32.mrf.mxu0
  %v2909 = vadd.f32 %v2668, %v2908
  %v2910 = vpop.f32.mrf.mxu0
  %2911 = vdwg.mxu0
  %2912 = vmatprep.subr.bf16.mxu0 0
  %2913 = vmatpush1.bf16.msra.mxu0 %v2822
  %2914 = vmatprep.subr.bf16.mxu0 0
  %2915 = vmatpush1.bf16.msra.mxu0 %v2821
  %2916 = vmatprep.subr.bf16.mxu0 0
  %2917 = vmatpush1.bf16.msra.mxu0 %v2820
  %2918 = vmatprep.subr.bf16.mxu0 0
  %2919 = vmatpush1.bf16.msra.mxu0 %v2819
  %2920 = vmatprep.subr.bf16.mxu0 0
  %2921 = vmatpush1.bf16.msra.mxu0 %v2818
  %2922 = vmatprep.subr.bf16.mxu0 0
  %2923 = vmatpush1.bf16.msra.mxu0 %v2817
  %2924 = vmatprep.subr.bf16.mxu0 0
  %2925 = vmatpush1.bf16.msra.mxu0 %v2816
  %2926 = vmatprep.subr.bf16.mxu0 0
  %2927 = vmatpush1.bf16.msra.mxu0 %v2815
  %2928 = vmatprep.subr.bf16.mxu0 0
  %2929 = vmatpush2.bf16.msra.mxu0 %v2830
  %2930 = vmatprep.subr.bf16.mxu0 0
  %2931 = vmatpush2.bf16.msra.mxu0 %v2829
  %2932 = vmatprep.subr.bf16.mxu0 0
  %2933 = vmatpush2.bf16.msra.mxu0 %v2828
  %2934 = vmatprep.subr.bf16.mxu0 0
  %2935 = vmatpush2.bf16.msra.mxu0 %v2827
  %2936 = vmatprep.subr.bf16.mxu0 0
  %2937 = vmatpush2.bf16.msra.mxu0 %v2826
  %2938 = vmatprep.subr.bf16.mxu0 0
  %2939 = vmatpush2.bf16.msra.mxu0 %v2825
  %2940 = vmatprep.subr.bf16.mxu0 0
  %2941 = vmatpush2.bf16.msra.mxu0 %v2824
  %2942 = vmatprep.subr.bf16.mxu0 0
  %2943 = vmatpush2.bf16.msra.mxu0 %v2823
  %2944 = vmatprep.mubr.bf16.mxu0 %v2048
  %2945 = vmatmul.mubr.bf16.gmra.mxu0 %v2047
  %v2946 = vpop.f32.mrf.mxu0
  %v2947 = vadd.f32 %v2898, %v2946
  %v2948 = vpop.f32.mrf.mxu0
  %v2949 = vpop.f32.mrf.mxu0
  %v2950 = vadd.f32 %v2901, %v2949
  %v2951 = vpop.f32.mrf.mxu0
  %2952 = vmatprep.mubr.bf16.mxu0 %v2052
  %2953 = vmatmul.mubr.bf16.gmra.mxu0 %v2051
  %v2954 = vpop.f32.mrf.mxu0
  %v2955 = vadd.f32 %v2906, %v2954
  %v2956 = vpop.f32.mrf.mxu0
  %v2957 = vpop.f32.mrf.mxu0
  %v2958 = vadd.f32 %v2909, %v2957
  %v2959 = vpop.f32.mrf.mxu0
  %2960 = vdwg.mxu0
  %v2961 = vld [vmem:[%s2 + $0x20] sm:$0xff]
  %v2962 = vld [vmem:[%s2 + $0x28] sm:$0xff]
  %v2963 = vld [vmem:[%s2 + $0x60] sm:$0xff]
  %v2964 = vld [vmem:[%s2 + $0x68] sm:$0xff]
  %v2965 = vld [vmem:[%s2 + $0xa0] sm:$0xff]
  %v2966 = vld [vmem:[%s2 + $0xa8] sm:$0xff]
  %v2967 = vld [vmem:[%s2 + $0xe0] sm:$0xff]
  %v2968 = vld [vmem:[%s2 + $0xe8] sm:$0xff]
  %v2969 = vld [vmem:[%s3 + $0x8] sm:$0xf]
  %v2971 = vlaneseq
  %v2972 = vshrl.u32 %v2971, 7
  %v2973 = vsub.s32 0, %v2972
  %v2974 = vrot.slane %v2969, %v2973
  %v2975 = vlaneseq
  %v2976 = vshrl.u32 %v2975, 7
  %v2977 = vsub.s32 1, %v2976
  %v2978 = vrot.slane %v2969, %v2977
  %v2979 = vlaneseq
  %v2980 = vshrl.u32 %v2979, 7
  %v2981 = vsub.s32 2, %v2980
  %v2982 = vrot.slane %v2969, %v2981
  %v2983 = vlaneseq
  %v2984 = vshrl.u32 %v2983, 7
  %v2985 = vsub.s32 3, %v2984
  %v2986 = vrot.slane %v2969, %v2985
  %v2999 = vunpack.c.l.b16 %v2961
  %v3000 = vunpack.c.h.b16 %v2961
  %v3001 = vunpack.c.l.b16 %v2962
  %v3002 = vunpack.c.h.b16 %v2962
  %v3003 = vunpack.c.l.b16 %v2963
  %v3004 = vunpack.c.h.b16 %v2963
  %v3005 = vunpack.c.l.b16 %v2964
  %v3006 = vunpack.c.h.b16 %v2964
  %v3007 = vunpack.c.l.b16 %v2965
  %v3008 = vunpack.c.h.b16 %v2965
  %v3009 = vunpack.c.l.b16 %v2966
  %v3010 = vunpack.c.h.b16 %v2966
  %v3011 = vunpack.c.l.b16 %v2967
  %v3012 = vunpack.c.h.b16 %v2967
  %v3013 = vunpack.c.l.b16 %v2968
  %v3014 = vunpack.c.h.b16 %v2968
  %v3015 = vpack.c.b16 %v3003, %v2999
  %v3016 = vpack.c.b16 %v3004, %v3000
  %v3017 = vpack.c.b16 %v3005, %v3001
  %v3018 = vpack.c.b16 %v3006, %v3002
  %v3019 = vpack.c.b16 %v3011, %v3007
  %v3020 = vpack.c.b16 %v3012, %v3008
  %v3021 = vpack.c.b16 %v3013, %v3009
  %v3022 = vpack.c.b16 %v3014, %v3010
  %3031 = vmatprep.subr.bf16.mxu0 0
  %3032 = vmatpush1.bf16.msra.mxu0 0
  %3033 = vmatprep.subr.bf16.mxu0 0
  %3034 = vmatpush1.bf16.msra.mxu0 0
  %3035 = vmatprep.subr.bf16.mxu0 0
  %3036 = vmatpush1.bf16.msra.mxu0 0
  %3037 = vmatprep.subr.bf16.mxu0 0
  %3038 = vmatpush1.bf16.msra.mxu0 0
  %3039 = vmatprep.subr.bf16.mxu0 0
  %3040 = vmatpush1.bf16.msra.mxu0 0
  %3041 = vmatprep.subr.bf16.mxu0 0
  %3042 = vmatpush1.bf16.msra.mxu0 0
  %3043 = vmatprep.subr.bf16.mxu0 %v3020
  %3044 = vmatpush1.bf16.msra.mxu0 %v3019
  %3045 = vmatprep.subr.bf16.mxu0 %v3016
  %3046 = vmatpush1.bf16.msra.mxu0 %v3015
  %3047 = vmatprep.subr.bf16.mxu0 0
  %3048 = vmatpush2.bf16.msra.mxu0 0
  %3049 = vmatprep.subr.bf16.mxu0 0
  %3050 = vmatpush2.bf16.msra.mxu0 0
  %3051 = vmatprep.subr.bf16.mxu0 0
  %3052 = vmatpush2.bf16.msra.mxu0 0
  %3053 = vmatprep.subr.bf16.mxu0 0
  %3054 = vmatpush2.bf16.msra.mxu0 0
  %3055 = vmatprep.subr.bf16.mxu0 0
  %3056 = vmatpush2.bf16.msra.mxu0 0
  %3057 = vmatprep.subr.bf16.mxu0 0
  %3058 = vmatpush2.bf16.msra.mxu0 0
  %3059 = vmatprep.subr.bf16.mxu0 0
  %3060 = vmatpush2.bf16.msra.mxu0 0
  %3061 = vmatprep.subr.bf16.mxu0 0
  %3062 = vmatpush2.bf16.msra.mxu0 0
  %3063 = vmatprep.mubr.bf16.mxu0 0
  %3064 = vmatmul.mubr.bf16.gmra.mxu0 %v1918
  %v3065 = vpop.f32.mrf.mxu0
  %v3066 = vadd.f32 %v2974, %v3065
  %v3067 = vpop.f32.mrf.mxu0
  %v3068 = vadd.f32 %v2978, %v3067
  %v3069 = vpop.f32.mrf.mxu0
  %v3070 = vadd.f32 %v2974, %v3069
  %v3071 = vpop.f32.mrf.mxu0
  %v3072 = vadd.f32 %v2978, %v3071
  %3073 = vmatprep.mubr.bf16.mxu0 0
  %3074 = vmatmul.mubr.bf16.gmra.mxu0 %v1921
  %v3075 = vpop.f32.mrf.mxu0
  %v3076 = vadd.f32 %v2974, %v3075
  %v3077 = vpop.f32.mrf.mxu0
  %v3078 = vadd.f32 %v2978, %v3077
  %v3079 = vpop.f32.mrf.mxu0
  %v3080 = vadd.f32 %v2974, %v3079
  %v3081 = vpop.f32.mrf.mxu0
  %v3082 = vadd.f32 %v2978, %v3081
  %3083 = vdwg.mxu0
  %3084 = vmatprep.subr.bf16.mxu0 0
  %3085 = vmatpush1.bf16.msra.mxu0 0
  %3086 = vmatprep.subr.bf16.mxu0 0
  %3087 = vmatpush1.bf16.msra.mxu0 0
  %3088 = vmatprep.subr.bf16.mxu0 0
  %3089 = vmatpush1.bf16.msra.mxu0 0
  %3090 = vmatprep.subr.bf16.mxu0 0
  %3091 = vmatpush1.bf16.msra.mxu0 0
  %3092 = vmatprep.subr.bf16.mxu0 0
  %3093 = vmatpush1.bf16.msra.mxu0 0
  %3094 = vmatprep.subr.bf16.mxu0 0
  %3095 = vmatpush1.bf16.msra.mxu0 0
  %3096 = vmatprep.subr.bf16.mxu0 %v3022
  %3097 = vmatpush1.bf16.msra.mxu0 %v3021
  %3098 = vmatprep.subr.bf16.mxu0 %v3018
  %3099 = vmatpush1.bf16.msra.mxu0 %v3017
  %3100 = vmatprep.subr.bf16.mxu0 0
  %3101 = vmatpush2.bf16.msra.mxu0 0
  %3102 = vmatprep.subr.bf16.mxu0 0
  %3103 = vmatpush2.bf16.msra.mxu0 0
  %3104 = vmatprep.subr.bf16.mxu0 0
  %3105 = vmatpush2.bf16.msra.mxu0 0
  %3106 = vmatprep.subr.bf16.mxu0 0
  %3107 = vmatpush2.bf16.msra.mxu0 0
  %3108 = vmatprep.subr.bf16.mxu0 0
  %3109 = vmatpush2.bf16.msra.mxu0 0
  %3110 = vmatprep.subr.bf16.mxu0 0
  %3111 = vmatpush2.bf16.msra.mxu0 0
  %3112 = vmatprep.subr.bf16.mxu0 0
  %3113 = vmatpush2.bf16.msra.mxu0 0
  %3114 = vmatprep.subr.bf16.mxu0 0
  %3115 = vmatpush2.bf16.msra.mxu0 0
  %3116 = vmatprep.mubr.bf16.mxu0 0
  %3117 = vmatmul.mubr.bf16.gmra.mxu0 %v1918
  %v3118 = vpop.f32.mrf.mxu0
  %v3119 = vadd.f32 %v2982, %v3118
  %v3120 = vpop.f32.mrf.mxu0
  %v3121 = vadd.f32 %v2986, %v3120
  %v3122 = vpop.f32.mrf.mxu0
  %v3123 = vadd.f32 %v2982, %v3122
  %v3124 = vpop.f32.mrf.mxu0
  %v3125 = vadd.f32 %v2986, %v3124
  %3126 = vmatprep.mubr.bf16.mxu0 0
  %3127 = vmatmul.mubr.bf16.gmra.mxu0 %v1921
  %v3128 = vpop.f32.mrf.mxu0
  %v3129 = vadd.f32 %v2982, %v3128
  %v3130 = vpop.f32.mrf.mxu0
  %v3131 = vadd.f32 %v2986, %v3130
  %v3132 = vpop.f32.mrf.mxu0
  %v3133 = vadd.f32 %v2982, %v3132
  %v3134 = vpop.f32.mrf.mxu0
  %v3135 = vadd.f32 %v2986, %v3134
  %3136 = vdwg.mxu0
  %v3137 = vmax.f32 %v3066, 0.0
  %v3138 = vmax.f32 %v3068, 0.0
  %v3139 = vmax.f32 %v3119, 0.0
  %v3140 = vmax.f32 %v3121, 0.0
  %v3141 = vmax.f32 %v3070, 0.0
  %v3142 = vmax.f32 %v3072, 0.0
  %v3143 = vmax.f32 %v3123, 0.0
  %v3144 = vmax.f32 %v3125, 0.0
  %v3145 = vmax.f32 %v3076, 0.0
  %v3146 = vmax.f32 %v3078, 0.0
  %v3147 = vmax.f32 %v3129, 0.0
  %v3148 = vmax.f32 %v3131, 0.0
  %v3149 = vmax.f32 %v3080, 0.0
  %v3150 = vmax.f32 %v3082, 0.0
  %v3151 = vmax.f32 %v3133, 0.0
  %v3152 = vmax.f32 %v3135, 0.0
  %v3153 = vpack.c.bf16 %v3141, %v3137
  %v3154 = vpack.c.bf16 %v3142, %v3138
  %v3155 = vpack.c.bf16 %v3143, %v3139
  %v3156 = vpack.c.bf16 %v3144, %v3140
  %v3157 = vpack.c.bf16 %v3149, %v3145
  %v3158 = vpack.c.bf16 %v3150, %v3146
  %v3159 = vpack.c.bf16 %v3151, %v3147
  %v3160 = vpack.c.bf16 %v3152, %v3148
  %v3161 = vld [vmem:[%s4 + $0x200] sm:$0xf]
  %v3162 = vld [vmem:[%s4 + $0x204] sm:$0xf]
  %v3163 = vld [vmem:[%s4 + $0x208] sm:$0xf]
  %v3164 = vld [vmem:[%s4 + $0x20c] sm:$0xf]
  %v3165 = vld [vmem:[%s4 + $0x210] sm:$0xf]
  %v3166 = vld [vmem:[%s4 + $0x214] sm:$0xf]
  %v3167 = vld [vmem:[%s4 + $0x218] sm:$0xf]
  %v3168 = vld [vmem:[%s4 + $0x21c] sm:$0xf]
  %v3169 = vld [vmem:[%s4 + $0x220] sm:$0xf]
  %v3170 = vld [vmem:[%s4 + $0x224] sm:$0xf]
  %v3171 = vld [vmem:[%s4 + $0x228] sm:$0xf]
  %v3172 = vld [vmem:[%s4 + $0x22c] sm:$0xf]
  %v3173 = vld [vmem:[%s4 + $0x230] sm:$0xf]
  %v3174 = vld [vmem:[%s4 + $0x234] sm:$0xf]
  %v3175 = vld [vmem:[%s4 + $0x238] sm:$0xf]
  %v3176 = vld [vmem:[%s4 + $0x23c] sm:$0xf]
  %v3177 = vld [vmem:[%s4 + $0x240] sm:$0xf]
  %v3178 = vld [vmem:[%s4 + $0x244] sm:$0xf]
  %v3179 = vld [vmem:[%s4 + $0x248] sm:$0xf]
  %v3180 = vld [vmem:[%s4 + $0x24c] sm:$0xf]
  %v3181 = vld [vmem:[%s4 + $0x250] sm:$0xf]
  %v3182 = vld [vmem:[%s4 + $0x254] sm:$0xf]
  %v3183 = vld [vmem:[%s4 + $0x258] sm:$0xf]
  %v3184 = vld [vmem:[%s4 + $0x25c] sm:$0xf]
  %v3185 = vld [vmem:[%s4 + $0x260] sm:$0xf]
  %v3186 = vld [vmem:[%s4 + $0x264] sm:$0xf]
  %v3187 = vld [vmem:[%s4 + $0x268] sm:$0xf]
  %v3188 = vld [vmem:[%s4 + $0x26c] sm:$0xf]
  %v3189 = vld [vmem:[%s4 + $0x270] sm:$0xf]
  %v3190 = vld [vmem:[%s4 + $0x274] sm:$0xf]
  %v3191 = vld [vmem:[%s4 + $0x278] sm:$0xf]
  %v3192 = vld [vmem:[%s4 + $0x27c] sm:$0xf]
  %v3193 = vld [vmem:[%s4 + $0x280] sm:$0xf]
  %v3194 = vld [vmem:[%s4 + $0x284] sm:$0xf]
  %v3195 = vld [vmem:[%s4 + $0x288] sm:$0xf]
  %v3196 = vld [vmem:[%s4 + $0x28c] sm:$0xf]
  %v3197 = vld [vmem:[%s4 + $0x290] sm:$0xf]
  %v3198 = vld [vmem:[%s4 + $0x294] sm:$0xf]
  %v3199 = vld [vmem:[%s4 + $0x298] sm:$0xf]
  %v3200 = vld [vmem:[%s4 + $0x29c] sm:$0xf]
  %v3201 = vld [vmem:[%s4 + $0x2a0] sm:$0xf]
  %v3202 = vld [vmem:[%s4 + $0x2a4] sm:$0xf]
  %v3203 = vld [vmem:[%s4 + $0x2a8] sm:$0xf]
  %v3204 = vld [vmem:[%s4 + $0x2ac] sm:$0xf]
  %v3205 = vld [vmem:[%s4 + $0x2b0] sm:$0xf]
  %v3206 = vld [vmem:[%s4 + $0x2b4] sm:$0xf]
  %v3207 = vld [vmem:[%s4 + $0x2b8] sm:$0xf]
  %v3208 = vld [vmem:[%s4 + $0x2bc] sm:$0xf]
  %v3209 = vld [vmem:[%s4 + $0x2c0] sm:$0xf]
  %v3210 = vld [vmem:[%s4 + $0x2c4] sm:$0xf]
  %v3211 = vld [vmem:[%s4 + $0x2c8] sm:$0xf]
  %v3212 = vld [vmem:[%s4 + $0x2cc] sm:$0xf]
  %v3213 = vld [vmem:[%s4 + $0x2d0] sm:$0xf]
  %v3214 = vld [vmem:[%s4 + $0x2d4] sm:$0xf]
  %v3215 = vld [vmem:[%s4 + $0x2d8] sm:$0xf]
  %v3216 = vld [vmem:[%s4 + $0x2dc] sm:$0xf]
  %v3217 = vld [vmem:[%s4 + $0x2e0] sm:$0xf]
  %v3218 = vld [vmem:[%s4 + $0x2e4] sm:$0xf]
  %v3219 = vld [vmem:[%s4 + $0x2e8] sm:$0xf]
  %v3220 = vld [vmem:[%s4 + $0x2ec] sm:$0xf]
  %v3221 = vld [vmem:[%s4 + $0x2f0] sm:$0xf]
  %v3222 = vld [vmem:[%s4 + $0x2f4] sm:$0xf]
  %v3223 = vld [vmem:[%s4 + $0x2f8] sm:$0xf]
  %v3224 = vld [vmem:[%s4 + $0x2fc] sm:$0xf]
  %v3289 = vunpack.c.l.b16 %v3161
  %v3290 = vunpack.c.l.b16 %v3162
  %v3291 = vunpack.c.l.b16 %v3163
  %v3292 = vunpack.c.l.b16 %v3164
  %v3293 = vunpack.c.l.b16 %v3165
  %v3294 = vunpack.c.l.b16 %v3166
  %v3295 = vunpack.c.l.b16 %v3167
  %v3296 = vunpack.c.l.b16 %v3168
  %v3297 = vunpack.c.l.b16 %v3169
  %v3298 = vunpack.c.l.b16 %v3170
  %v3299 = vunpack.c.l.b16 %v3171
  %v3300 = vunpack.c.l.b16 %v3172
  %v3301 = vunpack.c.l.b16 %v3173
  %v3302 = vunpack.c.l.b16 %v3174
  %v3303 = vunpack.c.l.b16 %v3175
  %v3304 = vunpack.c.l.b16 %v3176
  %v3305 = vunpack.c.l.b16 %v3177
  %v3306 = vunpack.c.l.b16 %v3178
  %v3307 = vunpack.c.l.b16 %v3179
  %v3308 = vunpack.c.l.b16 %v3180
  %v3309 = vunpack.c.l.b16 %v3181
  %v3310 = vunpack.c.l.b16 %v3182
  %v3311 = vunpack.c.l.b16 %v3183
  %v3312 = vunpack.c.l.b16 %v3184
  %v3313 = vunpack.c.l.b16 %v3185
  %v3314 = vunpack.c.l.b16 %v3186
  %v3315 = vunpack.c.l.b16 %v3187
  %v3316 = vunpack.c.l.b16 %v3188
  %v3317 = vunpack.c.l.b16 %v3189
  %v3318 = vunpack.c.l.b16 %v3190
  %v3319 = vunpack.c.l.b16 %v3191
  %v3320 = vunpack.c.l.b16 %v3192
  %v3321 = vunpack.c.l.b16 %v3193
  %v3322 = vunpack.c.l.b16 %v3194
  %v3323 = vunpack.c.l.b16 %v3195
  %v3324 = vunpack.c.l.b16 %v3196
  %v3325 = vunpack.c.l.b16 %v3197
  %v3326 = vunpack.c.l.b16 %v3198
  %v3327 = vunpack.c.l.b16 %v3199
  %v3328 = vunpack.c.l.b16 %v3200
  %v3329 = vunpack.c.l.b16 %v3201
  %v3330 = vunpack.c.l.b16 %v3202
  %v3331 = vunpack.c.l.b16 %v3203
  %v3332 = vunpack.c.l.b16 %v3204
  %v3333 = vunpack.c.l.b16 %v3205
  %v3334 = vunpack.c.l.b16 %v3206
  %v3335 = vunpack.c.l.b16 %v3207
  %v3336 = vunpack.c.l.b16 %v3208
  %v3337 = vunpack.c.l.b16 %v3209
  %v3338 = vunpack.c.l.b16 %v3210
  %v3339 = vunpack.c.l.b16 %v3211
  %v3340 = vunpack.c.l.b16 %v3212
  %v3341 = vunpack.c.l.b16 %v3213
  %v3342 = vunpack.c.l.b16 %v3214
  %v3343 = vunpack.c.l.b16 %v3215
  %v3344 = vunpack.c.l.b16 %v3216
  %v3345 = vunpack.c.l.b16 %v3217
  %v3346 = vunpack.c.l.b16 %v3218
  %v3347 = vunpack.c.l.b16 %v3219
  %v3348 = vunpack.c.l.b16 %v3220
  %v3349 = vunpack.c.l.b16 %v3221
  %v3350 = vunpack.c.l.b16 %v3222
  %v3351 = vunpack.c.l.b16 %v3223
  %v3352 = vunpack.c.l.b16 %v3224
  %v3353 = vpack.c.b16 %v3290, %v3289
  %v3354 = vpack.c.b16 %v3292, %v3291
  %v3355 = vpack.c.b16 %v3294, %v3293
  %v3356 = vpack.c.b16 %v3296, %v3295
  %v3357 = vpack.c.b16 %v3298, %v3297
  %v3358 = vpack.c.b16 %v3300, %v3299
  %v3359 = vpack.c.b16 %v3302, %v3301
  %v3360 = vpack.c.b16 %v3304, %v3303
  %v3361 = vpack.c.b16 %v3306, %v3305
  %v3362 = vpack.c.b16 %v3308, %v3307
  %v3363 = vpack.c.b16 %v3310, %v3309
  %v3364 = vpack.c.b16 %v3312, %v3311
  %v3365 = vpack.c.b16 %v3314, %v3313
  %v3366 = vpack.c.b16 %v3316, %v3315
  %v3367 = vpack.c.b16 %v3318, %v3317
  %v3368 = vpack.c.b16 %v3320, %v3319
  %v3369 = vpack.c.b16 %v3322, %v3321
  %v3370 = vpack.c.b16 %v3324, %v3323
  %v3371 = vpack.c.b16 %v3326, %v3325
  %v3372 = vpack.c.b16 %v3328, %v3327
  %v3373 = vpack.c.b16 %v3330, %v3329
  %v3374 = vpack.c.b16 %v3332, %v3331
  %v3375 = vpack.c.b16 %v3334, %v3333
  %v3376 = vpack.c.b16 %v3336, %v3335
  %v3377 = vpack.c.b16 %v3338, %v3337
  %v3378 = vpack.c.b16 %v3340, %v3339
  %v3379 = vpack.c.b16 %v3342, %v3341
  %v3380 = vpack.c.b16 %v3344, %v3343
  %v3381 = vpack.c.b16 %v3346, %v3345
  %v3382 = vpack.c.b16 %v3348, %v3347
  %v3383 = vpack.c.b16 %v3350, %v3349
  %v3384 = vpack.c.b16 %v3352, %v3351
  %3417 = vmatprep.subr.bf16.mxu0 0
  %3418 = vmatpush1.bf16.msra.mxu0 %v3360
  %3419 = vmatprep.subr.bf16.mxu0 0
  %3420 = vmatpush1.bf16.msra.mxu0 %v3359
  %3421 = vmatprep.subr.bf16.mxu0 0
  %3422 = vmatpush1.bf16.msra.mxu0 %v3358
  %3423 = vmatprep.subr.bf16.mxu0 0
  %3424 = vmatpush1.bf16.msra.mxu0 %v3357
  %3425 = vmatprep.subr.bf16.mxu0 0
  %3426 = vmatpush1.bf16.msra.mxu0 %v3356
  %3427 = vmatprep.subr.bf16.mxu0 0
  %3428 = vmatpush1.bf16.msra.mxu0 %v3355
  %3429 = vmatprep.subr.bf16.mxu0 0
  %3430 = vmatpush1.bf16.msra.mxu0 %v3354
  %3431 = vmatprep.subr.bf16.mxu0 0
  %3432 = vmatpush1.bf16.msra.mxu0 %v3353
  %3433 = vmatprep.subr.bf16.mxu0 0
  %3434 = vmatpush2.bf16.msra.mxu0 %v3368
  %3435 = vmatprep.subr.bf16.mxu0 0
  %3436 = vmatpush2.bf16.msra.mxu0 %v3367
  %3437 = vmatprep.subr.bf16.mxu0 0
  %3438 = vmatpush2.bf16.msra.mxu0 %v3366
  %3439 = vmatprep.subr.bf16.mxu0 0
  %3440 = vmatpush2.bf16.msra.mxu0 %v3365
  %3441 = vmatprep.subr.bf16.mxu0 0
  %3442 = vmatpush2.bf16.msra.mxu0 %v3364
  %3443 = vmatprep.subr.bf16.mxu0 0
  %3444 = vmatpush2.bf16.msra.mxu0 %v3363
  %3445 = vmatprep.subr.bf16.mxu0 0
  %3446 = vmatpush2.bf16.msra.mxu0 %v3362
  %3447 = vmatprep.subr.bf16.mxu0 0
  %3448 = vmatpush2.bf16.msra.mxu0 %v3361
  %3449 = vmatprep.mubr.bf16.mxu0 %v3154
  %3450 = vmatmul.mubr.bf16.gmra.mxu0 %v3153
  %v3451 = vpop.f32.mrf.mxu0
  %v3452 = vadd.f32 0.0, %v3451
  %v3453 = vpop.f32.mrf.mxu0
  %v3454 = vpop.f32.mrf.mxu0
  %v3455 = vadd.f32 0.0, %v3454
  %v3456 = vpop.f32.mrf.mxu0
  %3457 = vmatprep.mubr.bf16.mxu0 %v3158
  %3458 = vmatmul.mubr.bf16.gmra.mxu0 %v3157
  %v3459 = vpop.f32.mrf.mxu0
  %v3460 = vadd.f32 0.0, %v3459
  %v3461 = vpop.f32.mrf.mxu0
  %v3462 = vpop.f32.mrf.mxu0
  %v3463 = vadd.f32 0.0, %v3462
  %v3464 = vpop.f32.mrf.mxu0
  %3465 = vdwg.mxu0
  %3466 = vmatprep.subr.bf16.mxu0 0
  %3467 = vmatpush1.bf16.msra.mxu0 %v3376
  %3468 = vmatprep.subr.bf16.mxu0 0
  %3469 = vmatpush1.bf16.msra.mxu0 %v3375
  %3470 = vmatprep.subr.bf16.mxu0 0
  %3471 = vmatpush1.bf16.msra.mxu0 %v3374
  %3472 = vmatprep.subr.bf16.mxu0 0
  %3473 = vmatpush1.bf16.msra.mxu0 %v3373
  %3474 = vmatprep.subr.bf16.mxu0 0
  %3475 = vmatpush1.bf16.msra.mxu0 %v3372
  %3476 = vmatprep.subr.bf16.mxu0 0
  %3477 = vmatpush1.bf16.msra.mxu0 %v3371
  %3478 = vmatprep.subr.bf16.mxu0 0
  %3479 = vmatpush1.bf16.msra.mxu0 %v3370
  %3480 = vmatprep.subr.bf16.mxu0 0
  %3481 = vmatpush1.bf16.msra.mxu0 %v3369
  %3482 = vmatprep.subr.bf16.mxu0 0
  %3483 = vmatpush2.bf16.msra.mxu0 %v3384
  %3484 = vmatprep.subr.bf16.mxu0 0
  %3485 = vmatpush2.bf16.msra.mxu0 %v3383
  %3486 = vmatprep.subr.bf16.mxu0 0
  %3487 = vmatpush2.bf16.msra.mxu0 %v3382
  %3488 = vmatprep.subr.bf16.mxu0 0
  %3489 = vmatpush2.bf16.msra.mxu0 %v3381
  %3490 = vmatprep.subr.bf16.mxu0 0
  %3491 = vmatpush2.bf16.msra.mxu0 %v3380
  %3492 = vmatprep.subr.bf16.mxu0 0
  %3493 = vmatpush2.bf16.msra.mxu0 %v3379
  %3494 = vmatprep.subr.bf16.mxu0 0
  %3495 = vmatpush2.bf16.msra.mxu0 %v3378
  %3496 = vmatprep.subr.bf16.mxu0 0
  %3497 = vmatpush2.bf16.msra.mxu0 %v3377
  %3498 = vmatprep.mubr.bf16.mxu0 %v3156
  %3499 = vmatmul.mubr.bf16.gmra.mxu0 %v3155
  %v3500 = vpop.f32.mrf.mxu0
  %v3501 = vadd.f32 %v3452, %v3500
  %v3502 = vpop.f32.mrf.mxu0
  %v3503 = vpop.f32.mrf.mxu0
  %v3504 = vadd.f32 %v3455, %v3503
  %v3505 = vpop.f32.mrf.mxu0
  %3506 = vmatprep.mubr.bf16.mxu0 %v3160
  %3507 = vmatmul.mubr.bf16.gmra.mxu0 %v3159
  %v3508 = vpop.f32.mrf.mxu0
  %v3509 = vadd.f32 %v3460, %v3508
  %v3510 = vpop.f32.mrf.mxu0
  %v3511 = vpop.f32.mrf.mxu0
  %v3512 = vadd.f32 %v3463, %v3511
  %v3513 = vpop.f32.mrf.mxu0
  %3514 = vdwg.mxu0
  %v3515 = vadd.f32 %v2947, %v3501
  %v3516 = vadd.f32 %v2950, %v3504
  %v3517 = vadd.f32 %v2955, %v3509
  %v3518 = vadd.f32 %v2958, %v3512
  %v3519 = vld [vmem:[%s2 + $0x30] sm:$0xff]
  %v3520 = vld [vmem:[%s2 + $0x38] sm:$0xff]
  %v3521 = vld [vmem:[%s2 + $0x70] sm:$0xff]
  %v3522 = vld [vmem:[%s2 + $0x78] sm:$0xff]
  %v3523 = vld [vmem:[%s2 + $0xb0] sm:$0xff]
  %v3524 = vld [vmem:[%s2 + $0xb8] sm:$0xff]
  %v3525 = vld [vmem:[%s2 + $0xf0] sm:$0xff]
  %v3526 = vld [vmem:[%s2 + $0xf8] sm:$0xff]
  %v3527 = vld [vmem:[%s3 + $0xc] sm:$0xf]
  %v3529 = vlaneseq
  %v3530 = vshrl.u32 %v3529, 7
  %v3531 = vsub.s32 0, %v3530
  %v3532 = vrot.slane %v3527, %v3531
  %v3533 = vlaneseq
  %v3534 = vshrl.u32 %v3533, 7
  %v3535 = vsub.s32 1, %v3534
  %v3536 = vrot.slane %v3527, %v3535
  %v3537 = vlaneseq
  %v3538 = vshrl.u32 %v3537, 7
  %v3539 = vsub.s32 2, %v3538
  %v3540 = vrot.slane %v3527, %v3539
  %v3541 = vlaneseq
  %v3542 = vshrl.u32 %v3541, 7
  %v3543 = vsub.s32 3, %v3542
  %v3544 = vrot.slane %v3527, %v3543
  %v3557 = vunpack.c.l.b16 %v3519
  %v3558 = vunpack.c.h.b16 %v3519
  %v3559 = vunpack.c.l.b16 %v3520
  %v3560 = vunpack.c.h.b16 %v3520
  %v3561 = vunpack.c.l.b16 %v3521
  %v3562 = vunpack.c.h.b16 %v3521
  %v3563 = vunpack.c.l.b16 %v3522
  %v3564 = vunpack.c.h.b16 %v3522
  %v3565 = vunpack.c.l.b16 %v3523
  %v3566 = vunpack.c.h.b16 %v3523
  %v3567 = vunpack.c.l.b16 %v3524
  %v3568 = vunpack.c.h.b16 %v3524
  %v3569 = vunpack.c.l.b16 %v3525
  %v3570 = vunpack.c.h.b16 %v3525
  %v3571 = vunpack.c.l.b16 %v3526
  %v3572 = vunpack.c.h.b16 %v3526
  %v3573 = vpack.c.b16 %v3561, %v3557
  %v3574 = vpack.c.b16 %v3562, %v3558
  %v3575 = vpack.c.b16 %v3563, %v3559
  %v3576 = vpack.c.b16 %v3564, %v3560
  %v3577 = vpack.c.b16 %v3569, %v3565
  %v3578 = vpack.c.b16 %v3570, %v3566
  %v3579 = vpack.c.b16 %v3571, %v3567
  %v3580 = vpack.c.b16 %v3572, %v3568
  %3589 = vmatprep.subr.bf16.mxu0 0
  %3590 = vmatpush1.bf16.msra.mxu0 0
  %3591 = vmatprep.subr.bf16.mxu0 0
  %3592 = vmatpush1.bf16.msra.mxu0 0
  %3593 = vmatprep.subr.bf16.mxu0 0
  %3594 = vmatpush1.bf16.msra.mxu0 0
  %3595 = vmatprep.subr.bf16.mxu0 0
  %3596 = vmatpush1.bf16.msra.mxu0 0
  %3597 = vmatprep.subr.bf16.mxu0 0
  %3598 = vmatpush1.bf16.msra.mxu0 0
  %3599 = vmatprep.subr.bf16.mxu0 0
  %3600 = vmatpush1.bf16.msra.mxu0 0
  %3601 = vmatprep.subr.bf16.mxu0 %v3578
  %3602 = vmatpush1.bf16.msra.mxu0 %v3577
  %3603 = vmatprep.subr.bf16.mxu0 %v3574
  %3604 = vmatpush1.bf16.msra.mxu0 %v3573
  %3605 = vmatprep.subr.bf16.mxu0 0
  %3606 = vmatpush2.bf16.msra.mxu0 0
  %3607 = vmatprep.subr.bf16.mxu0 0
  %3608 = vmatpush2.bf16.msra.mxu0 0
  %3609 = vmatprep.subr.bf16.mxu0 0
  %3610 = vmatpush2.bf16.msra.mxu0 0
  %3611 = vmatprep.subr.bf16.mxu0 0
  %3612 = vmatpush2.bf16.msra.mxu0 0
  %3613 = vmatprep.subr.bf16.mxu0 0
  %3614 = vmatpush2.bf16.msra.mxu0 0
  %3615 = vmatprep.subr.bf16.mxu0 0
  %3616 = vmatpush2.bf16.msra.mxu0 0
  %3617 = vmatprep.subr.bf16.mxu0 0
  %3618 = vmatpush2.bf16.msra.mxu0 0
  %3619 = vmatprep.subr.bf16.mxu0 0
  %3620 = vmatpush2.bf16.msra.mxu0 0
  %3621 = vmatprep.mubr.bf16.mxu0 0
  %3622 = vmatmul.mubr.bf16.gmra.mxu0 %v1918
  %v3623 = vpop.f32.mrf.mxu0
  %v3624 = vadd.f32 %v3532, %v3623
  %v3625 = vpop.f32.mrf.mxu0
  %v3626 = vadd.f32 %v3536, %v3625
  %v3627 = vpop.f32.mrf.mxu0
  %v3628 = vadd.f32 %v3532, %v3627
  %v3629 = vpop.f32.mrf.mxu0
  %v3630 = vadd.f32 %v3536, %v3629
  %3631 = vmatprep.mubr.bf16.mxu0 0
  %3632 = vmatmul.mubr.bf16.gmra.mxu0 %v1921
  %v3633 = vpop.f32.mrf.mxu0
  %v3634 = vadd.f32 %v3532, %v3633
  %v3635 = vpop.f32.mrf.mxu0
  %v3636 = vadd.f32 %v3536, %v3635
  %v3637 = vpop.f32.mrf.mxu0
  %v3638 = vadd.f32 %v3532, %v3637
  %v3639 = vpop.f32.mrf.mxu0
  %v3640 = vadd.f32 %v3536, %v3639
  %3641 = vdwg.mxu0
  %3642 = vmatprep.subr.bf16.mxu0 0
  %3643 = vmatpush1.bf16.msra.mxu0 0
  %3644 = vmatprep.subr.bf16.mxu0 0
  %3645 = vmatpush1.bf16.msra.mxu0 0
  %3646 = vmatprep.subr.bf16.mxu0 0
  %3647 = vmatpush1.bf16.msra.mxu0 0
  %3648 = vmatprep.subr.bf16.mxu0 0
  %3649 = vmatpush1.bf16.msra.mxu0 0
  %3650 = vmatprep.subr.bf16.mxu0 0
  %3651 = vmatpush1.bf16.msra.mxu0 0
  %3652 = vmatprep.subr.bf16.mxu0 0
  %3653 = vmatpush1.bf16.msra.mxu0 0
  %3654 = vmatprep.subr.bf16.mxu0 %v3580
  %3655 = vmatpush1.bf16.msra.mxu0 %v3579
  %3656 = vmatprep.subr.bf16.mxu0 %v3576
  %3657 = vmatpush1.bf16.msra.mxu0 %v3575
  %3658 = vmatprep.subr.bf16.mxu0 0
  %3659 = vmatpush2.bf16.msra.mxu0 0
  %3660 = vmatprep.subr.bf16.mxu0 0
  %3661 = vmatpush2.bf16.msra.mxu0 0
  %3662 = vmatprep.subr.bf16.mxu0 0
  %3663 = vmatpush2.bf16.msra.mxu0 0
  %3664 = vmatprep.subr.bf16.mxu0 0
  %3665 = vmatpush2.bf16.msra.mxu0 0
  %3666 = vmatprep.subr.bf16.mxu0 0
  %3667 = vmatpush2.bf16.msra.mxu0 0
  %3668 = vmatprep.subr.bf16.mxu0 0
  %3669 = vmatpush2.bf16.msra.mxu0 0
  %3670 = vmatprep.subr.bf16.mxu0 0
  %3671 = vmatpush2.bf16.msra.mxu0 0
  %3672 = vmatprep.subr.bf16.mxu0 0
  %3673 = vmatpush2.bf16.msra.mxu0 0
  %3674 = vmatprep.mubr.bf16.mxu0 0
  %3675 = vmatmul.mubr.bf16.gmra.mxu0 %v1918
  %v3676 = vpop.f32.mrf.mxu0
  %v3677 = vadd.f32 %v3540, %v3676
  %v3678 = vpop.f32.mrf.mxu0
  %v3679 = vadd.f32 %v3544, %v3678
  %v3680 = vpop.f32.mrf.mxu0
  %v3681 = vadd.f32 %v3540, %v3680
  %v3682 = vpop.f32.mrf.mxu0
  %v3683 = vadd.f32 %v3544, %v3682
  %3684 = vmatprep.mubr.bf16.mxu0 0
  %3685 = vmatmul.mubr.bf16.gmra.mxu0 %v1921
  %v3686 = vpop.f32.mrf.mxu0
  %v3687 = vadd.f32 %v3540, %v3686
  %v3688 = vpop.f32.mrf.mxu0
  %v3689 = vadd.f32 %v3544, %v3688
  %v3690 = vpop.f32.mrf.mxu0
  %v3691 = vadd.f32 %v3540, %v3690
  %v3692 = vpop.f32.mrf.mxu0
  %v3693 = vadd.f32 %v3544, %v3692
  %3694 = vdwg.mxu0
  %v3695 = vmax.f32 %v3624, 0.0
  %v3696 = vmax.f32 %v3626, 0.0
  %v3697 = vmax.f32 %v3677, 0.0
  %v3698 = vmax.f32 %v3679, 0.0
  %v3699 = vmax.f32 %v3628, 0.0
  %v3700 = vmax.f32 %v3630, 0.0
  %v3701 = vmax.f32 %v3681, 0.0
  %v3702 = vmax.f32 %v3683, 0.0
  %v3703 = vmax.f32 %v3634, 0.0
  %v3704 = vmax.f32 %v3636, 0.0
  %v3705 = vmax.f32 %v3687, 0.0
  %v3706 = vmax.f32 %v3689, 0.0
  %v3707 = vmax.f32 %v3638, 0.0
  %v3708 = vmax.f32 %v3640, 0.0
  %v3709 = vmax.f32 %v3691, 0.0
  %v3710 = vmax.f32 %v3693, 0.0
  %v3711 = vpack.c.bf16 %v3699, %v3695
  %v3712 = vpack.c.bf16 %v3700, %v3696
  %v3713 = vpack.c.bf16 %v3701, %v3697
  %v3714 = vpack.c.bf16 %v3702, %v3698
  %v3715 = vpack.c.bf16 %v3707, %v3703
  %v3716 = vpack.c.bf16 %v3708, %v3704
  %v3717 = vpack.c.bf16 %v3709, %v3705
  %v3718 = vpack.c.bf16 %v3710, %v3706
  %v3719 = vld [vmem:[%s4 + $0x300] sm:$0xf]
  %v3720 = vld [vmem:[%s4 + $0x304] sm:$0xf]
  %v3721 = vld [vmem:[%s4 + $0x308] sm:$0xf]
  %v3722 = vld [vmem:[%s4 + $0x30c] sm:$0xf]
  %v3723 = vld [vmem:[%s4 + $0x310] sm:$0xf]
  %v3724 = vld [vmem:[%s4 + $0x314] sm:$0xf]
  %v3725 = vld [vmem:[%s4 + $0x318] sm:$0xf]
  %v3726 = vld [vmem:[%s4 + $0x31c] sm:$0xf]
  %v3727 = vld [vmem:[%s4 + $0x320] sm:$0xf]
  %v3728 = vld [vmem:[%s4 + $0x324] sm:$0xf]
  %v3729 = vld [vmem:[%s4 + $0x328] sm:$0xf]
  %v3730 = vld [vmem:[%s4 + $0x32c] sm:$0xf]
  %v3731 = vld [vmem:[%s4 + $0x330] sm:$0xf]
  %v3732 = vld [vmem:[%s4 + $0x334] sm:$0xf]
  %v3733 = vld [vmem:[%s4 + $0x338] sm:$0xf]
  %v3734 = vld [vmem:[%s4 + $0x33c] sm:$0xf]
  %v3735 = vld [vmem:[%s4 + $0x340] sm:$0xf]
  %v3736 = vld [vmem:[%s4 + $0x344] sm:$0xf]
  %v3737 = vld [vmem:[%s4 + $0x348] sm:$0xf]
  %v3738 = vld [vmem:[%s4 + $0x34c] sm:$0xf]
  %v3739 = vld [vmem:[%s4 + $0x350] sm:$0xf]
  %v3740 = vld [vmem:[%s4 + $0x354] sm:$0xf]
  %v3741 = vld [vmem:[%s4 + $0x358] sm:$0xf]
  %v3742 = vld [vmem:[%s4 + $0x35c] sm:$0xf]
  %v3743 = vld [vmem:[%s4 + $0x360] sm:$0xf]
  %v3744 = vld [vmem:[%s4 + $0x364] sm:$0xf]
  %v3745 = vld [vmem:[%s4 + $0x368] sm:$0xf]
  %v3746 = vld [vmem:[%s4 + $0x36c] sm:$0xf]
  %v3747 = vld [vmem:[%s4 + $0x370] sm:$0xf]
  %v3748 = vld [vmem:[%s4 + $0x374] sm:$0xf]
  %v3749 = vld [vmem:[%s4 + $0x378] sm:$0xf]
  %v3750 = vld [vmem:[%s4 + $0x37c] sm:$0xf]
  %v3751 = vld [vmem:[%s4 + $0x380] sm:$0xf]
  %v3752 = vld [vmem:[%s4 + $0x384] sm:$0xf]
  %v3753 = vld [vmem:[%s4 + $0x388] sm:$0xf]
  %v3754 = vld [vmem:[%s4 + $0x38c] sm:$0xf]
  %v3755 = vld [vmem:[%s4 + $0x390] sm:$0xf]
  %v3756 = vld [vmem:[%s4 + $0x394] sm:$0xf]
  %v3757 = vld [vmem:[%s4 + $0x398] sm:$0xf]
  %v3758 = vld [vmem:[%s4 + $0x39c] sm:$0xf]
  %v3759 = vld [vmem:[%s4 + $0x3a0] sm:$0xf]
  %v3760 = vld [vmem:[%s4 + $0x3a4] sm:$0xf]
  %v3761 = vld [vmem:[%s4 + $0x3a8] sm:$0xf]
  %v3762 = vld [vmem:[%s4 + $0x3ac] sm:$0xf]
  %v3763 = vld [vmem:[%s4 + $0x3b0] sm:$0xf]
  %v3764 = vld [vmem:[%s4 + $0x3b4] sm:$0xf]
  %v3765 = vld [vmem:[%s4 + $0x3b8] sm:$0xf]
  %v3766 = vld [vmem:[%s4 + $0x3bc] sm:$0xf]
  %v3767 = vld [vmem:[%s4 + $0x3c0] sm:$0xf]
  %v3768 = vld [vmem:[%s4 + $0x3c4] sm:$0xf]
  %v3769 = vld [vmem:[%s4 + $0x3c8] sm:$0xf]
  %v3770 = vld [vmem:[%s4 + $0x3cc] sm:$0xf]
  %v3771 = vld [vmem:[%s4 + $0x3d0] sm:$0xf]
  %v3772 = vld [vmem:[%s4 + $0x3d4] sm:$0xf]
  %v3773 = vld [vmem:[%s4 + $0x3d8] sm:$0xf]
  %v3774 = vld [vmem:[%s4 + $0x3dc] sm:$0xf]
  %v3775 = vld [vmem:[%s4 + $0x3e0] sm:$0xf]
  %v3776 = vld [vmem:[%s4 + $0x3e4] sm:$0xf]
  %v3777 = vld [vmem:[%s4 + $0x3e8] sm:$0xf]
  %v3778 = vld [vmem:[%s4 + $0x3ec] sm:$0xf]
  %v3779 = vld [vmem:[%s4 + $0x3f0] sm:$0xf]
  %v3780 = vld [vmem:[%s4 + $0x3f4] sm:$0xf]
  %v3781 = vld [vmem:[%s4 + $0x3f8] sm:$0xf]
  %v3782 = vld [vmem:[%s4 + $0x3fc] sm:$0xf]
  %v3847 = vunpack.c.l.b16 %v3719
  %v3848 = vunpack.c.l.b16 %v3720
  %v3849 = vunpack.c.l.b16 %v3721
  %v3850 = vunpack.c.l.b16 %v3722
  %v3851 = vunpack.c.l.b16 %v3723
  %v3852 = vunpack.c.l.b16 %v3724
  %v3853 = vunpack.c.l.b16 %v3725
  %v3854 = vunpack.c.l.b16 %v3726
  %v3855 = vunpack.c.l.b16 %v3727
  %v3856 = vunpack.c.l.b16 %v3728
  %v3857 = vunpack.c.l.b16 %v3729
  %v3858 = vunpack.c.l.b16 %v3730
  %v3859 = vunpack.c.l.b16 %v3731
  %v3860 = vunpack.c.l.b16 %v3732
  %v3861 = vunpack.c.l.b16 %v3733
  %v3862 = vunpack.c.l.b16 %v3734
  %v3863 = vunpack.c.l.b16 %v3735
  %v3864 = vunpack.c.l.b16 %v3736
  %v3865 = vunpack.c.l.b16 %v3737
  %v3866 = vunpack.c.l.b16 %v3738
  %v3867 = vunpack.c.l.b16 %v3739
  %v3868 = vunpack.c.l.b16 %v3740
  %v3869 = vunpack.c.l.b16 %v3741
  %v3870 = vunpack.c.l.b16 %v3742
  %v3871 = vunpack.c.l.b16 %v3743
  %v3872 = vunpack.c.l.b16 %v3744
  %v3873 = vunpack.c.l.b16 %v3745
  %v3874 = vunpack.c.l.b16 %v3746
  %v3875 = vunpack.c.l.b16 %v3747
  %v3876 = vunpack.c.l.b16 %v3748
  %v3877 = vunpack.c.l.b16 %v3749
  %v3878 = vunpack.c.l.b16 %v3750
  %v3879 = vunpack.c.l.b16 %v3751
  %v3880 = vunpack.c.l.b16 %v3752
  %v3881 = vunpack.c.l.b16 %v3753
  %v3882 = vunpack.c.l.b16 %v3754
  %v3883 = vunpack.c.l.b16 %v3755
  %v3884 = vunpack.c.l.b16 %v3756
  %v3885 = vunpack.c.l.b16 %v3757
  %v3886 = vunpack.c.l.b16 %v3758
  %v3887 = vunpack.c.l.b16 %v3759
  %v3888 = vunpack.c.l.b16 %v3760
  %v3889 = vunpack.c.l.b16 %v3761
  %v3890 = vunpack.c.l.b16 %v3762
  %v3891 = vunpack.c.l.b16 %v3763
  %v3892 = vunpack.c.l.b16 %v3764
  %v3893 = vunpack.c.l.b16 %v3765
  %v3894 = vunpack.c.l.b16 %v3766
  %v3895 = vunpack.c.l.b16 %v3767
  %v3896 = vunpack.c.l.b16 %v3768
  %v3897 = vunpack.c.l.b16 %v3769
  %v3898 = vunpack.c.l.b16 %v3770
  %v3899 = vunpack.c.l.b16 %v3771
  %v3900 = vunpack.c.l.b16 %v3772
  %v3901 = vunpack.c.l.b16 %v3773
  %v3902 = vunpack.c.l.b16 %v3774
  %v3903 = vunpack.c.l.b16 %v3775
  %v3904 = vunpack.c.l.b16 %v3776
  %v3905 = vunpack.c.l.b16 %v3777
  %v3906 = vunpack.c.l.b16 %v3778
  %v3907 = vunpack.c.l.b16 %v3779
  %v3908 = vunpack.c.l.b16 %v3780
  %v3909 = vunpack.c.l.b16 %v3781
  %v3910 = vunpack.c.l.b16 %v3782
  %v3911 = vpack.c.b16 %v3848, %v3847
  %v3912 = vpack.c.b16 %v3850, %v3849
  %v3913 = vpack.c.b16 %v3852, %v3851
  %v3914 = vpack.c.b16 %v3854, %v3853
  %v3915 = vpack.c.b16 %v3856, %v3855
  %v3916 = vpack.c.b16 %v3858, %v3857
  %v3917 = vpack.c.b16 %v3860, %v3859
  %v3918 = vpack.c.b16 %v3862, %v3861
  %v3919 = vpack.c.b16 %v3864, %v3863
  %v3920 = vpack.c.b16 %v3866, %v3865
  %v3921 = vpack.c.b16 %v3868, %v3867
  %v3922 = vpack.c.b16 %v3870, %v3869
  %v3923 = vpack.c.b16 %v3872, %v3871
  %v3924 = vpack.c.b16 %v3874, %v3873
  %v3925 = vpack.c.b16 %v3876, %v3875
  %v3926 = vpack.c.b16 %v3878, %v3877
  %v3927 = vpack.c.b16 %v3880, %v3879
  %v3928 = vpack.c.b16 %v3882, %v3881
  %v3929 = vpack.c.b16 %v3884, %v3883
  %v3930 = vpack.c.b16 %v3886, %v3885
  %v3931 = vpack.c.b16 %v3888, %v3887
  %v3932 = vpack.c.b16 %v3890, %v3889
  %v3933 = vpack.c.b16 %v3892, %v3891
  %v3934 = vpack.c.b16 %v3894, %v3893
  %v3935 = vpack.c.b16 %v3896, %v3895
  %v3936 = vpack.c.b16 %v3898, %v3897
  %v3937 = vpack.c.b16 %v3900, %v3899
  %v3938 = vpack.c.b16 %v3902, %v3901
  %v3939 = vpack.c.b16 %v3904, %v3903
  %v3940 = vpack.c.b16 %v3906, %v3905
  %v3941 = vpack.c.b16 %v3908, %v3907
  %v3942 = vpack.c.b16 %v3910, %v3909
  %3975 = vmatprep.subr.bf16.mxu0 0
  %3976 = vmatpush1.bf16.msra.mxu0 %v3918
  %3977 = vmatprep.subr.bf16.mxu0 0
  %3978 = vmatpush1.bf16.msra.mxu0 %v3917
  %3979 = vmatprep.subr.bf16.mxu0 0
  %3980 = vmatpush1.bf16.msra.mxu0 %v3916
  %3981 = vmatprep.subr.bf16.mxu0 0
  %3982 = vmatpush1.bf16.msra.mxu0 %v3915
  %3983 = vmatprep.subr.bf16.mxu0 0
  %3984 = vmatpush1.bf16.msra.mxu0 %v3914
  %3985 = vmatprep.subr.bf16.mxu0 0
  %3986 = vmatpush1.bf16.msra.mxu0 %v3913
  %3987 = vmatprep.subr.bf16.mxu0 0
  %3988 = vmatpush1.bf16.msra.mxu0 %v3912
  %3989 = vmatprep.subr.bf16.mxu0 0
  %3990 = vmatpush1.bf16.msra.mxu0 %v3911
  %3991 = vmatprep.subr.bf16.mxu0 0
  %3992 = vmatpush2.bf16.msra.mxu0 %v3926
  %3993 = vmatprep.subr.bf16.mxu0 0
  %3994 = vmatpush2.bf16.msra.mxu0 %v3925
  %3995 = vmatprep.subr.bf16.mxu0 0
  %3996 = vmatpush2.bf16.msra.mxu0 %v3924
  %3997 = vmatprep.subr.bf16.mxu0 0
  %3998 = vmatpush2.bf16.msra.mxu0 %v3923
  %3999 = vmatprep.subr.bf16.mxu0 0
  %4000 = vmatpush2.bf16.msra.mxu0 %v3922
  %4001 = vmatprep.subr.bf16.mxu0 0
  %4002 = vmatpush2.bf16.msra.mxu0 %v3921
  %4003 = vmatprep.subr.bf16.mxu0 0
  %4004 = vmatpush2.bf16.msra.mxu0 %v3920
  %4005 = vmatprep.subr.bf16.mxu0 0
  %4006 = vmatpush2.bf16.msra.mxu0 %v3919
  %4007 = vmatprep.mubr.bf16.mxu0 %v3712
  %4008 = vmatmul.mubr.bf16.gmra.mxu0 %v3711
  %v4009 = vpop.f32.mrf.mxu0
  %v4010 = vadd.f32 0.0, %v4009
  %v4011 = vpop.f32.mrf.mxu0
  %v4012 = vpop.f32.mrf.mxu0
  %v4013 = vadd.f32 0.0, %v4012
  %v4014 = vpop.f32.mrf.mxu0
  %4015 = vmatprep.mubr.bf16.mxu0 %v3716
  %4016 = vmatmul.mubr.bf16.gmra.mxu0 %v3715
  %v4017 = vpop.f32.mrf.mxu0
  %v4018 = vadd.f32 0.0, %v4017
  %v4019 = vpop.f32.mrf.mxu0
  %v4020 = vpop.f32.mrf.mxu0
  %v4021 = vadd.f32 0.0, %v4020
  %v4022 = vpop.f32.mrf.mxu0
  %4023 = vdwg.mxu0
  %4024 = vmatprep.subr.bf16.mxu0 0
  %4025 = vmatpush1.bf16.msra.mxu0 %v3934
  %4026 = vmatprep.subr.bf16.mxu0 0
  %4027 = vmatpush1.bf16.msra.mxu0 %v3933
  %4028 = vmatprep.subr.bf16.mxu0 0
  %4029 = vmatpush1.bf16.msra.mxu0 %v3932
  %4030 = vmatprep.subr.bf16.mxu0 0
  %4031 = vmatpush1.bf16.msra.mxu0 %v3931
  %4032 = vmatprep.subr.bf16.mxu0 0
  %4033 = vmatpush1.bf16.msra.mxu0 %v3930
  %4034 = vmatprep.subr.bf16.mxu0 0
  %4035 = vmatpush1.bf16.msra.mxu0 %v3929
  %4036 = vmatprep.subr.bf16.mxu0 0
  %4037 = vmatpush1.bf16.msra.mxu0 %v3928
  %4038 = vmatprep.subr.bf16.mxu0 0
  %4039 = vmatpush1.bf16.msra.mxu0 %v3927
  %4040 = vmatprep.subr.bf16.mxu0 0
  %4041 = vmatpush2.bf16.msra.mxu0 %v3942
  %4042 = vmatprep.subr.bf16.mxu0 0
  %4043 = vmatpush2.bf16.msra.mxu0 %v3941
  %4044 = vmatprep.subr.bf16.mxu0 0
  %4045 = vmatpush2.bf16.msra.mxu0 %v3940
  %4046 = vmatprep.subr.bf16.mxu0 0
  %4047 = vmatpush2.bf16.msra.mxu0 %v3939
  %4048 = vmatprep.subr.bf16.mxu0 0
  %4049 = vmatpush2.bf16.msra.mxu0 %v3938
  %4050 = vmatprep.subr.bf16.mxu0 0
  %4051 = vmatpush2.bf16.msra.mxu0 %v3937
  %4052 = vmatprep.subr.bf16.mxu0 0
  %4053 = vmatpush2.bf16.msra.mxu0 %v3936
  %4054 = vmatprep.subr.bf16.mxu0 0
  %4055 = vmatpush2.bf16.msra.mxu0 %v3935
  %4056 = vmatprep.mubr.bf16.mxu0 %v3714
  %4057 = vmatmul.mubr.bf16.gmra.mxu0 %v3713
  %v4058 = vpop.f32.mrf.mxu0
  %v4059 = vadd.f32 %v4010, %v4058
  %v4060 = vpop.f32.mrf.mxu0
  %v4061 = vpop.f32.mrf.mxu0
  %v4062 = vadd.f32 %v4013, %v4061
  %v4063 = vpop.f32.mrf.mxu0
  %4064 = vmatprep.mubr.bf16.mxu0 %v3718
  %4065 = vmatmul.mubr.bf16.gmra.mxu0 %v3717
  %v4066 = vpop.f32.mrf.mxu0
  %v4067 = vadd.f32 %v4018, %v4066
  %v4068 = vpop.f32.mrf.mxu0
  %v4069 = vpop.f32.mrf.mxu0
  %v4070 = vadd.f32 %v4021, %v4069
  %v4071 = vpop.f32.mrf.mxu0
  %4072 = vdwg.mxu0
  %v4073 = vadd.f32 %v3515, %v4059
  %v4074 = vadd.f32 %v3516, %v4062
  %v4075 = vadd.f32 %v3517, %v4067
  %v4076 = vadd.f32 %v3518, %v4070
  %v4077 = vld [vmem:[%s1 + $0x100] sm:$0x1]
  %v4078 = vlaneseq
  %v4079 = vshrl.u32 %v4078, 7
  %v4080 = vsub.s32 0, %v4079
  %v4081 = vrot.slane %v4077, %v4080
  %v4082 = vadd.f32 %v4073, %v4081
  %v4083 = vadd.f32 %v4074, %v4081
  %v4084 = vadd.f32 %v4075, %v4081
  %v4085 = vadd.f32 %v4076, %v4081
  %v4086 = vld [vmem:[%s1 + $0xf0] sm:$0xf]
  %v4087 = vld [vmem:[%s1 + $0xf8] sm:$0x1]
  %v4088 = vld [vmem:[%s1 + $0xf9] sm:$0x1]
  %v4090 = vsel %vm467, %v4086, 0
  %4092 = vmatprep.subr.mxu0 0.0
  %4093 = vmatpush1.msra.mxu0 0.0
  %4094 = vmatprep.subr.mxu0 0.0
  %4095 = vmatpush1.msra.mxu0 0.0
  %4096 = vmatprep.subr.mxu0 0.0
  %4097 = vmatpush1.msra.mxu0 0.0
  %4098 = vmatprep.subr.mxu0 0.0
  %4099 = vmatpush1.msra.mxu0 0.0
  %4100 = vmatprep.subr.mxu0 0.0
  %4101 = vmatpush1.msra.mxu0 0.0
  %4102 = vmatprep.subr.mxu0 0.0
  %4103 = vmatpush1.msra.mxu0 0.0
  %4104 = vmatprep.subr.mxu0 0.0
  %4105 = vmatpush1.msra.mxu0 0.0
  %4106 = vmatprep.subr.mxu0 0.0
  %4107 = vmatpush1.msra.mxu0 0.0
  %4108 = vmatprep.subr.mxu0 0.0
  %4109 = vmatpush1.msra.mxu0 0.0
  %4110 = vmatprep.subr.mxu0 0.0
  %4111 = vmatpush1.msra.mxu0 0.0
  %4112 = vmatprep.subr.mxu0 0.0
  %4113 = vmatpush1.msra.mxu0 0.0
  %4114 = vmatprep.subr.mxu0 0.0
  %4115 = vmatpush1.msra.mxu0 0.0
  %4116 = vmatprep.subr.mxu0 0.0
  %4117 = vmatpush1.msra.mxu0 %v4085
  %4118 = vmatprep.subr.mxu0 0.0
  %4119 = vmatpush1.msra.mxu0 %v4084
  %4120 = vmatprep.subr.mxu0 0.0
  %4121 = vmatpush1.msra.mxu0 %v4083
  %4122 = vmatprep.subr.mxu0 0.0
  %4123 = vmatpush1.msra.mxu0 %v4082
  %4124 = vmatprep.subr.mxu0 0.0
  %4125 = vmatpush2.msra.mxu0 0.0
  %4126 = vmatprep.subr.mxu0 0.0
  %4127 = vmatpush2.msra.mxu0 0.0
  %4128 = vmatprep.subr.mxu0 0.0
  %4129 = vmatpush2.msra.mxu0 0.0
  %4130 = vmatprep.subr.mxu0 0.0
  %4131 = vmatpush2.msra.mxu0 0.0
  %4132 = vmatprep.subr.mxu0 0.0
  %4133 = vmatpush2.msra.mxu0 0.0
  %4134 = vmatprep.subr.mxu0 0.0
  %4135 = vmatpush2.msra.mxu0 0.0
  %4136 = vmatprep.subr.mxu0 0.0
  %4137 = vmatpush2.msra.mxu0 0.0
  %4138 = vmatprep.subr.mxu0 0.0
  %4139 = vmatpush2.msra.mxu0 0.0
  %4140 = vmatprep.subr.mxu0 0.0
  %4141 = vmatpush2.msra.mxu0 0.0
  %4142 = vmatprep.subr.mxu0 0.0
  %4143 = vmatpush2.msra.mxu0 0.0
  %4144 = vmatprep.subr.mxu0 0.0
  %4145 = vmatpush2.msra.mxu0 0.0
  %4146 = vmatprep.subr.mxu0 0.0
  %4147 = vmatpush2.msra.mxu0 0.0
  %4148 = vmatprep.subr.mxu0 0.0
  %4149 = vmatpush2.msra.mxu0 0.0
  %4150 = vmatprep.subr.mxu0 0.0
  %4151 = vmatpush2.msra.mxu0 0.0
  %4152 = vmatprep.subr.mxu0 0.0
  %4153 = vmatpush2.msra.mxu0 0.0
  %4154 = vmatprep.subr.mxu0 0.0
  %4155 = vmatpush2.msra.mxu0 0.0
  %4156 = vmatprep.mubr.f32.mxu0 0.0
  %4157 = vmatmul.mubr.f32.gmra.mxu0 %v4090
  %v4158 = vpop.f32.mrf.mxu0
  %v4159 = vadd.f32 0.0, %v4158
  %v4160 = vpop.f32.mrf.mxu0
  %4161 = vdwg.mxu0
  %v4162 = vlaneseq
  %v4163 = vshrl.u32 %v4162, 7
  %v4164 = vsub.s32 0, %v4163
  %v4165 = vrot.slane %v4087, %v4164
  %v4166 = vmul.f32 %v4159, %v4165
  %v4167 = vlaneseq
  %v4168 = vshrl.u32 %v4167, 7
  %v4169 = vsub.s32 0, %v4168
  %v4170 = vrot.slane %v4088, %v4169
  %v4171 = vmul.f32 %v4082, %v4170
  %v4172 = vadd.f32 %v4166, %v4171
  %vm4173 = vcmask 257024
  %v4174 = vsel %vm4173, %v4172, 0.0
  %4175 = vadd.xlane.f32.xlu0 %v4174
  %v4176 = vpop.xlane.xlu0 %4175
  %v4177 = vadd.f32 %v4176, %v4081
  %v4178 = vxor.u32 %v4177, 2147483648
  %v4179 = vmul.f32 %v4178, 1.442695
  %v4180 = vpow.pop %v4179
  %v4181 = vadd.f32 %v4180, 1.0
  %v4182 = vrcp.pop %v4181
  %v4183 = vmul.f32 1.0, %v4182
  %4185 = vrot.lane.b32.xlu0 %v4183, 96
  %v4186 = vpop.permute.xlu0 %4185
  %vm4188 = vcmask 3072
  %4189 = vst.msk [vmem:[%s5] sm:$0xf] %vm4188, %v4186
  %4191 = vrot.lane.b32.xlu0 %v4177, 97
  %v4192 = vpop.permute.xlu0 %4191
  %vm4194 = vcmask 11272
  %4195 = vst.msk [vmem:[%s5] sm:$0xf] %vm4194, %v4192
  // Predicated region
  $region22: #{trans_lstm_nra_forward.1} parent=0 // pred_check
    _
  $region23: #{trans_lstm_nra_forward.1} parent=0 // pred_check_branch
    %4197 = sbr.rel (0) target = $region25
  $region24: #{trans_lstm_nra_forward.1} parent=0 // pred_region
    _
  $region25: #{trans_lstm_nra_forward.1} parent=0 // pred_fallthru
    _
  // Predicated region
  $region26: #{trans_lstm_nra_forward.1} parent=0 // pred_check
    _
  $region27: #{trans_lstm_nra_forward.1} parent=0 // pred_check_branch
    %4199 = sbr.rel (0) target = $region29
  $region28: #{trans_lstm_nra_forward.1} parent=0 // pred_region
    _
  $region29: #{trans_lstm_nra_forward.1} parent=0 // pred_fallthru
    _

</llo_original>
